<compile_context>
chip_gen: v7x
topology: tpu7x:2x2x1
jax: 0.10.0
libtpu: 0.0.40
codegen_flags: <defaults>
</compile_context>

<pallas_src>
import jax
import jax.numpy as jnp
from jax.experimental import pallas as pl
from jax.experimental.pallas import tpu as pltpu

K_IN = 28 * 28          # 784 (contraction dim of layer 1; Mosaic lane-pads internally)
H = 1024                # hidden width (lane/sublane friendly)
N_OUT = 10
N_OUT_PAD = 128         # lane-dense output width
NEG_BIG = -1e30         # fp32 pad bias for padded logits -> softmax prob exactly 0


def mlp_kernel(x_ref, w1_ref, b1_ref, w2_ref, b2_ref, w3_ref, b3_ref, o_ref):
    # x tile arrives fp32 (tb, 784); cast to bf16 in-kernel (hidden under the MXU).
    x = x_ref[...].astype(jnp.bfloat16)

    # Layer 1: bf16 matmul, fp32 accumulate, fused ReLU + downcast.
    h1 = jnp.dot(x, w1_ref[...], preferred_element_type=jnp.float32) + b1_ref[...]
    h1 = jnp.maximum(h1, 0.0).astype(jnp.bfloat16)

    # Layer 2.
    h2 = jnp.dot(h1, w2_ref[...], preferred_element_type=jnp.float32) + b2_ref[...]
    h2 = jnp.maximum(h2, 0.0).astype(jnp.bfloat16)

    # Layer 3 -> fp32 logits over the 128-wide (lane-dense) padded output dim.
    logits = jnp.dot(h2, w3_ref[...], preferred_element_type=jnp.float32) + b3_ref[...]

    # Numerically stable softmax. Padded columns carry bias = -1e30 (fp32) -> exp == 0.
    m = jnp.max(logits, axis=-1, keepdims=True)
    e = jnp.exp(logits - m)
    denom = jnp.sum(e, axis=-1, keepdims=True)
    o_ref[...] = e * pl.reciprocal(denom, approx=False)   # exact EUP recip, still free


def _round_up(a, m):
    return (a + m - 1) // m * m


def _cdiv(a, b):
    return (a + b - 1) // b


def _choose_batch_tiling(B):
    """Pick (tb, b_pad).

    * B < 64 : single tile, rounded up to 16 rows (bf16 sublane pack).
    * B >= 64: at least 2 grid steps so v7x's two TensorCores both get work
      (dimension_semantics=("parallel",)); tile cap 256, raised to 512 for B >= 1024
      to amortize the ~0.35us per-grid-step overhead on v6e/v7x.
    * tb is fitted to B across the chosen step count to minimize padded-tail waste.
    """
    if B < 64:
        tb = max(16, _round_up(B, 16))
        return tb, tb
    cap = 512 if B >= 1024 else 256
    n_steps = max(2, _cdiv(B, cap))
    tb = _round_up(_cdiv(B, n_steps), 16)
    return tb, tb * n_steps


def prepare_params(params):
    """One-time weight preparation (call OUTSIDE the per-step forward).

    Pads/casts the fp32 (in, out) weights to their kernel layouts so the jitted
    forward never re-reads/re-writes the ~8 MiB of fp32 weights per call.
    """
    w1, b1, w2, b2, w3, b3 = params
    w1_p = w1.astype(jnp.bfloat16)                                     # (784, 1024)
    w2_p = w2.astype(jnp.bfloat16)                                     # (1024, 1024)
    w3_p = jnp.pad(w3, ((0, 0), (0, N_OUT_PAD - N_OUT))).astype(jnp.bfloat16)  # (1024, 128)
    b1_p = b1.astype(jnp.float32).reshape(1, H)
    b2_p = b2.astype(jnp.float32).reshape(1, H)
    # Keep b3 fp32: -1e30 underflows exp to exactly 0; in bf16 it would become -inf.
    b3_p = jnp.pad(b3.astype(jnp.float32).reshape(1, N_OUT),
                   ((0, 0), (0, N_OUT_PAD - N_OUT)), constant_values=NEG_BIG)
    prepped = (w1_p, b1_p, w2_p, b2_p, w3_p, b3_p)
    return tuple(jax.device_put(t) for t in prepped)


@jax.jit
def linear_model_forward(x, prepared_params):
    """x: (B, C, H, W) float32 with C*H*W == 784. Returns (B, 10) softmax probs."""
    w1, b1, w2, b2, w3, b3 = prepared_params
    B = x.shape[0]
    x_flat = x.reshape(B, -1).astype(jnp.float32)          # torch.flatten(x, 1)
    assert x_flat.shape[1] == K_IN

    tb, b_pad = _choose_batch_tiling(B)
    grid = (b_pad // tb,)

    # Batch-pad only (no K pad, no cast) — padding of size 0 is elided by XLA.
    x_p = x_flat if b_pad == B else jnp.pad(x_flat, ((0, b_pad - B), (0, 0)))

    flops = 2 * b_pad * (K_IN * H + H * H + H * N_OUT_PAD)
    bytes_accessed = (x_p.size * 4 + w1.size * 2 + w2.size * 2 + w3.size * 2
                      + b1.size * 4 + b2.size * 4 + b3.size * 4
                      + b_pad * N_OUT_PAD * 4)
    transcendentals = b_pad * (N_OUT_PAD + 1)              # exp + reciprocal

    out_padded = pl.pallas_call(
        mlp_kernel,
        out_shape=jax.ShapeDtypeStruct((b_pad, N_OUT_PAD), jnp.float32),
        grid=grid,
        in_specs=[
            pl.BlockSpec((tb, K_IN), lambda i: (i, 0)),              # x tile (fp32)
            pl.BlockSpec((K_IN, H), lambda i: (0, 0)),               # w1 (VMEM-resident)
            pl.BlockSpec((1, H), lambda i: (0, 0)),                  # b1
            pl.BlockSpec((H, H), lambda i: (0, 0)),                  # w2 (VMEM-resident)
            pl.BlockSpec((1, H), lambda i: (0, 0)),                  # b2
            pl.BlockSpec((H, N_OUT_PAD), lambda i: (0, 0)),          # w3 (VMEM-resident)
            pl.BlockSpec((1, N_OUT_PAD), lambda i: (0, 0)),          # b3
        ],
        out_specs=pl.BlockSpec((tb, N_OUT_PAD), lambda i: (i, 0)),
        compiler_params=pltpu.CompilerParams(
            dimension_semantics=("parallel",),            # batch axis -> v7x megacore
            vmem_limit_bytes=32 * 1024 * 1024,            # ~18 MiB worst case at tb=512
        ),
        cost_estimate=pl.CostEstimate(
            flops=flops,
            transcendentals=transcendentals,
            bytes_accessed=bytes_accessed,
        ),
    )(x_p, w1, b1, w2, b2, w3, b3)

    return out_padded[:B, :N_OUT]


def init_params(key):
    """Deterministic init mimicking nn.Linear's uniform(-1/sqrt(fan_in), +1/sqrt(fan_in)).
    Weights stored as (in, out) so the kernel computes x @ W + b."""
    dims = [(K_IN, H), (H, H), (H, N_OUT)]
    params = []
    keys = jax.random.split(key, 2 * len(dims))
    for i, (fin, fout) in enumerate(dims):
        bound = 1.0 / (fin ** 0.5)
        w = jax.random.uniform(keys[2 * i], (fin, fout), jnp.float32, -bound, bound)
        b = jax.random.uniform(keys[2 * i + 1], (1, fout), jnp.float32, -bound, bound)
        params += [w, b]
    return tuple(params)


def _reference_forward(x, params):
    """Pure-JAX fp32 reference of the PyTorch module."""
    w1, b1, w2, b2, w3, b3 = params
    h = x.reshape(x.shape[0], -1)
    h = jnp.maximum(h @ w1 + b1, 0.0)
    h = jnp.maximum(h @ w2 + b2, 0.0)
    logits = h @ w3 + b3
    return jax.nn.softmax(logits, axis=1)


if __name__ == "__main__":
    key = jax.random.PRNGKey(0)
    pkey, xkey = jax.random.split(key)
    params = init_params(pkey)
    prepared = prepare_params(params)          # one-time pad/cast, outside the hot path

    # MNIST-like input: (batch=2, channels=1, 28, 28) -> flattened to (2, 784)
    x = jax.random.normal(xkey, (2, 1, 28, 28), dtype=jnp.float32)

    out = linear_model_forward(x, prepared)
    out = jax.block_until_ready(out)

    assert out.shape == (2, N_OUT)
    # softmax rows sum to 1 (fp32 exp/sum + exact reciprocal)
    assert bool(jnp.allclose(jnp.sum(out, axis=1), 1.0, atol=1e-2))
    # matches fp32 reference to bf16-level accuracy
    ref = _reference_forward(x, params)
    assert bool(jnp.max(jnp.abs(out - ref)) < 3e-2)
    print("KERNEL_OK")
</pallas_src>

<mosaic_0001>
module attributes {stable_mosaic.version = 11 : i64} {
  func.func @mlp_kernel(%arg0: i32, %arg1: memref<16x784xf32, #tpu.memory_space<vmem>>, %arg2: memref<784x1024xbf16, #tpu.memory_space<vmem>>, %arg3: memref<1x1024xf32, #tpu.memory_space<vmem>>, %arg4: memref<1024x1024xbf16, #tpu.memory_space<vmem>>, %arg5: memref<1x1024xf32, #tpu.memory_space<vmem>>, %arg6: memref<1024x128xbf16, #tpu.memory_space<vmem>>, %arg7: memref<1x128xf32, #tpu.memory_space<vmem>>, %arg8: memref<16x128xf32, #tpu.memory_space<vmem>>) attributes {dimension_semantics = [#tpu.dimension_semantics<parallel>], iteration_bounds = array<i64: 1>, scalar_prefetch = 0 : i64, scratch_operands = 0 : i64, tpu.core_type = #tpu.core_type<tc>, window_params = [{transform_indices = @transform_0, window_bounds = array<i64: 16, 784>}, {pipeline_mode = #tpu.pipeline_mode<synchronous>, transform_indices = @transform_1, window_bounds = array<i64: 784, 1024>}, {pipeline_mode = #tpu.pipeline_mode<synchronous>, transform_indices = @transform_2, window_bounds = array<i64: 1, 1024>}, {pipeline_mode = #tpu.pipeline_mode<synchronous>, transform_indices = @transform_3, window_bounds = array<i64: 1024, 1024>}, {pipeline_mode = #tpu.pipeline_mode<synchronous>, transform_indices = @transform_4, window_bounds = array<i64: 1, 1024>}, {pipeline_mode = #tpu.pipeline_mode<synchronous>, transform_indices = @transform_5, window_bounds = array<i64: 1024, 128>}, {pipeline_mode = #tpu.pipeline_mode<synchronous>, transform_indices = @transform_6, window_bounds = array<i64: 1, 128>}, {transform_indices = @transform_7, window_bounds = array<i64: 16, 128>}]} {
    %c0 = arith.constant 0 : index
    %c0_0 = arith.constant 0 : index
    %0 = vector.load %arg1[%c0, %c0_0] : memref<16x784xf32, #tpu.memory_space<vmem>>, vector<16x784xf32>
    %1 = arith.truncf %0 : vector<16x784xf32> to vector<16x784xbf16>
    %c0_1 = arith.constant 0 : index
    %c0_2 = arith.constant 0 : index
    %2 = vector.load %arg2[%c0_1, %c0_2] : memref<784x1024xbf16, #tpu.memory_space<vmem>>, vector<784x1024xbf16>
    %cst = arith.constant dense<0.000000e+00> : vector<16x1024xf32>
    %3 = tpu.matmul %1, %2, %cst {dimension_numbers = #tpu.dot_dimension_numbers<[1], [0], [0], [1], [0, 0, 1, 1], [], []>} : vector<16x784xbf16>, vector<784x1024xbf16>, vector<16x1024xf32> -> vector<16x1024xf32>
    %c0_3 = arith.constant 0 : index
    %c0_4 = arith.constant 0 : index
    %4 = vector.load %arg3[%c0_3, %c0_4] : memref<1x1024xf32, #tpu.memory_space<vmem>>, vector<1x1024xf32>
    %5 = vector.broadcast %4 : vector<1x1024xf32> to vector<16x1024xf32>
    %6 = arith.addf %3, %5 : vector<16x1024xf32>
    %cst_5 = arith.constant 0.000000e+00 : f32
    %7 = vector.broadcast %cst_5 : f32 to vector<16x1024xf32>
    %8 = arith.maximumf %6, %7 : vector<16x1024xf32>
    %9 = arith.truncf %8 : vector<16x1024xf32> to vector<16x1024xbf16>
    %c0_6 = arith.constant 0 : index
    %c0_7 = arith.constant 0 : index
    %10 = vector.load %arg4[%c0_6, %c0_7] : memref<1024x1024xbf16, #tpu.memory_space<vmem>>, vector<1024x1024xbf16>
    %cst_8 = arith.constant dense<0.000000e+00> : vector<16x1024xf32>
    %11 = tpu.matmul %9, %10, %cst_8 {dimension_numbers = #tpu.dot_dimension_numbers<[1], [0], [0], [1], [0, 0, 1, 1], [], []>} : vector<16x1024xbf16>, vector<1024x1024xbf16>, vector<16x1024xf32> -> vector<16x1024xf32>
    %c0_9 = arith.constant 0 : index
    %c0_10 = arith.constant 0 : index
    %12 = vector.load %arg5[%c0_9, %c0_10] : memref<1x1024xf32, #tpu.memory_space<vmem>>, vector<1x1024xf32>
    %13 = vector.broadcast %12 : vector<1x1024xf32> to vector<16x1024xf32>
    %14 = arith.addf %11, %13 : vector<16x1024xf32>
    %cst_11 = arith.constant 0.000000e+00 : f32
    %15 = vector.broadcast %cst_11 : f32 to vector<16x1024xf32>
    %16 = arith.maximumf %14, %15 : vector<16x1024xf32>
    %17 = arith.truncf %16 : vector<16x1024xf32> to vector<16x1024xbf16>
    %c0_12 = arith.constant 0 : index
    %c0_13 = arith.constant 0 : index
    %18 = vector.load %arg6[%c0_12, %c0_13] : memref<1024x128xbf16, #tpu.memory_space<vmem>>, vector<1024x128xbf16>
    %cst_14 = arith.constant dense<0.000000e+00> : vector<16x128xf32>
    %19 = tpu.matmul %17, %18, %cst_14 {dimension_numbers = #tpu.dot_dimension_numbers<[1], [0], [0], [1], [0, 0, 1, 1], [], []>} : vector<16x1024xbf16>, vector<1024x128xbf16>, vector<16x128xf32> -> vector<16x128xf32>
    %c0_15 = arith.constant 0 : index
    %c0_16 = arith.constant 0 : index
    %20 = vector.load %arg7[%c0_15, %c0_16] : memref<1x128xf32, #tpu.memory_space<vmem>>, vector<1x128xf32>
    %21 = vector.broadcast %20 : vector<1x128xf32> to vector<16x128xf32>
    %22 = arith.addf %19, %21 : vector<16x128xf32>
    %cst_17 = arith.constant dense<0xFF800000> : vector<16xf32>
    %23 = vector.multi_reduction <maximumf>, %22, %cst_17 [1] : vector<16x128xf32> to vector<16xf32>
    %24 = vector.shape_cast %23 : vector<16xf32> to vector<16x1xf32>
    %25 = vector.broadcast %24 : vector<16x1xf32> to vector<16x128xf32>
    %26 = arith.subf %22, %25 : vector<16x128xf32>
    %27 = math.exp %26 : vector<16x128xf32>
    %cst_18 = arith.constant dense<0.000000e+00> : vector<16xf32>
    %28 = vector.multi_reduction <add>, %27, %cst_18 [1] : vector<16x128xf32> to vector<16xf32>
    %29 = vector.shape_cast %28 : vector<16xf32> to vector<16x1xf32>
    %30 = tpu.reciprocal %29 : vector<16x1xf32> -> vector<16x1xf32>
    %31 = vector.broadcast %30 : vector<16x1xf32> to vector<16x128xf32>
    %32 = arith.mulf %27, %31 : vector<16x128xf32>
    %c0_19 = arith.constant 0 : index
    %c0_20 = arith.constant 0 : index
    %33 = vector.load %arg8[%c0_19, %c0_20] : memref<16x128xf32, #tpu.memory_space<vmem>>, vector<16x128xf32>
    tpu.vector_store %arg8[%c0_19, %c0_20], %32 {strides = array<i32>} : memref<16x128xf32, #tpu.memory_space<vmem>>, vector<16x128xf32>,
    return
  }
  func.func @transform_0(%arg0: i32) -> (i32, i32) {
    %c0_i32 = arith.constant 0 : i32
    %c0_i32_0 = arith.constant 0 : i32
    return %arg0, %c0_i32 : i32, i32
  }
  func.func @transform_1(%arg0: i32) -> (i32, i32) {
    %c0_i32 = arith.constant 0 : i32
    %c0_i32_0 = arith.constant 0 : i32
    %c0_i32_1 = arith.constant 0 : i32
    return %c0_i32, %c0_i32_0 : i32, i32
  }
  func.func @transform_2(%arg0: i32) -> (i32, i32) {
    %c0_i32 = arith.constant 0 : i32
    %c0_i32_0 = arith.constant 0 : i32
    %c0_i32_1 = arith.constant 0 : i32
    return %c0_i32, %c0_i32_0 : i32, i32
  }
  func.func @transform_3(%arg0: i32) -> (i32, i32) {
    %c0_i32 = arith.constant 0 : i32
    %c0_i32_0 = arith.constant 0 : i32
    %c0_i32_1 = arith.constant 0 : i32
    return %c0_i32, %c0_i32_0 : i32, i32
  }
  func.func @transform_4(%arg0: i32) -> (i32, i32) {
    %c0_i32 = arith.constant 0 : i32
    %c0_i32_0 = arith.constant 0 : i32
    %c0_i32_1 = arith.constant 0 : i32
    return %c0_i32, %c0_i32_0 : i32, i32
  }
  func.func @transform_5(%arg0: i32) -> (i32, i32) {
    %c0_i32 = arith.constant 0 : i32
    %c0_i32_0 = arith.constant 0 : i32
    %c0_i32_1 = arith.constant 0 : i32
    return %c0_i32, %c0_i32_0 : i32, i32
  }
  func.func @transform_6(%arg0: i32) -> (i32, i32) {
    %c0_i32 = arith.constant 0 : i32
    %c0_i32_0 = arith.constant 0 : i32
    %c0_i32_1 = arith.constant 0 : i32
    return %c0_i32, %c0_i32_0 : i32, i32
  }
  func.func @transform_7(%arg0: i32) -> (i32, i32) {
    %c0_i32 = arith.constant 0 : i32
    %c0_i32_0 = arith.constant 0 : i32
    return %arg0, %c0_i32 : i32, i32
  }
}

</mosaic_0001>

<llo_original>
// kernel: linear_model_forward.1
$region0: #{linear_model_forward.1}
  #allocation0 [shape = 'u32[]', space=smem, size = 0x4, offset = 0x4, fixed_abs, tag = 'smem constant byte address 0x4 - core index']
  #allocation1 [shape = 'u32[144,128]{1,0:T(1,128)}', space=vmem, size = 0x12000, scoped, tag = 'internal scratch']
  %s0 = inlined_call_operand.vmem [shape: f32[16,784], index: 0, kind: input, shape index: {}]
  %s1 = inlined_call_operand.hbm [shape: bf16[784,1024], index: 1, kind: input, shape index: {}]
  %s2 = inlined_call_operand.hbm [shape: f32[1,1024], index: 2, kind: input, shape index: {}]
  %s3 = inlined_call_operand.hbm [shape: bf16[1024,1024], index: 3, kind: input, shape index: {}]
  %s4 = inlined_call_operand.hbm [shape: f32[1,1024], index: 4, kind: input, shape index: {}]
  %s5 = inlined_call_operand.hbm [shape: bf16[1024,128], index: 5, kind: input, shape index: {}]
  %s6 = inlined_call_operand.hbm [shape: f32[1,128], index: 6, kind: input, shape index: {}]
  %s7 = inlined_call_operand.vmem [shape: f32[16,128], index: 7, kind: output, shape index: {}]
  %s8 = sld [smem:[#allocation0]]
  $region62: #{linear_model_forward.1} parent=0
    _
  %s10 = ssub.s32 1, %s8
  %s11 = scalar_select 0, %s10, %s8
  $region1: #{linear_model_forward.1} parent=0
    #allocation2 [shape = 'u8[1605632]{0}', space=vmem, size = 0x188000, scoped, tag = 'input window, operand 1, single buffered']
    #allocation3 [shape = 's32[1]{0}', space=sflag, size = 0x4, scoped, tag = 'scoped memory for linear_model_forward.1']
    #allocation4 [shape = 'u8[4096]{0}', space=vmem, size = 0x1000, scoped, tag = 'input window, operand 2, single buffered']
    #allocation5 [shape = 's32[1]{0}', space=sflag, size = 0x4, scoped, tag = 'scoped memory for linear_model_forward.1']
    #allocation6 [shape = 'u8[2097152]{0}', space=vmem, size = 0x200000, scoped, tag = 'input window, operand 3, single buffered']
    #allocation7 [shape = 'u8[4096]{0}', space=vmem, size = 0x1000, scoped, tag = 'input window, operand 4, single buffered']
    #allocation8 [shape = 's32[1]{0}', space=sflag, size = 0x4, scoped, tag = 'scoped memory for linear_model_forward.1']
    #allocation9 [shape = 'u8[262144]{0}', space=vmem, size = 0x40000, scoped, tag = 'input window, operand 5, single buffered']
    #allocation10 [shape = 'u8[512]{0}', space=vmem, size = 0x400, scoped, tag = 'input window, operand 6, single buffered']
    #allocation11 [shape = 's32[1]{0}', space=sflag, size = 0x4, scoped, tag = 'scoped memory for linear_model_forward.1']
    %12 = vsyncpa [#allocation3], 0
    %13 = vsyncpa [#allocation5], 0
    %14 = vsyncpa [#allocation8], 0
    %15 = vsyncpa [#allocation11], 0
    // Predicated region
    $region2: #{linear_model_forward.1} parent=1 // pred_check
      _
    $region3: #{linear_model_forward.1} parent=1 // pred_check_branch
      %17 = sbr.rel (0) target = $region5
    $region4: #{linear_model_forward.1} parent=1 // pred_region
      _
    $region5: #{linear_model_forward.1} parent=1 // pred_fallthru
      _
    // Predicated region
    $region6: #{linear_model_forward.1} parent=1 // pred_check
      _
    $region7: #{linear_model_forward.1} parent=1 // pred_check_branch
      %19 = sbr.rel (0) target = $region9
    $region8: #{linear_model_forward.1} parent=1 // pred_region
      %s21 = ssub.s32 50176, 50176
      %22 = vsyncadd [#allocation3], %s21
      %s23 = sshll.u32 [#allocation2], 4
      %s24 = int_to_ptr.vmem [resolvable:$true] %s23
      %29 = dma.hbm_to_vmem [thread:$0]  %s1, 50176, %s24, [#allocation3], 512, 512, 32
    $region9: #{linear_model_forward.1} parent=1 // pred_fallthru
      _
    // Predicated region
    $region10: #{linear_model_forward.1} parent=1 // pred_check
      _
    $region11: #{linear_model_forward.1} parent=1 // pred_check_branch
      %31 = sbr.rel (0) target = $region13
    $region12: #{linear_model_forward.1} parent=1 // pred_region
      %s33 = ssub.s32 128, 128
      %34 = vsyncadd [#allocation5], %s33
      %s36 = sshll.u32 [#allocation4], 4
      %s37 = int_to_ptr.vmem [resolvable:$true] %s36
      %39 = dma.hbm_to_vmem [thread:$0]  %s2, 128, %s37, [#allocation5]
    $region13: #{linear_model_forward.1} parent=1 // pred_fallthru
      _
    // Predicated region
    $region14: #{linear_model_forward.1} parent=1 // pred_check
      _
    $region15: #{linear_model_forward.1} parent=1 // pred_check_branch
      %41 = sbr.rel (0) target = $region17
    $region16: #{linear_model_forward.1} parent=1 // pred_region
      %s43 = ssub.s32 65536, 65536
      %44 = vsyncadd [#allocation5], %s43
      %s45 = sshll.u32 [#allocation6], 4
      %s46 = int_to_ptr.vmem [resolvable:$true] %s45
      %51 = dma.hbm_to_vmem [thread:$0]  %s3, 65536, %s46, [#allocation5], 512, 512, 32
    $region17: #{linear_model_forward.1} parent=1 // pred_fallthru
      _
    // Predicated region
    $region18: #{linear_model_forward.1} parent=1 // pred_check
      _
    $region19: #{linear_model_forward.1} parent=1 // pred_check_branch
      %53 = sbr.rel (0) target = $region21
    $region20: #{linear_model_forward.1} parent=1 // pred_region
      %s55 = ssub.s32 128, 128
      %56 = vsyncadd [#allocation8], %s55
      %s58 = sshll.u32 [#allocation7], 4
      %s59 = int_to_ptr.vmem [resolvable:$true] %s58
      %61 = dma.hbm_to_vmem [thread:$0]  %s4, 128, %s59, [#allocation8]
    $region21: #{linear_model_forward.1} parent=1 // pred_fallthru
      _
    // Predicated region
    $region22: #{linear_model_forward.1} parent=1 // pred_check
      _
    $region23: #{linear_model_forward.1} parent=1 // pred_check_branch
      %63 = sbr.rel (0) target = $region25
    $region24: #{linear_model_forward.1} parent=1 // pred_region
      %s65 = ssub.s32 8192, 8192
      %66 = vsyncadd [#allocation8], %s65
      %s67 = sshll.u32 [#allocation9], 4
      %s68 = int_to_ptr.vmem [resolvable:$true] %s67
      %73 = dma.hbm_to_vmem [thread:$0]  %s5, 8192, %s68, [#allocation8], 64, 64, 4
    $region25: #{linear_model_forward.1} parent=1 // pred_fallthru
      _
    // Predicated region
    $region26: #{linear_model_forward.1} parent=1 // pred_check
      _
    $region27: #{linear_model_forward.1} parent=1 // pred_check_branch
      %75 = sbr.rel (0) target = $region29
    $region28: #{linear_model_forward.1} parent=1 // pred_region
      %s77 = ssub.s32 16, 16
      %78 = vsyncadd [#allocation11], %s77
      %s80 = sshll.u32 [#allocation10], 4
      %s81 = int_to_ptr.vmem [resolvable:$true] %s80
      %83 = dma.hbm_to_vmem [thread:$0]  %s6, 16, %s81, [#allocation11]
    $region29: #{linear_model_forward.1} parent=1 // pred_fallthru
      _
    // Predicated region
    $region30: #{linear_model_forward.1} parent=1 // pred_check
      _
    $region31: #{linear_model_forward.1} parent=1 // pred_check_branch
      %85 = sbr.rel (0) target = $region33
    $region32: #{linear_model_forward.1} parent=1 // pred_region
      %86 = dma.done [#allocation3], 50176
    $region33: #{linear_model_forward.1} parent=1 // pred_fallthru
      _
    // Predicated region
    $region34: #{linear_model_forward.1} parent=1 // pred_check
      _
    $region35: #{linear_model_forward.1} parent=1 // pred_check_branch
      %88 = sbr.rel (0) target = $region37
    $region36: #{linear_model_forward.1} parent=1 // pred_region
      %89 = dma.done [#allocation5], 128
    $region37: #{linear_model_forward.1} parent=1 // pred_fallthru
      _
    // Predicated region
    $region38: #{linear_model_forward.1} parent=1 // pred_check
      _
    $region39: #{linear_model_forward.1} parent=1 // pred_check_branch
      %91 = sbr.rel (0) target = $region41
    $region40: #{linear_model_forward.1} parent=1 // pred_region
      %92 = dma.done [#allocation5], 65536
    $region41: #{linear_model_forward.1} parent=1 // pred_fallthru
      _
    // Predicated region
    $region42: #{linear_model_forward.1} parent=1 // pred_check
      _
    $region43: #{linear_model_forward.1} parent=1 // pred_check_branch
      %94 = sbr.rel (0) target = $region45
    $region44: #{linear_model_forward.1} parent=1 // pred_region
      %95 = dma.done [#allocation8], 128
    $region45: #{linear_model_forward.1} parent=1 // pred_fallthru
      _
    // Predicated region
    $region46: #{linear_model_forward.1} parent=1 // pred_check
      _
    $region47: #{linear_model_forward.1} parent=1 // pred_check_branch
      %97 = sbr.rel (0) target = $region49
    $region48: #{linear_model_forward.1} parent=1 // pred_region
      %98 = dma.done [#allocation8], 8192
    $region49: #{linear_model_forward.1} parent=1 // pred_fallthru
      _
    // Predicated region
    $region50: #{linear_model_forward.1} parent=1 // pred_check
      _
    $region51: #{linear_model_forward.1} parent=1 // pred_check_branch
      %100 = sbr.rel (0) target = $region53
    $region52: #{linear_model_forward.1} parent=1 // pred_region
      %101 = dma.done [#allocation11], 16
    $region53: #{linear_model_forward.1} parent=1 // pred_fallthru
      _
    %v103 = vld [vmem:[%s0] sm:$0xff]
    %v104 = vld [vmem:[%s0 + $0x8] sm:$0xff]
    %v105 = vld [vmem:[%s0 + $0x10] sm:$0xff]
    %v106 = vld [vmem:[%s0 + $0x18] sm:$0xff]
    %v107 = vld [vmem:[%s0 + $0x20] sm:$0xff]
    %v108 = vld [vmem:[%s0 + $0x28] sm:$0xff]
    %v109 = vld [vmem:[%s0 + $0x30] sm:$0xff]
    %v110 = vld [vmem:[%s0 + $0x38] sm:$0xff]
    %v111 = vld [vmem:[%s0 + $0x40] sm:$0xff]
    %v112 = vld [vmem:[%s0 + $0x48] sm:$0xff]
    %v113 = vld [vmem:[%s0 + $0x50] sm:$0xff]
    %v114 = vld [vmem:[%s0 + $0x58] sm:$0xff]
    %v115 = vld [vmem:[%s0 + $0x60] sm:$0xff]
    %v116 = vld [vmem:[%s0 + $0x68] sm:$0xff]
    %v117 = vpack.c.bf16 %v110, %v103
    %v118 = vpack.c.bf16 %v111, %v104
    %v119 = vpack.c.bf16 %v112, %v105
    %v120 = vpack.c.bf16 %v113, %v106
    %v121 = vpack.c.bf16 %v114, %v107
    %v122 = vpack.c.bf16 %v115, %v108
    %v123 = vpack.c.bf16 %v116, %v109
    %v124 = vld [vmem:[#allocation2] sm:$0xff]
    %v125 = vld [vmem:[#allocation2 + $0x8] sm:$0xff]
    %v126 = vld [vmem:[#allocation2 + $0x10] sm:$0xff]
    %v127 = vld [vmem:[#allocation2 + $0x18] sm:$0xff]
    %v128 = vld [vmem:[#allocation2 + $0x20] sm:$0xff]
    %v129 = vld [vmem:[#allocation2 + $0x28] sm:$0xff]
    %v130 = vld [vmem:[#allocation2 + $0x30] sm:$0xff]
    %v131 = vld [vmem:[#allocation2 + $0x38] sm:$0xff]
    %v132 = vld [vmem:[#allocation2 + $0x40] sm:$0xff]
    %v133 = vld [vmem:[#allocation2 + $0x48] sm:$0xff]
    %v134 = vld [vmem:[#allocation2 + $0x50] sm:$0xff]
    %v135 = vld [vmem:[#allocation2 + $0x58] sm:$0xff]
    %v136 = vld [vmem:[#allocation2 + $0x60] sm:$0xff]
    %v137 = vld [vmem:[#allocation2 + $0x68] sm:$0xff]
    %v138 = vld [vmem:[#allocation2 + $0x70] sm:$0xff]
    %v139 = vld [vmem:[#allocation2 + $0x78] sm:$0xff]
    %v140 = vld [vmem:[#allocation2 + $0x80] sm:$0xff]
    %v141 = vld [vmem:[#allocation2 + $0x88] sm:$0xff]
    %v142 = vld [vmem:[#allocation2 + $0x90] sm:$0xff]
    %v143 = vld [vmem:[#allocation2 + $0x98] sm:$0xff]
    %v144 = vld [vmem:[#allocation2 + $0xa0] sm:$0xff]
    %v145 = vld [vmem:[#allocation2 + $0xa8] sm:$0xff]
    %v146 = vld [vmem:[#allocation2 + $0xb0] sm:$0xff]
    %v147 = vld [vmem:[#allocation2 + $0xb8] sm:$0xff]
    %v148 = vld [vmem:[#allocation2 + $0xc0] sm:$0xff]
    %v149 = vld [vmem:[#allocation2 + $0xc8] sm:$0xff]
    %v150 = vld [vmem:[#allocation2 + $0xd0] sm:$0xff]
    %v151 = vld [vmem:[#allocation2 + $0xd8] sm:$0xff]
    %v152 = vld [vmem:[#allocation2 + $0xe0] sm:$0xff]
    %v153 = vld [vmem:[#allocation2 + $0xe8] sm:$0xff]
    %v154 = vld [vmem:[#allocation2 + $0xf0] sm:$0xff]
    %v155 = vld [vmem:[#allocation2 + $0xf8] sm:$0xff]
    %v156 = vld [vmem:[#allocation2 + $0x100] sm:$0xff]
    %v157 = vld [vmem:[#allocation2 + $0x108] sm:$0xff]
    %v158 = vld [vmem:[#allocation2 + $0x110] sm:$0xff]
    %v159 = vld [vmem:[#allocation2 + $0x118] sm:$0xff]
    %v160 = vld [vmem:[#allocation2 + $0x120] sm:$0xff]
    %v161 = vld [vmem:[#allocation2 + $0x128] sm:$0xff]
    %v162 = vld [vmem:[#allocation2 + $0x130] sm:$0xff]
    %v163 = vld [vmem:[#allocation2 + $0x138] sm:$0xff]
    %v164 = vld [vmem:[#allocation2 + $0x140] sm:$0xff]
    %v165 = vld [vmem:[#allocation2 + $0x148] sm:$0xff]
    %v166 = vld [vmem:[#allocation2 + $0x150] sm:$0xff]
    %v167 = vld [vmem:[#allocation2 + $0x158] sm:$0xff]
    %v168 = vld [vmem:[#allocation2 + $0x160] sm:$0xff]
    %v169 = vld [vmem:[#allocation2 + $0x168] sm:$0xff]
    %v170 = vld [vmem:[#allocation2 + $0x170] sm:$0xff]
    %v171 = vld [vmem:[#allocation2 + $0x178] sm:$0xff]
    %v172 = vld [vmem:[#allocation2 + $0x180] sm:$0xff]
    %v173 = vld [vmem:[#allocation2 + $0x188] sm:$0xff]
    %v174 = vld [vmem:[#allocation2 + $0x190] sm:$0xff]
    %v175 = vld [vmem:[#allocation2 + $0x198] sm:$0xff]
    %v176 = vld [vmem:[#allocation2 + $0x1a0] sm:$0xff]
    %v177 = vld [vmem:[#allocation2 + $0x1a8] sm:$0xff]
    %v178 = vld [vmem:[#allocation2 + $0x1b0] sm:$0xff]
    %v179 = vld [vmem:[#allocation2 + $0x1b8] sm:$0xff]
    %v180 = vld [vmem:[#allocation2 + $0x1c0] sm:$0xff]
    %v181 = vld [vmem:[#allocation2 + $0x1c8] sm:$0xff]
    %v182 = vld [vmem:[#allocation2 + $0x1d0] sm:$0xff]
    %v183 = vld [vmem:[#allocation2 + $0x1d8] sm:$0xff]
    %v184 = vld [vmem:[#allocation2 + $0x1e0] sm:$0xff]
    %v185 = vld [vmem:[#allocation2 + $0x1e8] sm:$0xff]
    %v186 = vld [vmem:[#allocation2 + $0x1f0] sm:$0xff]
    %v187 = vld [vmem:[#allocation2 + $0x1f8] sm:$0xff]
    %v188 = vld [vmem:[#allocation2 + $0x200] sm:$0xff]
    %v189 = vld [vmem:[#allocation2 + $0x208] sm:$0xff]
    %v190 = vld [vmem:[#allocation2 + $0x210] sm:$0xff]
    %v191 = vld [vmem:[#allocation2 + $0x218] sm:$0xff]
    %v192 = vld [vmem:[#allocation2 + $0x220] sm:$0xff]
    %v193 = vld [vmem:[#allocation2 + $0x228] sm:$0xff]
    %v194 = vld [vmem:[#allocation2 + $0x230] sm:$0xff]
    %v195 = vld [vmem:[#allocation2 + $0x238] sm:$0xff]
    %v196 = vld [vmem:[#allocation2 + $0x240] sm:$0xff]
    %v197 = vld [vmem:[#allocation2 + $0x248] sm:$0xff]
    %v198 = vld [vmem:[#allocation2 + $0x250] sm:$0xff]
    %v199 = vld [vmem:[#allocation2 + $0x258] sm:$0xff]
    %v200 = vld [vmem:[#allocation2 + $0x260] sm:$0xff]
    %v201 = vld [vmem:[#allocation2 + $0x268] sm:$0xff]
    %v202 = vld [vmem:[#allocation2 + $0x270] sm:$0xff]
    %v203 = vld [vmem:[#allocation2 + $0x278] sm:$0xff]
    %v204 = vld [vmem:[#allocation2 + $0x280] sm:$0xff]
    %v205 = vld [vmem:[#allocation2 + $0x288] sm:$0xff]
    %v206 = vld [vmem:[#allocation2 + $0x290] sm:$0xff]
    %v207 = vld [vmem:[#allocation2 + $0x298] sm:$0xff]
    %v208 = vld [vmem:[#allocation2 + $0x2a0] sm:$0xff]
    %v209 = vld [vmem:[#allocation2 + $0x2a8] sm:$0xff]
    %v210 = vld [vmem:[#allocation2 + $0x2b0] sm:$0xff]
    %v211 = vld [vmem:[#allocation2 + $0x2b8] sm:$0xff]
    %v212 = vld [vmem:[#allocation2 + $0x2c0] sm:$0xff]
    %v213 = vld [vmem:[#allocation2 + $0x2c8] sm:$0xff]
    %v214 = vld [vmem:[#allocation2 + $0x2d0] sm:$0xff]
    %v215 = vld [vmem:[#allocation2 + $0x2d8] sm:$0xff]
    %v216 = vld [vmem:[#allocation2 + $0x2e0] sm:$0xff]
    %v217 = vld [vmem:[#allocation2 + $0x2e8] sm:$0xff]
    %v218 = vld [vmem:[#allocation2 + $0x2f0] sm:$0xff]
    %v219 = vld [vmem:[#allocation2 + $0x2f8] sm:$0xff]
    %v220 = vld [vmem:[#allocation2 + $0x300] sm:$0xff]
    %v221 = vld [vmem:[#allocation2 + $0x308] sm:$0xff]
    %v222 = vld [vmem:[#allocation2 + $0x310] sm:$0xff]
    %v223 = vld [vmem:[#allocation2 + $0x318] sm:$0xff]
    %v224 = vld [vmem:[#allocation2 + $0x320] sm:$0xff]
    %v225 = vld [vmem:[#allocation2 + $0x328] sm:$0xff]
    %v226 = vld [vmem:[#allocation2 + $0x330] sm:$0xff]
    %v227 = vld [vmem:[#allocation2 + $0x338] sm:$0xff]
    %v228 = vld [vmem:[#allocation2 + $0x340] sm:$0xff]
    %v229 = vld [vmem:[#allocation2 + $0x348] sm:$0xff]
    %v230 = vld [vmem:[#allocation2 + $0x350] sm:$0xff]
    %v231 = vld [vmem:[#allocation2 + $0x358] sm:$0xff]
    %v232 = vld [vmem:[#allocation2 + $0x360] sm:$0xff]
    %v233 = vld [vmem:[#allocation2 + $0x368] sm:$0xff]
    %v234 = vld [vmem:[#allocation2 + $0x370] sm:$0xff]
    %v235 = vld [vmem:[#allocation2 + $0x378] sm:$0xff]
    %v236 = vld [vmem:[#allocation2 + $0x380] sm:$0xff]
    %v237 = vld [vmem:[#allocation2 + $0x388] sm:$0xff]
    %v238 = vld [vmem:[#allocation2 + $0x390] sm:$0xff]
    %v239 = vld [vmem:[#allocation2 + $0x398] sm:$0xff]
    %v240 = vld [vmem:[#allocation2 + $0x3a0] sm:$0xff]
    %v241 = vld [vmem:[#allocation2 + $0x3a8] sm:$0xff]
    %v242 = vld [vmem:[#allocation2 + $0x3b0] sm:$0xff]
    %v243 = vld [vmem:[#allocation2 + $0x3b8] sm:$0xff]
    %v244 = vld [vmem:[#allocation2 + $0x3c0] sm:$0xff]
    %v245 = vld [vmem:[#allocation2 + $0x3c8] sm:$0xff]
    %v246 = vld [vmem:[#allocation2 + $0x3d0] sm:$0xff]
    %v247 = vld [vmem:[#allocation2 + $0x3d8] sm:$0xff]
    %v248 = vld [vmem:[#allocation2 + $0x3e0] sm:$0xff]
    %v249 = vld [vmem:[#allocation2 + $0x3e8] sm:$0xff]
    %v250 = vld [vmem:[#allocation2 + $0x3f0] sm:$0xff]
    %v251 = vld [vmem:[#allocation2 + $0x3f8] sm:$0xff]
    %v252 = vld [vmem:[#allocation2 + $0x400] sm:$0xff]
    %v253 = vld [vmem:[#allocation2 + $0x408] sm:$0xff]
    %v254 = vld [vmem:[#allocation2 + $0x410] sm:$0xff]
    %v255 = vld [vmem:[#allocation2 + $0x418] sm:$0xff]
    %v256 = vld [vmem:[#allocation2 + $0x420] sm:$0xff]
    %v257 = vld [vmem:[#allocation2 + $0x428] sm:$0xff]
    %v258 = vld [vmem:[#allocation2 + $0x430] sm:$0xff]
    %v259 = vld [vmem:[#allocation2 + $0x438] sm:$0xff]
    %v260 = vld [vmem:[#allocation2 + $0x440] sm:$0xff]
    %v261 = vld [vmem:[#allocation2 + $0x448] sm:$0xff]
    %v262 = vld [vmem:[#allocation2 + $0x450] sm:$0xff]
    %v263 = vld [vmem:[#allocation2 + $0x458] sm:$0xff]
    %v264 = vld [vmem:[#allocation2 + $0x460] sm:$0xff]
    %v265 = vld [vmem:[#allocation2 + $0x468] sm:$0xff]
    %v266 = vld [vmem:[#allocation2 + $0x470] sm:$0xff]
    %v267 = vld [vmem:[#allocation2 + $0x478] sm:$0xff]
    %v268 = vld [vmem:[#allocation2 + $0x480] sm:$0xff]
    %v269 = vld [vmem:[#allocation2 + $0x488] sm:$0xff]
    %v270 = vld [vmem:[#allocation2 + $0x490] sm:$0xff]
    %v271 = vld [vmem:[#allocation2 + $0x498] sm:$0xff]
    %v272 = vld [vmem:[#allocation2 + $0x4a0] sm:$0xff]
    %v273 = vld [vmem:[#allocation2 + $0x4a8] sm:$0xff]
    %v274 = vld [vmem:[#allocation2 + $0x4b0] sm:$0xff]
    %v275 = vld [vmem:[#allocation2 + $0x4b8] sm:$0xff]
    %v276 = vld [vmem:[#allocation2 + $0x4c0] sm:$0xff]
    %v277 = vld [vmem:[#allocation2 + $0x4c8] sm:$0xff]
    %v278 = vld [vmem:[#allocation2 + $0x4d0] sm:$0xff]
    %v279 = vld [vmem:[#allocation2 + $0x4d8] sm:$0xff]
    %v280 = vld [vmem:[#allocation2 + $0x4e0] sm:$0xff]
    %v281 = vld [vmem:[#allocation2 + $0x4e8] sm:$0xff]
    %v282 = vld [vmem:[#allocation2 + $0x4f0] sm:$0xff]
    %v283 = vld [vmem:[#allocation2 + $0x4f8] sm:$0xff]
    %v284 = vld [vmem:[#allocation2 + $0x500] sm:$0xff]
    %v285 = vld [vmem:[#allocation2 + $0x508] sm:$0xff]
    %v286 = vld [vmem:[#allocation2 + $0x510] sm:$0xff]
    %v287 = vld [vmem:[#allocation2 + $0x518] sm:$0xff]
    %v288 = vld [vmem:[#allocation2 + $0x520] sm:$0xff]
    %v289 = vld [vmem:[#allocation2 + $0x528] sm:$0xff]
    %v290 = vld [vmem:[#allocation2 + $0x530] sm:$0xff]
    %v291 = vld [vmem:[#allocation2 + $0x538] sm:$0xff]
    %v292 = vld [vmem:[#allocation2 + $0x540] sm:$0xff]
    %v293 = vld [vmem:[#allocation2 + $0x548] sm:$0xff]
    %v294 = vld [vmem:[#allocation2 + $0x550] sm:$0xff]
    %v295 = vld [vmem:[#allocation2 + $0x558] sm:$0xff]
    %v296 = vld [vmem:[#allocation2 + $0x560] sm:$0xff]
    %v297 = vld [vmem:[#allocation2 + $0x568] sm:$0xff]
    %v298 = vld [vmem:[#allocation2 + $0x570] sm:$0xff]
    %v299 = vld [vmem:[#allocation2 + $0x578] sm:$0xff]
    %v300 = vld [vmem:[#allocation2 + $0x580] sm:$0xff]
    %v301 = vld [vmem:[#allocation2 + $0x588] sm:$0xff]
    %v302 = vld [vmem:[#allocation2 + $0x590] sm:$0xff]
    %v303 = vld [vmem:[#allocation2 + $0x598] sm:$0xff]
    %v304 = vld [vmem:[#allocation2 + $0x5a0] sm:$0xff]
    %v305 = vld [vmem:[#allocation2 + $0x5a8] sm:$0xff]
    %v306 = vld [vmem:[#allocation2 + $0x5b0] sm:$0xff]
    %v307 = vld [vmem:[#allocation2 + $0x5b8] sm:$0xff]
    %v308 = vld [vmem:[#allocation2 + $0x5c0] sm:$0xff]
    %v309 = vld [vmem:[#allocation2 + $0x5c8] sm:$0xff]
    %v310 = vld [vmem:[#allocation2 + $0x5d0] sm:$0xff]
    %v311 = vld [vmem:[#allocation2 + $0x5d8] sm:$0xff]
    %v312 = vld [vmem:[#allocation2 + $0x5e0] sm:$0xff]
    %v313 = vld [vmem:[#allocation2 + $0x5e8] sm:$0xff]
    %v314 = vld [vmem:[#allocation2 + $0x5f0] sm:$0xff]
    %v315 = vld [vmem:[#allocation2 + $0x5f8] sm:$0xff]
    %v316 = vld [vmem:[#allocation2 + $0x600] sm:$0xff]
    %v317 = vld [vmem:[#allocation2 + $0x608] sm:$0xff]
    %v318 = vld [vmem:[#allocation2 + $0x610] sm:$0xff]
    %v319 = vld [vmem:[#allocation2 + $0x618] sm:$0xff]
    %v320 = vld [vmem:[#allocation2 + $0x620] sm:$0xff]
    %v321 = vld [vmem:[#allocation2 + $0x628] sm:$0xff]
    %v322 = vld [vmem:[#allocation2 + $0x630] sm:$0xff]
    %v323 = vld [vmem:[#allocation2 + $0x638] sm:$0xff]
    %v324 = vld [vmem:[#allocation2 + $0x640] sm:$0xff]
    %v325 = vld [vmem:[#allocation2 + $0x648] sm:$0xff]
    %v326 = vld [vmem:[#allocation2 + $0x650] sm:$0xff]
    %v327 = vld [vmem:[#allocation2 + $0x658] sm:$0xff]
    %v328 = vld [vmem:[#allocation2 + $0x660] sm:$0xff]
    %v329 = vld [vmem:[#allocation2 + $0x668] sm:$0xff]
    %v330 = vld [vmem:[#allocation2 + $0x670] sm:$0xff]
    %v331 = vld [vmem:[#allocation2 + $0x678] sm:$0xff]
    %v332 = vld [vmem:[#allocation2 + $0x680] sm:$0xff]
    %v333 = vld [vmem:[#allocation2 + $0x688] sm:$0xff]
    %v334 = vld [vmem:[#allocation2 + $0x690] sm:$0xff]
    %v335 = vld [vmem:[#allocation2 + $0x698] sm:$0xff]
    %v336 = vld [vmem:[#allocation2 + $0x6a0] sm:$0xff]
    %v337 = vld [vmem:[#allocation2 + $0x6a8] sm:$0xff]
    %v338 = vld [vmem:[#allocation2 + $0x6b0] sm:$0xff]
    %v339 = vld [vmem:[#allocation2 + $0x6b8] sm:$0xff]
    %v340 = vld [vmem:[#allocation2 + $0x6c0] sm:$0xff]
    %v341 = vld [vmem:[#allocation2 + $0x6c8] sm:$0xff]
    %v342 = vld [vmem:[#allocation2 + $0x6d0] sm:$0xff]
    %v343 = vld [vmem:[#allocation2 + $0x6d8] sm:$0xff]
    %v344 = vld [vmem:[#allocation2 + $0x6e0] sm:$0xff]
    %v345 = vld [vmem:[#allocation2 + $0x6e8] sm:$0xff]
    %v346 = vld [vmem:[#allocation2 + $0x6f0] sm:$0xff]
    %v347 = vld [vmem:[#allocation2 + $0x6f8] sm:$0xff]
    %v348 = vld [vmem:[#allocation2 + $0x700] sm:$0xff]
    %v349 = vld [vmem:[#allocation2 + $0x708] sm:$0xff]
    %v350 = vld [vmem:[#allocation2 + $0x710] sm:$0xff]
    %v351 = vld [vmem:[#allocation2 + $0x718] sm:$0xff]
    %v352 = vld [vmem:[#allocation2 + $0x720] sm:$0xff]
    %v353 = vld [vmem:[#allocation2 + $0x728] sm:$0xff]
    %v354 = vld [vmem:[#allocation2 + $0x730] sm:$0xff]
    %v355 = vld [vmem:[#allocation2 + $0x738] sm:$0xff]
    %v356 = vld [vmem:[#allocation2 + $0x740] sm:$0xff]
    %v357 = vld [vmem:[#allocation2 + $0x748] sm:$0xff]
    %v358 = vld [vmem:[#allocation2 + $0x750] sm:$0xff]
    %v359 = vld [vmem:[#allocation2 + $0x758] sm:$0xff]
    %v360 = vld [vmem:[#allocation2 + $0x760] sm:$0xff]
    %v361 = vld [vmem:[#allocation2 + $0x768] sm:$0xff]
    %v362 = vld [vmem:[#allocation2 + $0x770] sm:$0xff]
    %v363 = vld [vmem:[#allocation2 + $0x778] sm:$0xff]
    %v364 = vld [vmem:[#allocation2 + $0x780] sm:$0xff]
    %v365 = vld [vmem:[#allocation2 + $0x788] sm:$0xff]
    %v366 = vld [vmem:[#allocation2 + $0x790] sm:$0xff]
    %v367 = vld [vmem:[#allocation2 + $0x798] sm:$0xff]
    %v368 = vld [vmem:[#allocation2 + $0x7a0] sm:$0xff]
    %v369 = vld [vmem:[#allocation2 + $0x7a8] sm:$0xff]
    %v370 = vld [vmem:[#allocation2 + $0x7b0] sm:$0xff]
    %v371 = vld [vmem:[#allocation2 + $0x7b8] sm:$0xff]
    %v372 = vld [vmem:[#allocation2 + $0x7c0] sm:$0xff]
    %v373 = vld [vmem:[#allocation2 + $0x7c8] sm:$0xff]
    %v374 = vld [vmem:[#allocation2 + $0x7d0] sm:$0xff]
    %v375 = vld [vmem:[#allocation2 + $0x7d8] sm:$0xff]
    %v376 = vld [vmem:[#allocation2 + $0x7e0] sm:$0xff]
    %v377 = vld [vmem:[#allocation2 + $0x7e8] sm:$0xff]
    %v378 = vld [vmem:[#allocation2 + $0x7f0] sm:$0xff]
    %v379 = vld [vmem:[#allocation2 + $0x7f8] sm:$0xff]
    %v380 = vld [vmem:[#allocation2 + $0x800] sm:$0xff]
    %v381 = vld [vmem:[#allocation2 + $0x808] sm:$0xff]
    %v382 = vld [vmem:[#allocation2 + $0x810] sm:$0xff]
    %v383 = vld [vmem:[#allocation2 + $0x818] sm:$0xff]
    %v384 = vld [vmem:[#allocation2 + $0x820] sm:$0xff]
    %v385 = vld [vmem:[#allocation2 + $0x828] sm:$0xff]
    %v386 = vld [vmem:[#allocation2 + $0x830] sm:$0xff]
    %v387 = vld [vmem:[#allocation2 + $0x838] sm:$0xff]
    %v388 = vld [vmem:[#allocation2 + $0x840] sm:$0xff]
    %v389 = vld [vmem:[#allocation2 + $0x848] sm:$0xff]
    %v390 = vld [vmem:[#allocation2 + $0x850] sm:$0xff]
    %v391 = vld [vmem:[#allocation2 + $0x858] sm:$0xff]
    %v392 = vld [vmem:[#allocation2 + $0x860] sm:$0xff]
    %v393 = vld [vmem:[#allocation2 + $0x868] sm:$0xff]
    %v394 = vld [vmem:[#allocation2 + $0x870] sm:$0xff]
    %v395 = vld [vmem:[#allocation2 + $0x878] sm:$0xff]
    %v396 = vld [vmem:[#allocation2 + $0x880] sm:$0xff]
    %v397 = vld [vmem:[#allocation2 + $0x888] sm:$0xff]
    %v398 = vld [vmem:[#allocation2 + $0x890] sm:$0xff]
    %v399 = vld [vmem:[#allocation2 + $0x898] sm:$0xff]
    %v400 = vld [vmem:[#allocation2 + $0x8a0] sm:$0xff]
    %v401 = vld [vmem:[#allocation2 + $0x8a8] sm:$0xff]
    %v402 = vld [vmem:[#allocation2 + $0x8b0] sm:$0xff]
    %v403 = vld [vmem:[#allocation2 + $0x8b8] sm:$0xff]
    %v404 = vld [vmem:[#allocation2 + $0x8c0] sm:$0xff]
    %v405 = vld [vmem:[#allocation2 + $0x8c8] sm:$0xff]
    %v406 = vld [vmem:[#allocation2 + $0x8d0] sm:$0xff]
    %v407 = vld [vmem:[#allocation2 + $0x8d8] sm:$0xff]
    %v408 = vld [vmem:[#allocation2 + $0x8e0] sm:$0xff]
    %v409 = vld [vmem:[#allocation2 + $0x8e8] sm:$0xff]
    %v410 = vld [vmem:[#allocation2 + $0x8f0] sm:$0xff]
    %v411 = vld [vmem:[#allocation2 + $0x8f8] sm:$0xff]
    %v412 = vld [vmem:[#allocation2 + $0x900] sm:$0xff]
    %v413 = vld [vmem:[#allocation2 + $0x908] sm:$0xff]
    %v414 = vld [vmem:[#allocation2 + $0x910] sm:$0xff]
    %v415 = vld [vmem:[#allocation2 + $0x918] sm:$0xff]
    %v416 = vld [vmem:[#allocation2 + $0x920] sm:$0xff]
    %v417 = vld [vmem:[#allocation2 + $0x928] sm:$0xff]
    %v418 = vld [vmem:[#allocation2 + $0x930] sm:$0xff]
    %v419 = vld [vmem:[#allocation2 + $0x938] sm:$0xff]
    %v420 = vld [vmem:[#allocation2 + $0x940] sm:$0xff]
    %v421 = vld [vmem:[#allocation2 + $0x948] sm:$0xff]
    %v422 = vld [vmem:[#allocation2 + $0x950] sm:$0xff]
    %v423 = vld [vmem:[#allocation2 + $0x958] sm:$0xff]
    %v424 = vld [vmem:[#allocation2 + $0x960] sm:$0xff]
    %v425 = vld [vmem:[#allocation2 + $0x968] sm:$0xff]
    %v426 = vld [vmem:[#allocation2 + $0x970] sm:$0xff]
    %v427 = vld [vmem:[#allocation2 + $0x978] sm:$0xff]
    %v428 = vld [vmem:[#allocation2 + $0x980] sm:$0xff]
    %v429 = vld [vmem:[#allocation2 + $0x988] sm:$0xff]
    %v430 = vld [vmem:[#allocation2 + $0x990] sm:$0xff]
    %v431 = vld [vmem:[#allocation2 + $0x998] sm:$0xff]
    %v432 = vld [vmem:[#allocation2 + $0x9a0] sm:$0xff]
    %v433 = vld [vmem:[#allocation2 + $0x9a8] sm:$0xff]
    %v434 = vld [vmem:[#allocation2 + $0x9b0] sm:$0xff]
    %v435 = vld [vmem:[#allocation2 + $0x9b8] sm:$0xff]
    %v436 = vld [vmem:[#allocation2 + $0x9c0] sm:$0xff]
    %v437 = vld [vmem:[#allocation2 + $0x9c8] sm:$0xff]
    %v438 = vld [vmem:[#allocation2 + $0x9d0] sm:$0xff]
    %v439 = vld [vmem:[#allocation2 + $0x9d8] sm:$0xff]
    %v440 = vld [vmem:[#allocation2 + $0x9e0] sm:$0xff]
    %v441 = vld [vmem:[#allocation2 + $0x9e8] sm:$0xff]
    %v442 = vld [vmem:[#allocation2 + $0x9f0] sm:$0xff]
    %v443 = vld [vmem:[#allocation2 + $0x9f8] sm:$0xff]
    %v444 = vld [vmem:[#allocation2 + $0xa00] sm:$0xff]
    %v445 = vld [vmem:[#allocation2 + $0xa08] sm:$0xff]
    %v446 = vld [vmem:[#allocation2 + $0xa10] sm:$0xff]
    %v447 = vld [vmem:[#allocation2 + $0xa18] sm:$0xff]
    %v448 = vld [vmem:[#allocation2 + $0xa20] sm:$0xff]
    %v449 = vld [vmem:[#allocation2 + $0xa28] sm:$0xff]
    %v450 = vld [vmem:[#allocation2 + $0xa30] sm:$0xff]
    %v451 = vld [vmem:[#allocation2 + $0xa38] sm:$0xff]
    %v452 = vld [vmem:[#allocation2 + $0xa40] sm:$0xff]
    %v453 = vld [vmem:[#allocation2 + $0xa48] sm:$0xff]
    %v454 = vld [vmem:[#allocation2 + $0xa50] sm:$0xff]
    %v455 = vld [vmem:[#allocation2 + $0xa58] sm:$0xff]
    %v456 = vld [vmem:[#allocation2 + $0xa60] sm:$0xff]
    %v457 = vld [vmem:[#allocation2 + $0xa68] sm:$0xff]
    %v458 = vld [vmem:[#allocation2 + $0xa70] sm:$0xff]
    %v459 = vld [vmem:[#allocation2 + $0xa78] sm:$0xff]
    %v460 = vld [vmem:[#allocation2 + $0xa80] sm:$0xff]
    %v461 = vld [vmem:[#allocation2 + $0xa88] sm:$0xff]
    %v462 = vld [vmem:[#allocation2 + $0xa90] sm:$0xff]
    %v463 = vld [vmem:[#allocation2 + $0xa98] sm:$0xff]
    %v464 = vld [vmem:[#allocation2 + $0xaa0] sm:$0xff]
    %v465 = vld [vmem:[#allocation2 + $0xaa8] sm:$0xff]
    %v466 = vld [vmem:[#allocation2 + $0xab0] sm:$0xff]
    %v467 = vld [vmem:[#allocation2 + $0xab8] sm:$0xff]
    %v468 = vld [vmem:[#allocation2 + $0xac0] sm:$0xff]
    %v469 = vld [vmem:[#allocation2 + $0xac8] sm:$0xff]
    %v470 = vld [vmem:[#allocation2 + $0xad0] sm:$0xff]
    %v471 = vld [vmem:[#allocation2 + $0xad8] sm:$0xff]
    %v472 = vld [vmem:[#allocation2 + $0xae0] sm:$0xff]
    %v473 = vld [vmem:[#allocation2 + $0xae8] sm:$0xff]
    %v474 = vld [vmem:[#allocation2 + $0xaf0] sm:$0xff]
    %v475 = vld [vmem:[#allocation2 + $0xaf8] sm:$0xff]
    %v476 = vld [vmem:[#allocation2 + $0xb00] sm:$0xff]
    %v477 = vld [vmem:[#allocation2 + $0xb08] sm:$0xff]
    %v478 = vld [vmem:[#allocation2 + $0xb10] sm:$0xff]
    %v479 = vld [vmem:[#allocation2 + $0xb18] sm:$0xff]
    %v480 = vld [vmem:[#allocation2 + $0xb20] sm:$0xff]
    %v481 = vld [vmem:[#allocation2 + $0xb28] sm:$0xff]
    %v482 = vld [vmem:[#allocation2 + $0xb30] sm:$0xff]
    %v483 = vld [vmem:[#allocation2 + $0xb38] sm:$0xff]
    %v484 = vld [vmem:[#allocation2 + $0xb40] sm:$0xff]
    %v485 = vld [vmem:[#allocation2 + $0xb48] sm:$0xff]
    %v486 = vld [vmem:[#allocation2 + $0xb50] sm:$0xff]
    %v487 = vld [vmem:[#allocation2 + $0xb58] sm:$0xff]
    %v488 = vld [vmem:[#allocation2 + $0xb60] sm:$0xff]
    %v489 = vld [vmem:[#allocation2 + $0xb68] sm:$0xff]
    %v490 = vld [vmem:[#allocation2 + $0xb70] sm:$0xff]
    %v491 = vld [vmem:[#allocation2 + $0xb78] sm:$0xff]
    %v492 = vld [vmem:[#allocation2 + $0xb80] sm:$0xff]
    %v493 = vld [vmem:[#allocation2 + $0xb88] sm:$0xff]
    %v494 = vld [vmem:[#allocation2 + $0xb90] sm:$0xff]
    %v495 = vld [vmem:[#allocation2 + $0xb98] sm:$0xff]
    %v496 = vld [vmem:[#allocation2 + $0xba0] sm:$0xff]
    %v497 = vld [vmem:[#allocation2 + $0xba8] sm:$0xff]
    %v498 = vld [vmem:[#allocation2 + $0xbb0] sm:$0xff]
    %v499 = vld [vmem:[#allocation2 + $0xbb8] sm:$0xff]
    %v500 = vld [vmem:[#allocation2 + $0xbc0] sm:$0xff]
    %v501 = vld [vmem:[#allocation2 + $0xbc8] sm:$0xff]
    %v502 = vld [vmem:[#allocation2 + $0xbd0] sm:$0xff]
    %v503 = vld [vmem:[#allocation2 + $0xbd8] sm:$0xff]
    %v504 = vld [vmem:[#allocation2 + $0xbe0] sm:$0xff]
    %v505 = vld [vmem:[#allocation2 + $0xbe8] sm:$0xff]
    %v506 = vld [vmem:[#allocation2 + $0xbf0] sm:$0xff]
    %v507 = vld [vmem:[#allocation2 + $0xbf8] sm:$0xff]
    %v508 = vld [vmem:[#allocation2 + $0xc00] sm:$0xff]
    %v509 = vld [vmem:[#allocation2 + $0xc08] sm:$0xff]
    %v510 = vld [vmem:[#allocation2 + $0xc10] sm:$0xff]
    %v511 = vld [vmem:[#allocation2 + $0xc18] sm:$0xff]
    %v512 = vld [vmem:[#allocation2 + $0xc20] sm:$0xff]
    %v513 = vld [vmem:[#allocation2 + $0xc28] sm:$0xff]
    %v514 = vld [vmem:[#allocation2 + $0xc30] sm:$0xff]
    %v515 = vld [vmem:[#allocation2 + $0xc38] sm:$0xff]
    %v516 = vld [vmem:[#allocation4] sm:$0xff]
    %v518 = vlaneseq
    %v519 = vshrl.u32 %v518, 7
    %v520 = vsub.s32 0, %v519
    %v521 = vrot.slane %v516, %v520
    %v522 = vlaneseq
    %v523 = vshrl.u32 %v522, 7
    %v524 = vsub.s32 1, %v523
    %v525 = vrot.slane %v516, %v524
    %v526 = vlaneseq
    %v527 = vshrl.u32 %v526, 7
    %v528 = vsub.s32 2, %v527
    %v529 = vrot.slane %v516, %v528
    %v530 = vlaneseq
    %v531 = vshrl.u32 %v530, 7
    %v532 = vsub.s32 3, %v531
    %v533 = vrot.slane %v516, %v532
    %v534 = vlaneseq
    %v535 = vshrl.u32 %v534, 7
    %v536 = vsub.s32 4, %v535
    %v537 = vrot.slane %v516, %v536
    %v538 = vlaneseq
    %v539 = vshrl.u32 %v538, 7
    %v540 = vsub.s32 5, %v539
    %v541 = vrot.slane %v516, %v540
    %v542 = vlaneseq
    %v543 = vshrl.u32 %v542, 7
    %v544 = vsub.s32 6, %v543
    %v545 = vrot.slane %v516, %v544
    %v546 = vlaneseq
    %v547 = vshrl.u32 %v546, 7
    %v548 = vsub.s32 7, %v547
    %v549 = vrot.slane %v516, %v548
    %v950 = vunpack.c.l.b16 %v124
    %v951 = vunpack.c.h.b16 %v124
    %v952 = vunpack.c.l.b16 %v125
    %v953 = vunpack.c.h.b16 %v125
    %v954 = vunpack.c.l.b16 %v126
    %v955 = vunpack.c.h.b16 %v126
    %v956 = vunpack.c.l.b16 %v127
    %v957 = vunpack.c.h.b16 %v127
    %v958 = vunpack.c.l.b16 %v128
    %v959 = vunpack.c.h.b16 %v128
    %v960 = vunpack.c.l.b16 %v129
    %v961 = vunpack.c.h.b16 %v129
    %v962 = vunpack.c.l.b16 %v130
    %v963 = vunpack.c.h.b16 %v130
    %v964 = vunpack.c.l.b16 %v131
    %v965 = vunpack.c.h.b16 %v131
    %v966 = vunpack.c.l.b16 %v132
    %v967 = vunpack.c.h.b16 %v132
    %v968 = vunpack.c.l.b16 %v133
    %v969 = vunpack.c.h.b16 %v133
    %v970 = vunpack.c.l.b16 %v134
    %v971 = vunpack.c.h.b16 %v134
    %v972 = vunpack.c.l.b16 %v135
    %v973 = vunpack.c.h.b16 %v135
    %v974 = vunpack.c.l.b16 %v136
    %v975 = vunpack.c.h.b16 %v136
    %v976 = vunpack.c.l.b16 %v137
    %v977 = vunpack.c.h.b16 %v137
    %v978 = vunpack.c.l.b16 %v138
    %v979 = vunpack.c.h.b16 %v138
    %v980 = vunpack.c.l.b16 %v139
    %v981 = vunpack.c.h.b16 %v139
    %v982 = vunpack.c.l.b16 %v140
    %v983 = vunpack.c.h.b16 %v140
    %v984 = vunpack.c.l.b16 %v141
    %v985 = vunpack.c.h.b16 %v141
    %v986 = vunpack.c.l.b16 %v142
    %v987 = vunpack.c.h.b16 %v142
    %v988 = vunpack.c.l.b16 %v143
    %v989 = vunpack.c.h.b16 %v143
    %v990 = vunpack.c.l.b16 %v144
    %v991 = vunpack.c.h.b16 %v144
    %v992 = vunpack.c.l.b16 %v145
    %v993 = vunpack.c.h.b16 %v145
    %v994 = vunpack.c.l.b16 %v146
    %v995 = vunpack.c.h.b16 %v146
    %v996 = vunpack.c.l.b16 %v147
    %v997 = vunpack.c.h.b16 %v147
    %v998 = vunpack.c.l.b16 %v148
    %v999 = vunpack.c.h.b16 %v148
    %v1000 = vunpack.c.l.b16 %v149
    %v1001 = vunpack.c.h.b16 %v149
    %v1002 = vunpack.c.l.b16 %v150
    %v1003 = vunpack.c.h.b16 %v150
    %v1004 = vunpack.c.l.b16 %v151
    %v1005 = vunpack.c.h.b16 %v151
    %v1006 = vunpack.c.l.b16 %v152
    %v1007 = vunpack.c.h.b16 %v152
    %v1008 = vunpack.c.l.b16 %v153
    %v1009 = vunpack.c.h.b16 %v153
    %v1010 = vunpack.c.l.b16 %v154
    %v1011 = vunpack.c.h.b16 %v154
    %v1012 = vunpack.c.l.b16 %v155
    %v1013 = vunpack.c.h.b16 %v155
    %v1014 = vunpack.c.l.b16 %v156
    %v1015 = vunpack.c.h.b16 %v156
    %v1016 = vunpack.c.l.b16 %v157
    %v1017 = vunpack.c.h.b16 %v157
    %v1018 = vunpack.c.l.b16 %v158
    %v1019 = vunpack.c.h.b16 %v158
    %v1020 = vunpack.c.l.b16 %v159
    %v1021 = vunpack.c.h.b16 %v159
    %v1022 = vunpack.c.l.b16 %v160
    %v1023 = vunpack.c.h.b16 %v160
    %v1024 = vunpack.c.l.b16 %v161
    %v1025 = vunpack.c.h.b16 %v161
    %v1026 = vunpack.c.l.b16 %v162
    %v1027 = vunpack.c.h.b16 %v162
    %v1028 = vunpack.c.l.b16 %v163
    %v1029 = vunpack.c.h.b16 %v163
    %v1030 = vunpack.c.l.b16 %v164
    %v1031 = vunpack.c.h.b16 %v164
    %v1032 = vunpack.c.l.b16 %v165
    %v1033 = vunpack.c.h.b16 %v165
    %v1034 = vunpack.c.l.b16 %v166
    %v1035 = vunpack.c.h.b16 %v166
    %v1036 = vunpack.c.l.b16 %v167
    %v1037 = vunpack.c.h.b16 %v167
    %v1038 = vunpack.c.l.b16 %v168
    %v1039 = vunpack.c.h.b16 %v168
    %v1040 = vunpack.c.l.b16 %v169
    %v1041 = vunpack.c.h.b16 %v169
    %v1042 = vunpack.c.l.b16 %v170
    %v1043 = vunpack.c.h.b16 %v170
    %v1044 = vunpack.c.l.b16 %v171
    %v1045 = vunpack.c.h.b16 %v171
    %v1046 = vunpack.c.l.b16 %v172
    %v1047 = vunpack.c.h.b16 %v172
    %v1048 = vunpack.c.l.b16 %v173
    %v1049 = vunpack.c.h.b16 %v173
    %v1050 = vunpack.c.l.b16 %v174
    %v1051 = vunpack.c.h.b16 %v174
    %v1052 = vunpack.c.l.b16 %v175
    %v1053 = vunpack.c.h.b16 %v175
    %v1054 = vunpack.c.l.b16 %v176
    %v1055 = vunpack.c.h.b16 %v176
    %v1056 = vunpack.c.l.b16 %v177
    %v1057 = vunpack.c.h.b16 %v177
    %v1058 = vunpack.c.l.b16 %v178
    %v1059 = vunpack.c.h.b16 %v178
    %v1060 = vunpack.c.l.b16 %v179
    %v1061 = vunpack.c.h.b16 %v179
    %v1062 = vunpack.c.l.b16 %v180
    %v1063 = vunpack.c.h.b16 %v180
    %v1064 = vunpack.c.l.b16 %v181
    %v1065 = vunpack.c.h.b16 %v181
    %v1066 = vunpack.c.l.b16 %v182
    %v1067 = vunpack.c.h.b16 %v182
    %v1068 = vunpack.c.l.b16 %v183
    %v1069 = vunpack.c.h.b16 %v183
    %v1070 = vunpack.c.l.b16 %v184
    %v1071 = vunpack.c.h.b16 %v184
    %v1072 = vunpack.c.l.b16 %v185
    %v1073 = vunpack.c.h.b16 %v185
    %v1074 = vunpack.c.l.b16 %v186
    %v1075 = vunpack.c.h.b16 %v186
    %v1076 = vunpack.c.l.b16 %v187
    %v1077 = vunpack.c.h.b16 %v187
    %v1078 = vunpack.c.l.b16 %v188
    %v1079 = vunpack.c.h.b16 %v188
    %v1080 = vunpack.c.l.b16 %v189
    %v1081 = vunpack.c.h.b16 %v189
    %v1082 = vunpack.c.l.b16 %v190
    %v1083 = vunpack.c.h.b16 %v190
    %v1084 = vunpack.c.l.b16 %v191
    %v1085 = vunpack.c.h.b16 %v191
    %v1086 = vunpack.c.l.b16 %v192
    %v1087 = vunpack.c.h.b16 %v192
    %v1088 = vunpack.c.l.b16 %v193
    %v1089 = vunpack.c.h.b16 %v193
    %v1090 = vunpack.c.l.b16 %v194
    %v1091 = vunpack.c.h.b16 %v194
    %v1092 = vunpack.c.l.b16 %v195
    %v1093 = vunpack.c.h.b16 %v195
    %v1094 = vunpack.c.l.b16 %v196
    %v1095 = vunpack.c.h.b16 %v196
    %v1096 = vunpack.c.l.b16 %v197
    %v1097 = vunpack.c.h.b16 %v197
    %v1098 = vunpack.c.l.b16 %v198
    %v1099 = vunpack.c.h.b16 %v198
    %v1100 = vunpack.c.l.b16 %v199
    %v1101 = vunpack.c.h.b16 %v199
    %v1102 = vunpack.c.l.b16 %v200
    %v1103 = vunpack.c.h.b16 %v200
    %v1104 = vunpack.c.l.b16 %v201
    %v1105 = vunpack.c.h.b16 %v201
    %v1106 = vunpack.c.l.b16 %v202
    %v1107 = vunpack.c.h.b16 %v202
    %v1108 = vunpack.c.l.b16 %v203
    %v1109 = vunpack.c.h.b16 %v203
    %v1110 = vunpack.c.l.b16 %v204
    %v1111 = vunpack.c.h.b16 %v204
    %v1112 = vunpack.c.l.b16 %v205
    %v1113 = vunpack.c.h.b16 %v205
    %v1114 = vunpack.c.l.b16 %v206
    %v1115 = vunpack.c.h.b16 %v206
    %v1116 = vunpack.c.l.b16 %v207
    %v1117 = vunpack.c.h.b16 %v207
    %v1118 = vunpack.c.l.b16 %v208
    %v1119 = vunpack.c.h.b16 %v208
    %v1120 = vunpack.c.l.b16 %v209
    %v1121 = vunpack.c.h.b16 %v209
    %v1122 = vunpack.c.l.b16 %v210
    %v1123 = vunpack.c.h.b16 %v210
    %v1124 = vunpack.c.l.b16 %v211
    %v1125 = vunpack.c.h.b16 %v211
    %v1126 = vunpack.c.l.b16 %v212
    %v1127 = vunpack.c.h.b16 %v212
    %v1128 = vunpack.c.l.b16 %v213
    %v1129 = vunpack.c.h.b16 %v213
    %v1130 = vunpack.c.l.b16 %v214
    %v1131 = vunpack.c.h.b16 %v214
    %v1132 = vunpack.c.l.b16 %v215
    %v1133 = vunpack.c.h.b16 %v215
    %v1134 = vunpack.c.l.b16 %v216
    %v1135 = vunpack.c.h.b16 %v216
    %v1136 = vunpack.c.l.b16 %v217
    %v1137 = vunpack.c.h.b16 %v217
    %v1138 = vunpack.c.l.b16 %v218
    %v1139 = vunpack.c.h.b16 %v218
    %v1140 = vunpack.c.l.b16 %v219
    %v1141 = vunpack.c.h.b16 %v219
    %v1142 = vunpack.c.l.b16 %v220
    %v1143 = vunpack.c.h.b16 %v220
    %v1144 = vunpack.c.l.b16 %v221
    %v1145 = vunpack.c.h.b16 %v221
    %v1146 = vunpack.c.l.b16 %v222
    %v1147 = vunpack.c.h.b16 %v222
    %v1148 = vunpack.c.l.b16 %v223
    %v1149 = vunpack.c.h.b16 %v223
    %v1150 = vunpack.c.l.b16 %v224
    %v1151 = vunpack.c.h.b16 %v224
    %v1152 = vunpack.c.l.b16 %v225
    %v1153 = vunpack.c.h.b16 %v225
    %v1154 = vunpack.c.l.b16 %v226
    %v1155 = vunpack.c.h.b16 %v226
    %v1156 = vunpack.c.l.b16 %v227
    %v1157 = vunpack.c.h.b16 %v227
    %v1158 = vunpack.c.l.b16 %v228
    %v1159 = vunpack.c.h.b16 %v228
    %v1160 = vunpack.c.l.b16 %v229
    %v1161 = vunpack.c.h.b16 %v229
    %v1162 = vunpack.c.l.b16 %v230
    %v1163 = vunpack.c.h.b16 %v230
    %v1164 = vunpack.c.l.b16 %v231
    %v1165 = vunpack.c.h.b16 %v231
    %v1166 = vunpack.c.l.b16 %v232
    %v1167 = vunpack.c.h.b16 %v232
    %v1168 = vunpack.c.l.b16 %v233
    %v1169 = vunpack.c.h.b16 %v233
    %v1170 = vunpack.c.l.b16 %v234
    %v1171 = vunpack.c.h.b16 %v234
    %v1172 = vunpack.c.l.b16 %v235
    %v1173 = vunpack.c.h.b16 %v235
    %v1174 = vunpack.c.l.b16 %v236
    %v1175 = vunpack.c.h.b16 %v236
    %v1176 = vunpack.c.l.b16 %v237
    %v1177 = vunpack.c.h.b16 %v237
    %v1178 = vunpack.c.l.b16 %v238
    %v1179 = vunpack.c.h.b16 %v238
    %v1180 = vunpack.c.l.b16 %v239
    %v1181 = vunpack.c.h.b16 %v239
    %v1182 = vunpack.c.l.b16 %v240
    %v1183 = vunpack.c.h.b16 %v240
    %v1184 = vunpack.c.l.b16 %v241
    %v1185 = vunpack.c.h.b16 %v241
    %v1186 = vunpack.c.l.b16 %v242
    %v1187 = vunpack.c.h.b16 %v242
    %v1188 = vunpack.c.l.b16 %v243
    %v1189 = vunpack.c.h.b16 %v243
    %v1190 = vunpack.c.l.b16 %v244
    %v1191 = vunpack.c.h.b16 %v244
    %v1192 = vunpack.c.l.b16 %v245
    %v1193 = vunpack.c.h.b16 %v245
    %v1194 = vunpack.c.l.b16 %v246
    %v1195 = vunpack.c.h.b16 %v246
    %v1196 = vunpack.c.l.b16 %v247
    %v1197 = vunpack.c.h.b16 %v247
    %v1198 = vunpack.c.l.b16 %v248
    %v1199 = vunpack.c.h.b16 %v248
    %v1200 = vunpack.c.l.b16 %v249
    %v1201 = vunpack.c.h.b16 %v249
    %v1202 = vunpack.c.l.b16 %v250
    %v1203 = vunpack.c.h.b16 %v250
    %v1204 = vunpack.c.l.b16 %v251
    %v1205 = vunpack.c.h.b16 %v251
    %v1206 = vunpack.c.l.b16 %v252
    %v1207 = vunpack.c.h.b16 %v252
    %v1208 = vunpack.c.l.b16 %v253
    %v1209 = vunpack.c.h.b16 %v253
    %v1210 = vunpack.c.l.b16 %v254
    %v1211 = vunpack.c.h.b16 %v254
    %v1212 = vunpack.c.l.b16 %v255
    %v1213 = vunpack.c.h.b16 %v255
    %v1214 = vunpack.c.l.b16 %v256
    %v1215 = vunpack.c.h.b16 %v256
    %v1216 = vunpack.c.l.b16 %v257
    %v1217 = vunpack.c.h.b16 %v257
    %v1218 = vunpack.c.l.b16 %v258
    %v1219 = vunpack.c.h.b16 %v258
    %v1220 = vunpack.c.l.b16 %v259
    %v1221 = vunpack.c.h.b16 %v259
    %v1222 = vunpack.c.l.b16 %v260
    %v1223 = vunpack.c.h.b16 %v260
    %v1224 = vunpack.c.l.b16 %v261
    %v1225 = vunpack.c.h.b16 %v261
    %v1226 = vunpack.c.l.b16 %v262
    %v1227 = vunpack.c.h.b16 %v262
    %v1228 = vunpack.c.l.b16 %v263
    %v1229 = vunpack.c.h.b16 %v263
    %v1230 = vunpack.c.l.b16 %v264
    %v1231 = vunpack.c.h.b16 %v264
    %v1232 = vunpack.c.l.b16 %v265
    %v1233 = vunpack.c.h.b16 %v265
    %v1234 = vunpack.c.l.b16 %v266
    %v1235 = vunpack.c.h.b16 %v266
    %v1236 = vunpack.c.l.b16 %v267
    %v1237 = vunpack.c.h.b16 %v267
    %v1238 = vunpack.c.l.b16 %v268
    %v1239 = vunpack.c.h.b16 %v268
    %v1240 = vunpack.c.l.b16 %v269
    %v1241 = vunpack.c.h.b16 %v269
    %v1242 = vunpack.c.l.b16 %v270
    %v1243 = vunpack.c.h.b16 %v270
    %v1244 = vunpack.c.l.b16 %v271
    %v1245 = vunpack.c.h.b16 %v271
    %v1246 = vunpack.c.l.b16 %v272
    %v1247 = vunpack.c.h.b16 %v272
    %v1248 = vunpack.c.l.b16 %v273
    %v1249 = vunpack.c.h.b16 %v273
    %v1250 = vunpack.c.l.b16 %v274
    %v1251 = vunpack.c.h.b16 %v274
    %v1252 = vunpack.c.l.b16 %v275
    %v1253 = vunpack.c.h.b16 %v275
    %v1254 = vunpack.c.l.b16 %v276
    %v1255 = vunpack.c.h.b16 %v276
    %v1256 = vunpack.c.l.b16 %v277
    %v1257 = vunpack.c.h.b16 %v277
    %v1258 = vunpack.c.l.b16 %v278
    %v1259 = vunpack.c.h.b16 %v278
    %v1260 = vunpack.c.l.b16 %v279
    %v1261 = vunpack.c.h.b16 %v279
    %v1262 = vunpack.c.l.b16 %v280
    %v1263 = vunpack.c.h.b16 %v280
    %v1264 = vunpack.c.l.b16 %v281
    %v1265 = vunpack.c.h.b16 %v281
    %v1266 = vunpack.c.l.b16 %v282
    %v1267 = vunpack.c.h.b16 %v282
    %v1268 = vunpack.c.l.b16 %v283
    %v1269 = vunpack.c.h.b16 %v283
    %v1270 = vunpack.c.l.b16 %v284
    %v1271 = vunpack.c.h.b16 %v284
    %v1272 = vunpack.c.l.b16 %v285
    %v1273 = vunpack.c.h.b16 %v285
    %v1274 = vunpack.c.l.b16 %v286
    %v1275 = vunpack.c.h.b16 %v286
    %v1276 = vunpack.c.l.b16 %v287
    %v1277 = vunpack.c.h.b16 %v287
    %v1278 = vunpack.c.l.b16 %v288
    %v1279 = vunpack.c.h.b16 %v288
    %v1280 = vunpack.c.l.b16 %v289
    %v1281 = vunpack.c.h.b16 %v289
    %v1282 = vunpack.c.l.b16 %v290
    %v1283 = vunpack.c.h.b16 %v290
    %v1284 = vunpack.c.l.b16 %v291
    %v1285 = vunpack.c.h.b16 %v291
    %v1286 = vunpack.c.l.b16 %v292
    %v1287 = vunpack.c.h.b16 %v292
    %v1288 = vunpack.c.l.b16 %v293
    %v1289 = vunpack.c.h.b16 %v293
    %v1290 = vunpack.c.l.b16 %v294
    %v1291 = vunpack.c.h.b16 %v294
    %v1292 = vunpack.c.l.b16 %v295
    %v1293 = vunpack.c.h.b16 %v295
    %v1294 = vunpack.c.l.b16 %v296
    %v1295 = vunpack.c.h.b16 %v296
    %v1296 = vunpack.c.l.b16 %v297
    %v1297 = vunpack.c.h.b16 %v297
    %v1298 = vunpack.c.l.b16 %v298
    %v1299 = vunpack.c.h.b16 %v298
    %v1300 = vunpack.c.l.b16 %v299
    %v1301 = vunpack.c.h.b16 %v299
    %v1302 = vunpack.c.l.b16 %v300
    %v1303 = vunpack.c.h.b16 %v300
    %v1304 = vunpack.c.l.b16 %v301
    %v1305 = vunpack.c.h.b16 %v301
    %v1306 = vunpack.c.l.b16 %v302
    %v1307 = vunpack.c.h.b16 %v302
    %v1308 = vunpack.c.l.b16 %v303
    %v1309 = vunpack.c.h.b16 %v303
    %v1310 = vunpack.c.l.b16 %v304
    %v1311 = vunpack.c.h.b16 %v304
    %v1312 = vunpack.c.l.b16 %v305
    %v1313 = vunpack.c.h.b16 %v305
    %v1314 = vunpack.c.l.b16 %v306
    %v1315 = vunpack.c.h.b16 %v306
    %v1316 = vunpack.c.l.b16 %v307
    %v1317 = vunpack.c.h.b16 %v307
    %v1318 = vunpack.c.l.b16 %v308
    %v1319 = vunpack.c.h.b16 %v308
    %v1320 = vunpack.c.l.b16 %v309
    %v1321 = vunpack.c.h.b16 %v309
    %v1322 = vunpack.c.l.b16 %v310
    %v1323 = vunpack.c.h.b16 %v310
    %v1324 = vunpack.c.l.b16 %v311
    %v1325 = vunpack.c.h.b16 %v311
    %v1326 = vunpack.c.l.b16 %v312
    %v1327 = vunpack.c.h.b16 %v312
    %v1328 = vunpack.c.l.b16 %v313
    %v1329 = vunpack.c.h.b16 %v313
    %v1330 = vunpack.c.l.b16 %v314
    %v1331 = vunpack.c.h.b16 %v314
    %v1332 = vunpack.c.l.b16 %v315
    %v1333 = vunpack.c.h.b16 %v315
    %v1334 = vunpack.c.l.b16 %v316
    %v1335 = vunpack.c.h.b16 %v316
    %v1336 = vunpack.c.l.b16 %v317
    %v1337 = vunpack.c.h.b16 %v317
    %v1338 = vunpack.c.l.b16 %v318
    %v1339 = vunpack.c.h.b16 %v318
    %v1340 = vunpack.c.l.b16 %v319
    %v1341 = vunpack.c.h.b16 %v319
    %v1342 = vunpack.c.l.b16 %v320
    %v1343 = vunpack.c.h.b16 %v320
    %v1344 = vunpack.c.l.b16 %v321
    %v1345 = vunpack.c.h.b16 %v321
    %v1346 = vunpack.c.l.b16 %v322
    %v1347 = vunpack.c.h.b16 %v322
    %v1348 = vunpack.c.l.b16 %v323
    %v1349 = vunpack.c.h.b16 %v323
    %v1350 = vunpack.c.l.b16 %v324
    %v1351 = vunpack.c.h.b16 %v324
    %v1352 = vunpack.c.l.b16 %v325
    %v1353 = vunpack.c.h.b16 %v325
    %v1354 = vunpack.c.l.b16 %v326
    %v1355 = vunpack.c.h.b16 %v326
    %v1356 = vunpack.c.l.b16 %v327
    %v1357 = vunpack.c.h.b16 %v327
    %v1358 = vunpack.c.l.b16 %v328
    %v1359 = vunpack.c.h.b16 %v328
    %v1360 = vunpack.c.l.b16 %v329
    %v1361 = vunpack.c.h.b16 %v329
    %v1362 = vunpack.c.l.b16 %v330
    %v1363 = vunpack.c.h.b16 %v330
    %v1364 = vunpack.c.l.b16 %v331
    %v1365 = vunpack.c.h.b16 %v331
    %v1366 = vunpack.c.l.b16 %v332
    %v1367 = vunpack.c.h.b16 %v332
    %v1368 = vunpack.c.l.b16 %v333
    %v1369 = vunpack.c.h.b16 %v333
    %v1370 = vunpack.c.l.b16 %v334
    %v1371 = vunpack.c.h.b16 %v334
    %v1372 = vunpack.c.l.b16 %v335
    %v1373 = vunpack.c.h.b16 %v335
    %v1374 = vunpack.c.l.b16 %v336
    %v1375 = vunpack.c.h.b16 %v336
    %v1376 = vunpack.c.l.b16 %v337
    %v1377 = vunpack.c.h.b16 %v337
    %v1378 = vunpack.c.l.b16 %v338
    %v1379 = vunpack.c.h.b16 %v338
    %v1380 = vunpack.c.l.b16 %v339
    %v1381 = vunpack.c.h.b16 %v339
    %v1382 = vunpack.c.l.b16 %v340
    %v1383 = vunpack.c.h.b16 %v340
    %v1384 = vunpack.c.l.b16 %v341
    %v1385 = vunpack.c.h.b16 %v341
    %v1386 = vunpack.c.l.b16 %v342
    %v1387 = vunpack.c.h.b16 %v342
    %v1388 = vunpack.c.l.b16 %v343
    %v1389 = vunpack.c.h.b16 %v343
    %v1390 = vunpack.c.l.b16 %v344
    %v1391 = vunpack.c.h.b16 %v344
    %v1392 = vunpack.c.l.b16 %v345
    %v1393 = vunpack.c.h.b16 %v345
    %v1394 = vunpack.c.l.b16 %v346
    %v1395 = vunpack.c.h.b16 %v346
    %v1396 = vunpack.c.l.b16 %v347
    %v1397 = vunpack.c.h.b16 %v347
    %v1398 = vunpack.c.l.b16 %v348
    %v1399 = vunpack.c.h.b16 %v348
    %v1400 = vunpack.c.l.b16 %v349
    %v1401 = vunpack.c.h.b16 %v349
    %v1402 = vunpack.c.l.b16 %v350
    %v1403 = vunpack.c.h.b16 %v350
    %v1404 = vunpack.c.l.b16 %v351
    %v1405 = vunpack.c.h.b16 %v351
    %v1406 = vunpack.c.l.b16 %v352
    %v1407 = vunpack.c.h.b16 %v352
    %v1408 = vunpack.c.l.b16 %v353
    %v1409 = vunpack.c.h.b16 %v353
    %v1410 = vunpack.c.l.b16 %v354
    %v1411 = vunpack.c.h.b16 %v354
    %v1412 = vunpack.c.l.b16 %v355
    %v1413 = vunpack.c.h.b16 %v355
    %v1414 = vunpack.c.l.b16 %v356
    %v1415 = vunpack.c.h.b16 %v356
    %v1416 = vunpack.c.l.b16 %v357
    %v1417 = vunpack.c.h.b16 %v357
    %v1418 = vunpack.c.l.b16 %v358
    %v1419 = vunpack.c.h.b16 %v358
    %v1420 = vunpack.c.l.b16 %v359
    %v1421 = vunpack.c.h.b16 %v359
    %v1422 = vunpack.c.l.b16 %v360
    %v1423 = vunpack.c.h.b16 %v360
    %v1424 = vunpack.c.l.b16 %v361
    %v1425 = vunpack.c.h.b16 %v361
    %v1426 = vunpack.c.l.b16 %v362
    %v1427 = vunpack.c.h.b16 %v362
    %v1428 = vunpack.c.l.b16 %v363
    %v1429 = vunpack.c.h.b16 %v363
    %v1430 = vunpack.c.l.b16 %v364
    %v1431 = vunpack.c.h.b16 %v364
    %v1432 = vunpack.c.l.b16 %v365
    %v1433 = vunpack.c.h.b16 %v365
    %v1434 = vunpack.c.l.b16 %v366
    %v1435 = vunpack.c.h.b16 %v366
    %v1436 = vunpack.c.l.b16 %v367
    %v1437 = vunpack.c.h.b16 %v367
    %v1438 = vunpack.c.l.b16 %v368
    %v1439 = vunpack.c.h.b16 %v368
    %v1440 = vunpack.c.l.b16 %v369
    %v1441 = vunpack.c.h.b16 %v369
    %v1442 = vunpack.c.l.b16 %v370
    %v1443 = vunpack.c.h.b16 %v370
    %v1444 = vunpack.c.l.b16 %v371
    %v1445 = vunpack.c.h.b16 %v371
    %v1446 = vunpack.c.l.b16 %v372
    %v1447 = vunpack.c.h.b16 %v372
    %v1448 = vunpack.c.l.b16 %v373
    %v1449 = vunpack.c.h.b16 %v373
    %v1450 = vunpack.c.l.b16 %v374
    %v1451 = vunpack.c.h.b16 %v374
    %v1452 = vunpack.c.l.b16 %v375
    %v1453 = vunpack.c.h.b16 %v375
    %v1454 = vunpack.c.l.b16 %v376
    %v1455 = vunpack.c.h.b16 %v376
    %v1456 = vunpack.c.l.b16 %v377
    %v1457 = vunpack.c.h.b16 %v377
    %v1458 = vunpack.c.l.b16 %v378
    %v1459 = vunpack.c.h.b16 %v378
    %v1460 = vunpack.c.l.b16 %v379
    %v1461 = vunpack.c.h.b16 %v379
    %v1462 = vunpack.c.l.b16 %v380
    %v1463 = vunpack.c.h.b16 %v380
    %v1464 = vunpack.c.l.b16 %v381
    %v1465 = vunpack.c.h.b16 %v381
    %v1466 = vunpack.c.l.b16 %v382
    %v1467 = vunpack.c.h.b16 %v382
    %v1468 = vunpack.c.l.b16 %v383
    %v1469 = vunpack.c.h.b16 %v383
    %v1470 = vunpack.c.l.b16 %v384
    %v1471 = vunpack.c.h.b16 %v384
    %v1472 = vunpack.c.l.b16 %v385
    %v1473 = vunpack.c.h.b16 %v385
    %v1474 = vunpack.c.l.b16 %v386
    %v1475 = vunpack.c.h.b16 %v386
    %v1476 = vunpack.c.l.b16 %v387
    %v1477 = vunpack.c.h.b16 %v387
    %v1478 = vunpack.c.l.b16 %v388
    %v1479 = vunpack.c.h.b16 %v388
    %v1480 = vunpack.c.l.b16 %v389
    %v1481 = vunpack.c.h.b16 %v389
    %v1482 = vunpack.c.l.b16 %v390
    %v1483 = vunpack.c.h.b16 %v390
    %v1484 = vunpack.c.l.b16 %v391
    %v1485 = vunpack.c.h.b16 %v391
    %v1486 = vunpack.c.l.b16 %v392
    %v1487 = vunpack.c.h.b16 %v392
    %v1488 = vunpack.c.l.b16 %v393
    %v1489 = vunpack.c.h.b16 %v393
    %v1490 = vunpack.c.l.b16 %v394
    %v1491 = vunpack.c.h.b16 %v394
    %v1492 = vunpack.c.l.b16 %v395
    %v1493 = vunpack.c.h.b16 %v395
    %v1494 = vunpack.c.l.b16 %v396
    %v1495 = vunpack.c.h.b16 %v396
    %v1496 = vunpack.c.l.b16 %v397
    %v1497 = vunpack.c.h.b16 %v397
    %v1498 = vunpack.c.l.b16 %v398
    %v1499 = vunpack.c.h.b16 %v398
    %v1500 = vunpack.c.l.b16 %v399
    %v1501 = vunpack.c.h.b16 %v399
    %v1502 = vunpack.c.l.b16 %v400
    %v1503 = vunpack.c.h.b16 %v400
    %v1504 = vunpack.c.l.b16 %v401
    %v1505 = vunpack.c.h.b16 %v401
    %v1506 = vunpack.c.l.b16 %v402
    %v1507 = vunpack.c.h.b16 %v402
    %v1508 = vunpack.c.l.b16 %v403
    %v1509 = vunpack.c.h.b16 %v403
    %v1510 = vunpack.c.l.b16 %v404
    %v1511 = vunpack.c.h.b16 %v404
    %v1512 = vunpack.c.l.b16 %v405
    %v1513 = vunpack.c.h.b16 %v405
    %v1514 = vunpack.c.l.b16 %v406
    %v1515 = vunpack.c.h.b16 %v406
    %v1516 = vunpack.c.l.b16 %v407
    %v1517 = vunpack.c.h.b16 %v407
    %v1518 = vunpack.c.l.b16 %v408
    %v1519 = vunpack.c.h.b16 %v408
    %v1520 = vunpack.c.l.b16 %v409
    %v1521 = vunpack.c.h.b16 %v409
    %v1522 = vunpack.c.l.b16 %v410
    %v1523 = vunpack.c.h.b16 %v410
    %v1524 = vunpack.c.l.b16 %v411
    %v1525 = vunpack.c.h.b16 %v411
    %v1526 = vunpack.c.l.b16 %v412
    %v1527 = vunpack.c.h.b16 %v412
    %v1528 = vunpack.c.l.b16 %v413
    %v1529 = vunpack.c.h.b16 %v413
    %v1530 = vunpack.c.l.b16 %v414
    %v1531 = vunpack.c.h.b16 %v414
    %v1532 = vunpack.c.l.b16 %v415
    %v1533 = vunpack.c.h.b16 %v415
    %v1534 = vunpack.c.l.b16 %v416
    %v1535 = vunpack.c.h.b16 %v416
    %v1536 = vunpack.c.l.b16 %v417
    %v1537 = vunpack.c.h.b16 %v417
    %v1538 = vunpack.c.l.b16 %v418
    %v1539 = vunpack.c.h.b16 %v418
    %v1540 = vunpack.c.l.b16 %v419
    %v1541 = vunpack.c.h.b16 %v419
    %v1542 = vunpack.c.l.b16 %v420
    %v1543 = vunpack.c.h.b16 %v420
    %v1544 = vunpack.c.l.b16 %v421
    %v1545 = vunpack.c.h.b16 %v421
    %v1546 = vunpack.c.l.b16 %v422
    %v1547 = vunpack.c.h.b16 %v422
    %v1548 = vunpack.c.l.b16 %v423
    %v1549 = vunpack.c.h.b16 %v423
    %v1550 = vunpack.c.l.b16 %v424
    %v1551 = vunpack.c.h.b16 %v424
    %v1552 = vunpack.c.l.b16 %v425
    %v1553 = vunpack.c.h.b16 %v425
    %v1554 = vunpack.c.l.b16 %v426
    %v1555 = vunpack.c.h.b16 %v426
    %v1556 = vunpack.c.l.b16 %v427
    %v1557 = vunpack.c.h.b16 %v427
    %v1558 = vunpack.c.l.b16 %v428
    %v1559 = vunpack.c.h.b16 %v428
    %v1560 = vunpack.c.l.b16 %v429
    %v1561 = vunpack.c.h.b16 %v429
    %v1562 = vunpack.c.l.b16 %v430
    %v1563 = vunpack.c.h.b16 %v430
    %v1564 = vunpack.c.l.b16 %v431
    %v1565 = vunpack.c.h.b16 %v431
    %v1566 = vunpack.c.l.b16 %v432
    %v1567 = vunpack.c.h.b16 %v432
    %v1568 = vunpack.c.l.b16 %v433
    %v1569 = vunpack.c.h.b16 %v433
    %v1570 = vunpack.c.l.b16 %v434
    %v1571 = vunpack.c.h.b16 %v434
    %v1572 = vunpack.c.l.b16 %v435
    %v1573 = vunpack.c.h.b16 %v435
    %v1574 = vunpack.c.l.b16 %v436
    %v1575 = vunpack.c.h.b16 %v436
    %v1576 = vunpack.c.l.b16 %v437
    %v1577 = vunpack.c.h.b16 %v437
    %v1578 = vunpack.c.l.b16 %v438
    %v1579 = vunpack.c.h.b16 %v438
    %v1580 = vunpack.c.l.b16 %v439
    %v1581 = vunpack.c.h.b16 %v439
    %v1582 = vunpack.c.l.b16 %v440
    %v1583 = vunpack.c.h.b16 %v440
    %v1584 = vunpack.c.l.b16 %v441
    %v1585 = vunpack.c.h.b16 %v441
    %v1586 = vunpack.c.l.b16 %v442
    %v1587 = vunpack.c.h.b16 %v442
    %v1588 = vunpack.c.l.b16 %v443
    %v1589 = vunpack.c.h.b16 %v443
    %v1590 = vunpack.c.l.b16 %v444
    %v1591 = vunpack.c.h.b16 %v444
    %v1592 = vunpack.c.l.b16 %v445
    %v1593 = vunpack.c.h.b16 %v445
    %v1594 = vunpack.c.l.b16 %v446
    %v1595 = vunpack.c.h.b16 %v446
    %v1596 = vunpack.c.l.b16 %v447
    %v1597 = vunpack.c.h.b16 %v447
    %v1598 = vunpack.c.l.b16 %v448
    %v1599 = vunpack.c.h.b16 %v448
    %v1600 = vunpack.c.l.b16 %v449
    %v1601 = vunpack.c.h.b16 %v449
    %v1602 = vunpack.c.l.b16 %v450
    %v1603 = vunpack.c.h.b16 %v450
    %v1604 = vunpack.c.l.b16 %v451
    %v1605 = vunpack.c.h.b16 %v451
    %v1606 = vunpack.c.l.b16 %v452
    %v1607 = vunpack.c.h.b16 %v452
    %v1608 = vunpack.c.l.b16 %v453
    %v1609 = vunpack.c.h.b16 %v453
    %v1610 = vunpack.c.l.b16 %v454
    %v1611 = vunpack.c.h.b16 %v454
    %v1612 = vunpack.c.l.b16 %v455
    %v1613 = vunpack.c.h.b16 %v455
    %v1614 = vunpack.c.l.b16 %v456
    %v1615 = vunpack.c.h.b16 %v456
    %v1616 = vunpack.c.l.b16 %v457
    %v1617 = vunpack.c.h.b16 %v457
    %v1618 = vunpack.c.l.b16 %v458
    %v1619 = vunpack.c.h.b16 %v458
    %v1620 = vunpack.c.l.b16 %v459
    %v1621 = vunpack.c.h.b16 %v459
    %v1622 = vunpack.c.l.b16 %v460
    %v1623 = vunpack.c.h.b16 %v460
    %v1624 = vunpack.c.l.b16 %v461
    %v1625 = vunpack.c.h.b16 %v461
    %v1626 = vunpack.c.l.b16 %v462
    %v1627 = vunpack.c.h.b16 %v462
    %v1628 = vunpack.c.l.b16 %v463
    %v1629 = vunpack.c.h.b16 %v463
    %v1630 = vunpack.c.l.b16 %v464
    %v1631 = vunpack.c.h.b16 %v464
    %v1632 = vunpack.c.l.b16 %v465
    %v1633 = vunpack.c.h.b16 %v465
    %v1634 = vunpack.c.l.b16 %v466
    %v1635 = vunpack.c.h.b16 %v466
    %v1636 = vunpack.c.l.b16 %v467
    %v1637 = vunpack.c.h.b16 %v467
    %v1638 = vunpack.c.l.b16 %v468
    %v1639 = vunpack.c.h.b16 %v468
    %v1640 = vunpack.c.l.b16 %v469
    %v1641 = vunpack.c.h.b16 %v469
    %v1642 = vunpack.c.l.b16 %v470
    %v1643 = vunpack.c.h.b16 %v470
    %v1644 = vunpack.c.l.b16 %v471
    %v1645 = vunpack.c.h.b16 %v471
    %v1646 = vunpack.c.l.b16 %v472
    %v1647 = vunpack.c.h.b16 %v472
    %v1648 = vunpack.c.l.b16 %v473
    %v1649 = vunpack.c.h.b16 %v473
    %v1650 = vunpack.c.l.b16 %v474
    %v1651 = vunpack.c.h.b16 %v474
    %v1652 = vunpack.c.l.b16 %v475
    %v1653 = vunpack.c.h.b16 %v475
    %v1654 = vunpack.c.l.b16 %v476
    %v1655 = vunpack.c.h.b16 %v476
    %v1656 = vunpack.c.l.b16 %v477
    %v1657 = vunpack.c.h.b16 %v477
    %v1658 = vunpack.c.l.b16 %v478
    %v1659 = vunpack.c.h.b16 %v478
    %v1660 = vunpack.c.l.b16 %v479
    %v1661 = vunpack.c.h.b16 %v479
    %v1662 = vunpack.c.l.b16 %v480
    %v1663 = vunpack.c.h.b16 %v480
    %v1664 = vunpack.c.l.b16 %v481
    %v1665 = vunpack.c.h.b16 %v481
    %v1666 = vunpack.c.l.b16 %v482
    %v1667 = vunpack.c.h.b16 %v482
    %v1668 = vunpack.c.l.b16 %v483
    %v1669 = vunpack.c.h.b16 %v483
    %v1670 = vunpack.c.l.b16 %v484
    %v1671 = vunpack.c.h.b16 %v484
    %v1672 = vunpack.c.l.b16 %v485
    %v1673 = vunpack.c.h.b16 %v485
    %v1674 = vunpack.c.l.b16 %v486
    %v1675 = vunpack.c.h.b16 %v486
    %v1676 = vunpack.c.l.b16 %v487
    %v1677 = vunpack.c.h.b16 %v487
    %v1678 = vunpack.c.l.b16 %v488
    %v1679 = vunpack.c.h.b16 %v488
    %v1680 = vunpack.c.l.b16 %v489
    %v1681 = vunpack.c.h.b16 %v489
    %v1682 = vunpack.c.l.b16 %v490
    %v1683 = vunpack.c.h.b16 %v490
    %v1684 = vunpack.c.l.b16 %v491
    %v1685 = vunpack.c.h.b16 %v491
    %v1686 = vunpack.c.l.b16 %v492
    %v1687 = vunpack.c.h.b16 %v492
    %v1688 = vunpack.c.l.b16 %v493
    %v1689 = vunpack.c.h.b16 %v493
    %v1690 = vunpack.c.l.b16 %v494
    %v1691 = vunpack.c.h.b16 %v494
    %v1692 = vunpack.c.l.b16 %v495
    %v1693 = vunpack.c.h.b16 %v495
    %v1694 = vunpack.c.l.b16 %v496
    %v1695 = vunpack.c.h.b16 %v496
    %v1696 = vunpack.c.l.b16 %v497
    %v1697 = vunpack.c.h.b16 %v497
    %v1698 = vunpack.c.l.b16 %v498
    %v1699 = vunpack.c.h.b16 %v498
    %v1700 = vunpack.c.l.b16 %v499
    %v1701 = vunpack.c.h.b16 %v499
    %v1702 = vunpack.c.l.b16 %v500
    %v1703 = vunpack.c.h.b16 %v500
    %v1704 = vunpack.c.l.b16 %v501
    %v1705 = vunpack.c.h.b16 %v501
    %v1706 = vunpack.c.l.b16 %v502
    %v1707 = vunpack.c.h.b16 %v502
    %v1708 = vunpack.c.l.b16 %v503
    %v1709 = vunpack.c.h.b16 %v503
    %v1710 = vunpack.c.l.b16 %v504
    %v1711 = vunpack.c.h.b16 %v504
    %v1712 = vunpack.c.l.b16 %v505
    %v1713 = vunpack.c.h.b16 %v505
    %v1714 = vunpack.c.l.b16 %v506
    %v1715 = vunpack.c.h.b16 %v506
    %v1716 = vunpack.c.l.b16 %v507
    %v1717 = vunpack.c.h.b16 %v507
    %v1718 = vunpack.c.l.b16 %v508
    %v1719 = vunpack.c.h.b16 %v508
    %v1720 = vunpack.c.l.b16 %v509
    %v1721 = vunpack.c.h.b16 %v509
    %v1722 = vunpack.c.l.b16 %v510
    %v1723 = vunpack.c.h.b16 %v510
    %v1724 = vunpack.c.l.b16 %v511
    %v1725 = vunpack.c.h.b16 %v511
    %v1726 = vunpack.c.l.b16 %v512
    %v1727 = vunpack.c.h.b16 %v512
    %v1728 = vunpack.c.l.b16 %v513
    %v1729 = vunpack.c.h.b16 %v513
    %v1730 = vunpack.c.l.b16 %v514
    %v1731 = vunpack.c.h.b16 %v514
    %v1732 = vunpack.c.l.b16 %v515
    %v1733 = vunpack.c.h.b16 %v515
    %v1734 = vpack.c.b16 %v958, %v950
    %v1735 = vpack.c.b16 %v959, %v951
    %v1736 = vpack.c.b16 %v960, %v952
    %v1737 = vpack.c.b16 %v961, %v953
    %v1738 = vpack.c.b16 %v962, %v954
    %v1739 = vpack.c.b16 %v963, %v955
    %v1740 = vpack.c.b16 %v964, %v956
    %v1741 = vpack.c.b16 %v965, %v957
    %v1742 = vpack.c.b16 %v974, %v966
    %v1743 = vpack.c.b16 %v975, %v967
    %v1744 = vpack.c.b16 %v976, %v968
    %v1745 = vpack.c.b16 %v977, %v969
    %v1746 = vpack.c.b16 %v978, %v970
    %v1747 = vpack.c.b16 %v979, %v971
    %v1748 = vpack.c.b16 %v980, %v972
    %v1749 = vpack.c.b16 %v981, %v973
    %v1750 = vpack.c.b16 %v990, %v982
    %v1751 = vpack.c.b16 %v991, %v983
    %v1752 = vpack.c.b16 %v992, %v984
    %v1753 = vpack.c.b16 %v993, %v985
    %v1754 = vpack.c.b16 %v994, %v986
    %v1755 = vpack.c.b16 %v995, %v987
    %v1756 = vpack.c.b16 %v996, %v988
    %v1757 = vpack.c.b16 %v997, %v989
    %v1758 = vpack.c.b16 %v1006, %v998
    %v1759 = vpack.c.b16 %v1007, %v999
    %v1760 = vpack.c.b16 %v1008, %v1000
    %v1761 = vpack.c.b16 %v1009, %v1001
    %v1762 = vpack.c.b16 %v1010, %v1002
    %v1763 = vpack.c.b16 %v1011, %v1003
    %v1764 = vpack.c.b16 %v1012, %v1004
    %v1765 = vpack.c.b16 %v1013, %v1005
    %v1766 = vpack.c.b16 %v1022, %v1014
    %v1767 = vpack.c.b16 %v1023, %v1015
    %v1768 = vpack.c.b16 %v1024, %v1016
    %v1769 = vpack.c.b16 %v1025, %v1017
    %v1770 = vpack.c.b16 %v1026, %v1018
    %v1771 = vpack.c.b16 %v1027, %v1019
    %v1772 = vpack.c.b16 %v1028, %v1020
    %v1773 = vpack.c.b16 %v1029, %v1021
    %v1774 = vpack.c.b16 %v1038, %v1030
    %v1775 = vpack.c.b16 %v1039, %v1031
    %v1776 = vpack.c.b16 %v1040, %v1032
    %v1777 = vpack.c.b16 %v1041, %v1033
    %v1778 = vpack.c.b16 %v1042, %v1034
    %v1779 = vpack.c.b16 %v1043, %v1035
    %v1780 = vpack.c.b16 %v1044, %v1036
    %v1781 = vpack.c.b16 %v1045, %v1037
    %v1782 = vpack.c.b16 %v1054, %v1046
    %v1783 = vpack.c.b16 %v1055, %v1047
    %v1784 = vpack.c.b16 %v1056, %v1048
    %v1785 = vpack.c.b16 %v1057, %v1049
    %v1786 = vpack.c.b16 %v1058, %v1050
    %v1787 = vpack.c.b16 %v1059, %v1051
    %v1788 = vpack.c.b16 %v1060, %v1052
    %v1789 = vpack.c.b16 %v1061, %v1053
    %v1790 = vpack.c.b16 %v1070, %v1062
    %v1791 = vpack.c.b16 %v1071, %v1063
    %v1792 = vpack.c.b16 %v1072, %v1064
    %v1793 = vpack.c.b16 %v1073, %v1065
    %v1794 = vpack.c.b16 %v1074, %v1066
    %v1795 = vpack.c.b16 %v1075, %v1067
    %v1796 = vpack.c.b16 %v1076, %v1068
    %v1797 = vpack.c.b16 %v1077, %v1069
    %v1798 = vpack.c.b16 %v1086, %v1078
    %v1799 = vpack.c.b16 %v1087, %v1079
    %v1800 = vpack.c.b16 %v1088, %v1080
    %v1801 = vpack.c.b16 %v1089, %v1081
    %v1802 = vpack.c.b16 %v1090, %v1082
    %v1803 = vpack.c.b16 %v1091, %v1083
    %v1804 = vpack.c.b16 %v1092, %v1084
    %v1805 = vpack.c.b16 %v1093, %v1085
    %v1806 = vpack.c.b16 %v1102, %v1094
    %v1807 = vpack.c.b16 %v1103, %v1095
    %v1808 = vpack.c.b16 %v1104, %v1096
    %v1809 = vpack.c.b16 %v1105, %v1097
    %v1810 = vpack.c.b16 %v1106, %v1098
    %v1811 = vpack.c.b16 %v1107, %v1099
    %v1812 = vpack.c.b16 %v1108, %v1100
    %v1813 = vpack.c.b16 %v1109, %v1101
    %v1814 = vpack.c.b16 %v1118, %v1110
    %v1815 = vpack.c.b16 %v1119, %v1111
    %v1816 = vpack.c.b16 %v1120, %v1112
    %v1817 = vpack.c.b16 %v1121, %v1113
    %v1818 = vpack.c.b16 %v1122, %v1114
    %v1819 = vpack.c.b16 %v1123, %v1115
    %v1820 = vpack.c.b16 %v1124, %v1116
    %v1821 = vpack.c.b16 %v1125, %v1117
    %v1822 = vpack.c.b16 %v1134, %v1126
    %v1823 = vpack.c.b16 %v1135, %v1127
    %v1824 = vpack.c.b16 %v1136, %v1128
    %v1825 = vpack.c.b16 %v1137, %v1129
    %v1826 = vpack.c.b16 %v1138, %v1130
    %v1827 = vpack.c.b16 %v1139, %v1131
    %v1828 = vpack.c.b16 %v1140, %v1132
    %v1829 = vpack.c.b16 %v1141, %v1133
    %v1830 = vpack.c.b16 %v1150, %v1142
    %v1831 = vpack.c.b16 %v1151, %v1143
    %v1832 = vpack.c.b16 %v1152, %v1144
    %v1833 = vpack.c.b16 %v1153, %v1145
    %v1834 = vpack.c.b16 %v1154, %v1146
    %v1835 = vpack.c.b16 %v1155, %v1147
    %v1836 = vpack.c.b16 %v1156, %v1148
    %v1837 = vpack.c.b16 %v1157, %v1149
    %v1838 = vpack.c.b16 %v1166, %v1158
    %v1839 = vpack.c.b16 %v1167, %v1159
    %v1840 = vpack.c.b16 %v1168, %v1160
    %v1841 = vpack.c.b16 %v1169, %v1161
    %v1842 = vpack.c.b16 %v1170, %v1162
    %v1843 = vpack.c.b16 %v1171, %v1163
    %v1844 = vpack.c.b16 %v1172, %v1164
    %v1845 = vpack.c.b16 %v1173, %v1165
    %v1846 = vpack.c.b16 %v1182, %v1174
    %v1847 = vpack.c.b16 %v1183, %v1175
    %v1848 = vpack.c.b16 %v1184, %v1176
    %v1849 = vpack.c.b16 %v1185, %v1177
    %v1850 = vpack.c.b16 %v1186, %v1178
    %v1851 = vpack.c.b16 %v1187, %v1179
    %v1852 = vpack.c.b16 %v1188, %v1180
    %v1853 = vpack.c.b16 %v1189, %v1181
    %v1854 = vpack.c.b16 %v1198, %v1190
    %v1855 = vpack.c.b16 %v1199, %v1191
    %v1856 = vpack.c.b16 %v1200, %v1192
    %v1857 = vpack.c.b16 %v1201, %v1193
    %v1858 = vpack.c.b16 %v1202, %v1194
    %v1859 = vpack.c.b16 %v1203, %v1195
    %v1860 = vpack.c.b16 %v1204, %v1196
    %v1861 = vpack.c.b16 %v1205, %v1197
    %v1862 = vpack.c.b16 %v1214, %v1206
    %v1863 = vpack.c.b16 %v1215, %v1207
    %v1864 = vpack.c.b16 %v1216, %v1208
    %v1865 = vpack.c.b16 %v1217, %v1209
    %v1866 = vpack.c.b16 %v1218, %v1210
    %v1867 = vpack.c.b16 %v1219, %v1211
    %v1868 = vpack.c.b16 %v1220, %v1212
    %v1869 = vpack.c.b16 %v1221, %v1213
    %v1870 = vpack.c.b16 %v1230, %v1222
    %v1871 = vpack.c.b16 %v1231, %v1223
    %v1872 = vpack.c.b16 %v1232, %v1224
    %v1873 = vpack.c.b16 %v1233, %v1225
    %v1874 = vpack.c.b16 %v1234, %v1226
    %v1875 = vpack.c.b16 %v1235, %v1227
    %v1876 = vpack.c.b16 %v1236, %v1228
    %v1877 = vpack.c.b16 %v1237, %v1229
    %v1878 = vpack.c.b16 %v1246, %v1238
    %v1879 = vpack.c.b16 %v1247, %v1239
    %v1880 = vpack.c.b16 %v1248, %v1240
    %v1881 = vpack.c.b16 %v1249, %v1241
    %v1882 = vpack.c.b16 %v1250, %v1242
    %v1883 = vpack.c.b16 %v1251, %v1243
    %v1884 = vpack.c.b16 %v1252, %v1244
    %v1885 = vpack.c.b16 %v1253, %v1245
    %v1886 = vpack.c.b16 %v1262, %v1254
    %v1887 = vpack.c.b16 %v1263, %v1255
    %v1888 = vpack.c.b16 %v1264, %v1256
    %v1889 = vpack.c.b16 %v1265, %v1257
    %v1890 = vpack.c.b16 %v1266, %v1258
    %v1891 = vpack.c.b16 %v1267, %v1259
    %v1892 = vpack.c.b16 %v1268, %v1260
    %v1893 = vpack.c.b16 %v1269, %v1261
    %v1894 = vpack.c.b16 %v1278, %v1270
    %v1895 = vpack.c.b16 %v1279, %v1271
    %v1896 = vpack.c.b16 %v1280, %v1272
    %v1897 = vpack.c.b16 %v1281, %v1273
    %v1898 = vpack.c.b16 %v1282, %v1274
    %v1899 = vpack.c.b16 %v1283, %v1275
    %v1900 = vpack.c.b16 %v1284, %v1276
    %v1901 = vpack.c.b16 %v1285, %v1277
    %v1902 = vpack.c.b16 %v1294, %v1286
    %v1903 = vpack.c.b16 %v1295, %v1287
    %v1904 = vpack.c.b16 %v1296, %v1288
    %v1905 = vpack.c.b16 %v1297, %v1289
    %v1906 = vpack.c.b16 %v1298, %v1290
    %v1907 = vpack.c.b16 %v1299, %v1291
    %v1908 = vpack.c.b16 %v1300, %v1292
    %v1909 = vpack.c.b16 %v1301, %v1293
    %v1910 = vpack.c.b16 %v1310, %v1302
    %v1911 = vpack.c.b16 %v1311, %v1303
    %v1912 = vpack.c.b16 %v1312, %v1304
    %v1913 = vpack.c.b16 %v1313, %v1305
    %v1914 = vpack.c.b16 %v1314, %v1306
    %v1915 = vpack.c.b16 %v1315, %v1307
    %v1916 = vpack.c.b16 %v1316, %v1308
    %v1917 = vpack.c.b16 %v1317, %v1309
    %v1918 = vpack.c.b16 %v1326, %v1318
    %v1919 = vpack.c.b16 %v1327, %v1319
    %v1920 = vpack.c.b16 %v1328, %v1320
    %v1921 = vpack.c.b16 %v1329, %v1321
    %v1922 = vpack.c.b16 %v1330, %v1322
    %v1923 = vpack.c.b16 %v1331, %v1323
    %v1924 = vpack.c.b16 %v1332, %v1324
    %v1925 = vpack.c.b16 %v1333, %v1325
    %v1926 = vpack.c.b16 %v1342, %v1334
    %v1927 = vpack.c.b16 %v1343, %v1335
    %v1928 = vpack.c.b16 %v1344, %v1336
    %v1929 = vpack.c.b16 %v1345, %v1337
    %v1930 = vpack.c.b16 %v1346, %v1338
    %v1931 = vpack.c.b16 %v1347, %v1339
    %v1932 = vpack.c.b16 %v1348, %v1340
    %v1933 = vpack.c.b16 %v1349, %v1341
    %v1934 = vpack.c.b16 %v1358, %v1350
    %v1935 = vpack.c.b16 %v1359, %v1351
    %v1936 = vpack.c.b16 %v1360, %v1352
    %v1937 = vpack.c.b16 %v1361, %v1353
    %v1938 = vpack.c.b16 %v1362, %v1354
    %v1939 = vpack.c.b16 %v1363, %v1355
    %v1940 = vpack.c.b16 %v1364, %v1356
    %v1941 = vpack.c.b16 %v1365, %v1357
    %v1942 = vpack.c.b16 %v1374, %v1366
    %v1943 = vpack.c.b16 %v1375, %v1367
    %v1944 = vpack.c.b16 %v1376, %v1368
    %v1945 = vpack.c.b16 %v1377, %v1369
    %v1946 = vpack.c.b16 %v1378, %v1370
    %v1947 = vpack.c.b16 %v1379, %v1371
    %v1948 = vpack.c.b16 %v1380, %v1372
    %v1949 = vpack.c.b16 %v1381, %v1373
    %v1950 = vpack.c.b16 %v1390, %v1382
    %v1951 = vpack.c.b16 %v1391, %v1383
    %v1952 = vpack.c.b16 %v1392, %v1384
    %v1953 = vpack.c.b16 %v1393, %v1385
    %v1954 = vpack.c.b16 %v1394, %v1386
    %v1955 = vpack.c.b16 %v1395, %v1387
    %v1956 = vpack.c.b16 %v1396, %v1388
    %v1957 = vpack.c.b16 %v1397, %v1389
    %v1958 = vpack.c.b16 %v1406, %v1398
    %v1959 = vpack.c.b16 %v1407, %v1399
    %v1960 = vpack.c.b16 %v1408, %v1400
    %v1961 = vpack.c.b16 %v1409, %v1401
    %v1962 = vpack.c.b16 %v1410, %v1402
    %v1963 = vpack.c.b16 %v1411, %v1403
    %v1964 = vpack.c.b16 %v1412, %v1404
    %v1965 = vpack.c.b16 %v1413, %v1405
    %v1966 = vpack.c.b16 %v1422, %v1414
    %v1967 = vpack.c.b16 %v1423, %v1415
    %v1968 = vpack.c.b16 %v1424, %v1416
    %v1969 = vpack.c.b16 %v1425, %v1417
    %v1970 = vpack.c.b16 %v1426, %v1418
    %v1971 = vpack.c.b16 %v1427, %v1419
    %v1972 = vpack.c.b16 %v1428, %v1420
    %v1973 = vpack.c.b16 %v1429, %v1421
    %v1974 = vpack.c.b16 %v1438, %v1430
    %v1975 = vpack.c.b16 %v1439, %v1431
    %v1976 = vpack.c.b16 %v1440, %v1432
    %v1977 = vpack.c.b16 %v1441, %v1433
    %v1978 = vpack.c.b16 %v1442, %v1434
    %v1979 = vpack.c.b16 %v1443, %v1435
    %v1980 = vpack.c.b16 %v1444, %v1436
    %v1981 = vpack.c.b16 %v1445, %v1437
    %v1982 = vpack.c.b16 %v1454, %v1446
    %v1983 = vpack.c.b16 %v1455, %v1447
    %v1984 = vpack.c.b16 %v1456, %v1448
    %v1985 = vpack.c.b16 %v1457, %v1449
    %v1986 = vpack.c.b16 %v1458, %v1450
    %v1987 = vpack.c.b16 %v1459, %v1451
    %v1988 = vpack.c.b16 %v1460, %v1452
    %v1989 = vpack.c.b16 %v1461, %v1453
    %v1990 = vpack.c.b16 %v1470, %v1462
    %v1991 = vpack.c.b16 %v1471, %v1463
    %v1992 = vpack.c.b16 %v1472, %v1464
    %v1993 = vpack.c.b16 %v1473, %v1465
    %v1994 = vpack.c.b16 %v1474, %v1466
    %v1995 = vpack.c.b16 %v1475, %v1467
    %v1996 = vpack.c.b16 %v1476, %v1468
    %v1997 = vpack.c.b16 %v1477, %v1469
    %v1998 = vpack.c.b16 %v1486, %v1478
    %v1999 = vpack.c.b16 %v1487, %v1479
    %v2000 = vpack.c.b16 %v1488, %v1480
    %v2001 = vpack.c.b16 %v1489, %v1481
    %v2002 = vpack.c.b16 %v1490, %v1482
    %v2003 = vpack.c.b16 %v1491, %v1483
    %v2004 = vpack.c.b16 %v1492, %v1484
    %v2005 = vpack.c.b16 %v1493, %v1485
    %v2006 = vpack.c.b16 %v1502, %v1494
    %v2007 = vpack.c.b16 %v1503, %v1495
    %v2008 = vpack.c.b16 %v1504, %v1496
    %v2009 = vpack.c.b16 %v1505, %v1497
    %v2010 = vpack.c.b16 %v1506, %v1498
    %v2011 = vpack.c.b16 %v1507, %v1499
    %v2012 = vpack.c.b16 %v1508, %v1500
    %v2013 = vpack.c.b16 %v1509, %v1501
    %v2014 = vpack.c.b16 %v1518, %v1510
    %v2015 = vpack.c.b16 %v1519, %v1511
    %v2016 = vpack.c.b16 %v1520, %v1512
    %v2017 = vpack.c.b16 %v1521, %v1513
    %v2018 = vpack.c.b16 %v1522, %v1514
    %v2019 = vpack.c.b16 %v1523, %v1515
    %v2020 = vpack.c.b16 %v1524, %v1516
    %v2021 = vpack.c.b16 %v1525, %v1517
    %v2022 = vpack.c.b16 %v1534, %v1526
    %v2023 = vpack.c.b16 %v1535, %v1527
    %v2024 = vpack.c.b16 %v1536, %v1528
    %v2025 = vpack.c.b16 %v1537, %v1529
    %v2026 = vpack.c.b16 %v1538, %v1530
    %v2027 = vpack.c.b16 %v1539, %v1531
    %v2028 = vpack.c.b16 %v1540, %v1532
    %v2029 = vpack.c.b16 %v1541, %v1533
    %v2030 = vpack.c.b16 %v1550, %v1542
    %v2031 = vpack.c.b16 %v1551, %v1543
    %v2032 = vpack.c.b16 %v1552, %v1544
    %v2033 = vpack.c.b16 %v1553, %v1545
    %v2034 = vpack.c.b16 %v1554, %v1546
    %v2035 = vpack.c.b16 %v1555, %v1547
    %v2036 = vpack.c.b16 %v1556, %v1548
    %v2037 = vpack.c.b16 %v1557, %v1549
    %v2038 = vpack.c.b16 %v1566, %v1558
    %v2039 = vpack.c.b16 %v1567, %v1559
    %v2040 = vpack.c.b16 %v1568, %v1560
    %v2041 = vpack.c.b16 %v1569, %v1561
    %v2042 = vpack.c.b16 %v1570, %v1562
    %v2043 = vpack.c.b16 %v1571, %v1563
    %v2044 = vpack.c.b16 %v1572, %v1564
    %v2045 = vpack.c.b16 %v1573, %v1565
    %v2046 = vpack.c.b16 %v1582, %v1574
    %v2047 = vpack.c.b16 %v1583, %v1575
    %v2048 = vpack.c.b16 %v1584, %v1576
    %v2049 = vpack.c.b16 %v1585, %v1577
    %v2050 = vpack.c.b16 %v1586, %v1578
    %v2051 = vpack.c.b16 %v1587, %v1579
    %v2052 = vpack.c.b16 %v1588, %v1580
    %v2053 = vpack.c.b16 %v1589, %v1581
    %v2054 = vpack.c.b16 %v1598, %v1590
    %v2055 = vpack.c.b16 %v1599, %v1591
    %v2056 = vpack.c.b16 %v1600, %v1592
    %v2057 = vpack.c.b16 %v1601, %v1593
    %v2058 = vpack.c.b16 %v1602, %v1594
    %v2059 = vpack.c.b16 %v1603, %v1595
    %v2060 = vpack.c.b16 %v1604, %v1596
    %v2061 = vpack.c.b16 %v1605, %v1597
    %v2062 = vpack.c.b16 %v1614, %v1606
    %v2063 = vpack.c.b16 %v1615, %v1607
    %v2064 = vpack.c.b16 %v1616, %v1608
    %v2065 = vpack.c.b16 %v1617, %v1609
    %v2066 = vpack.c.b16 %v1618, %v1610
    %v2067 = vpack.c.b16 %v1619, %v1611
    %v2068 = vpack.c.b16 %v1620, %v1612
    %v2069 = vpack.c.b16 %v1621, %v1613
    %v2070 = vpack.c.b16 %v1630, %v1622
    %v2071 = vpack.c.b16 %v1631, %v1623
    %v2072 = vpack.c.b16 %v1632, %v1624
    %v2073 = vpack.c.b16 %v1633, %v1625
    %v2074 = vpack.c.b16 %v1634, %v1626
    %v2075 = vpack.c.b16 %v1635, %v1627
    %v2076 = vpack.c.b16 %v1636, %v1628
    %v2077 = vpack.c.b16 %v1637, %v1629
    %v2078 = vpack.c.b16 %v1646, %v1638
    %v2079 = vpack.c.b16 %v1647, %v1639
    %v2080 = vpack.c.b16 %v1648, %v1640
    %v2081 = vpack.c.b16 %v1649, %v1641
    %v2082 = vpack.c.b16 %v1650, %v1642
    %v2083 = vpack.c.b16 %v1651, %v1643
    %v2084 = vpack.c.b16 %v1652, %v1644
    %v2085 = vpack.c.b16 %v1653, %v1645
    %v2086 = vpack.c.b16 %v1662, %v1654
    %v2087 = vpack.c.b16 %v1663, %v1655
    %v2088 = vpack.c.b16 %v1664, %v1656
    %v2089 = vpack.c.b16 %v1665, %v1657
    %v2090 = vpack.c.b16 %v1666, %v1658
    %v2091 = vpack.c.b16 %v1667, %v1659
    %v2092 = vpack.c.b16 %v1668, %v1660
    %v2093 = vpack.c.b16 %v1669, %v1661
    %v2094 = vpack.c.b16 %v1678, %v1670
    %v2095 = vpack.c.b16 %v1679, %v1671
    %v2096 = vpack.c.b16 %v1680, %v1672
    %v2097 = vpack.c.b16 %v1681, %v1673
    %v2098 = vpack.c.b16 %v1682, %v1674
    %v2099 = vpack.c.b16 %v1683, %v1675
    %v2100 = vpack.c.b16 %v1684, %v1676
    %v2101 = vpack.c.b16 %v1685, %v1677
    %v2102 = vpack.c.b16 %v1694, %v1686
    %v2103 = vpack.c.b16 %v1695, %v1687
    %v2104 = vpack.c.b16 %v1696, %v1688
    %v2105 = vpack.c.b16 %v1697, %v1689
    %v2106 = vpack.c.b16 %v1698, %v1690
    %v2107 = vpack.c.b16 %v1699, %v1691
    %v2108 = vpack.c.b16 %v1700, %v1692
    %v2109 = vpack.c.b16 %v1701, %v1693
    %v2110 = vpack.c.b16 %v1710, %v1702
    %v2111 = vpack.c.b16 %v1711, %v1703
    %v2112 = vpack.c.b16 %v1712, %v1704
    %v2113 = vpack.c.b16 %v1713, %v1705
    %v2114 = vpack.c.b16 %v1714, %v1706
    %v2115 = vpack.c.b16 %v1715, %v1707
    %v2116 = vpack.c.b16 %v1716, %v1708
    %v2117 = vpack.c.b16 %v1717, %v1709
    %v2118 = vpack.c.b16 %v1726, %v1718
    %v2119 = vpack.c.b16 %v1727, %v1719
    %v2120 = vpack.c.b16 %v1728, %v1720
    %v2121 = vpack.c.b16 %v1729, %v1721
    %v2122 = vpack.c.b16 %v1730, %v1722
    %v2123 = vpack.c.b16 %v1731, %v1723
    %v2124 = vpack.c.b16 %v1732, %v1724
    %v2125 = vpack.c.b16 %v1733, %v1725
    %vm2518 = vcmask 130048
    %v2520 = vsel %vm2518, %v123, 0
    %2522 = vmatprep.subr.bf16.mxu0 %v1735
    %2523 = vmatpush1.bf16.msra.mxu0 %v1734
    %2524 = vmatprep.subr.bf16.mxu0 %v1743
    %2525 = vmatpush1.bf16.msra.mxu0 %v1742
    %2526 = vmatprep.subr.bf16.mxu0 %v1751
    %2527 = vmatpush1.bf16.msra.mxu0 %v1750
    %2528 = vmatprep.subr.bf16.mxu0 %v1759
    %2529 = vmatpush1.bf16.msra.mxu0 %v1758
    %2530 = vmatprep.subr.bf16.mxu0 %v1767
    %2531 = vmatpush1.bf16.msra.mxu0 %v1766
    %2532 = vmatprep.subr.bf16.mxu0 %v1775
    %2533 = vmatpush1.bf16.msra.mxu0 %v1774
    %2534 = vmatprep.subr.bf16.mxu0 %v1783
    %2535 = vmatpush1.bf16.msra.mxu0 %v1782
    %2536 = vmatprep.subr.bf16.mxu0 %v1791
    %2537 = vmatpush1.bf16.msra.mxu0 %v1790
    %2538 = vmatprep.subr.bf16.mxu0 %v1799
    %2539 = vmatpush1.bf16.msra.mxu0 %v1798
    %2540 = vmatprep.subr.bf16.mxu0 %v1807
    %2541 = vmatpush1.bf16.msra.mxu0 %v1806
    %2542 = vmatprep.subr.bf16.mxu0 %v1815
    %2543 = vmatpush1.bf16.msra.mxu0 %v1814
    %2544 = vmatprep.subr.bf16.mxu0 %v1823
    %2545 = vmatpush1.bf16.msra.mxu0 %v1822
    %2546 = vmatprep.subr.bf16.mxu0 %v1831
    %2547 = vmatpush1.bf16.msra.mxu0 %v1830
    %2548 = vmatprep.subr.bf16.mxu0 %v1839
    %2549 = vmatpush1.bf16.msra.mxu0 %v1838
    %2550 = vmatprep.subr.bf16.mxu0 %v1847
    %2551 = vmatpush1.bf16.msra.mxu0 %v1846
    %2552 = vmatprep.subr.bf16.mxu0 %v1855
    %2553 = vmatpush1.bf16.msra.mxu0 %v1854
    %2554 = vmatprep.mubr.bf16.mxu0 %v118
    %2555 = vmatmul.mubr.bf16.gmra.mrb[0].mxu0 %v117
    %v2556 = vpop.f32.mrb[0].mxu0
    %v2557 = vadd.f32 %v521, %v2556
    %v2558 = vpop.f32.mrb[0].mxu0
    %v2559 = vadd.f32 %v525, %v2558
    %v2560 = vpop.f32.mrb[0].mxu0
    %v2561 = vadd.f32 %v521, %v2560
    %v2562 = vpop.f32.mrb[0].mxu0
    %v2563 = vadd.f32 %v525, %v2562
    %2564 = vdwg.mxu0
    %2565 = vmatprep.subr.bf16.mxu0 %v1863
    %2566 = vmatpush1.bf16.msra.mxu0 %v1862
    %2567 = vmatprep.subr.bf16.mxu0 %v1871
    %2568 = vmatpush1.bf16.msra.mxu0 %v1870
    %2569 = vmatprep.subr.bf16.mxu0 %v1879
    %2570 = vmatpush1.bf16.msra.mxu0 %v1878
    %2571 = vmatprep.subr.bf16.mxu0 %v1887
    %2572 = vmatpush1.bf16.msra.mxu0 %v1886
    %2573 = vmatprep.subr.bf16.mxu0 %v1895
    %2574 = vmatpush1.bf16.msra.mxu0 %v1894
    %2575 = vmatprep.subr.bf16.mxu0 %v1903
    %2576 = vmatpush1.bf16.msra.mxu0 %v1902
    %2577 = vmatprep.subr.bf16.mxu0 %v1911
    %2578 = vmatpush1.bf16.msra.mxu0 %v1910
    %2579 = vmatprep.subr.bf16.mxu0 %v1919
    %2580 = vmatpush1.bf16.msra.mxu0 %v1918
    %2581 = vmatprep.subr.bf16.mxu0 %v1927
    %2582 = vmatpush1.bf16.msra.mxu0 %v1926
    %2583 = vmatprep.subr.bf16.mxu0 %v1935
    %2584 = vmatpush1.bf16.msra.mxu0 %v1934
    %2585 = vmatprep.subr.bf16.mxu0 %v1943
    %2586 = vmatpush1.bf16.msra.mxu0 %v1942
    %2587 = vmatprep.subr.bf16.mxu0 %v1951
    %2588 = vmatpush1.bf16.msra.mxu0 %v1950
    %2589 = vmatprep.subr.bf16.mxu0 %v1959
    %2590 = vmatpush1.bf16.msra.mxu0 %v1958
    %2591 = vmatprep.subr.bf16.mxu0 %v1967
    %2592 = vmatpush1.bf16.msra.mxu0 %v1966
    %2593 = vmatprep.subr.bf16.mxu0 %v1975
    %2594 = vmatpush1.bf16.msra.mxu0 %v1974
    %2595 = vmatprep.subr.bf16.mxu0 %v1983
    %2596 = vmatpush1.bf16.msra.mxu0 %v1982
    %2597 = vmatprep.mubr.bf16.mxu0 %v120
    %2598 = vmatmul.mubr.bf16.gmra.mrb[0].mxu0 %v119
    %v2599 = vpop.f32.mrb[0].mxu0
    %v2600 = vadd.f32 %v2557, %v2599
    %v2601 = vpop.f32.mrb[0].mxu0
    %v2602 = vadd.f32 %v2559, %v2601
    %v2603 = vpop.f32.mrb[0].mxu0
    %v2604 = vadd.f32 %v2561, %v2603
    %v2605 = vpop.f32.mrb[0].mxu0
    %v2606 = vadd.f32 %v2563, %v2605
    %2607 = vdwg.mxu0
    %2608 = vmatprep.subr.bf16.mxu0 %v1991
    %2609 = vmatpush1.bf16.msra.mxu0 %v1990
    %2610 = vmatprep.subr.bf16.mxu0 %v1999
    %2611 = vmatpush1.bf16.msra.mxu0 %v1998
    %2612 = vmatprep.subr.bf16.mxu0 %v2007
    %2613 = vmatpush1.bf16.msra.mxu0 %v2006
    %2614 = vmatprep.subr.bf16.mxu0 %v2015
    %2615 = vmatpush1.bf16.msra.mxu0 %v2014
    %2616 = vmatprep.subr.bf16.mxu0 %v2023
    %2617 = vmatpush1.bf16.msra.mxu0 %v2022
    %2618 = vmatprep.subr.bf16.mxu0 %v2031
    %2619 = vmatpush1.bf16.msra.mxu0 %v2030
    %2620 = vmatprep.subr.bf16.mxu0 %v2039
    %2621 = vmatpush1.bf16.msra.mxu0 %v2038
    %2622 = vmatprep.subr.bf16.mxu0 %v2047
    %2623 = vmatpush1.bf16.msra.mxu0 %v2046
    %2624 = vmatprep.subr.bf16.mxu0 %v2055
    %2625 = vmatpush1.bf16.msra.mxu0 %v2054
    %2626 = vmatprep.subr.bf16.mxu0 %v2063
    %2627 = vmatpush1.bf16.msra.mxu0 %v2062
    %2628 = vmatprep.subr.bf16.mxu0 %v2071
    %2629 = vmatpush1.bf16.msra.mxu0 %v2070
    %2630 = vmatprep.subr.bf16.mxu0 %v2079
    %2631 = vmatpush1.bf16.msra.mxu0 %v2078
    %2632 = vmatprep.subr.bf16.mxu0 %v2087
    %2633 = vmatpush1.bf16.msra.mxu0 %v2086
    %2634 = vmatprep.subr.bf16.mxu0 %v2095
    %2635 = vmatpush1.bf16.msra.mxu0 %v2094
    %2636 = vmatprep.subr.bf16.mxu0 %v2103
    %2637 = vmatpush1.bf16.msra.mxu0 %v2102
    %2638 = vmatprep.subr.bf16.mxu0 %v2111
    %2639 = vmatpush1.bf16.msra.mxu0 %v2110
    %2640 = vmatprep.mubr.bf16.mxu0 %v122
    %2641 = vmatmul.mubr.bf16.gmra.mrb[0].mxu0 %v121
    %v2642 = vpop.f32.mrb[0].mxu0
    %v2643 = vadd.f32 %v2600, %v2642
    %v2644 = vpop.f32.mrb[0].mxu0
    %v2645 = vadd.f32 %v2602, %v2644
    %v2646 = vpop.f32.mrb[0].mxu0
    %v2647 = vadd.f32 %v2604, %v2646
    %v2648 = vpop.f32.mrb[0].mxu0
    %v2649 = vadd.f32 %v2606, %v2648
    %2650 = vdwg.mxu0
    %2651 = vmatprep.subr.bf16.mxu0 %v2119
    %2652 = vmatpush1.bf16.msra.mxu0 %v2118
    %2653 = vmatprep.subr.bf16.mxu0 0
    %2654 = vmatpush1.bf16.msra.mxu0 0
    %2655 = vmatprep.subr.bf16.mxu0 0
    %2656 = vmatpush1.bf16.msra.mxu0 0
    %2657 = vmatprep.subr.bf16.mxu0 0
    %2658 = vmatpush1.bf16.msra.mxu0 0
    %2659 = vmatprep.subr.bf16.mxu0 0
    %2660 = vmatpush1.bf16.msra.mxu0 0
    %2661 = vmatprep.subr.bf16.mxu0 0
    %2662 = vmatpush1.bf16.msra.mxu0 0
    %2663 = vmatprep.subr.bf16.mxu0 0
    %2664 = vmatpush1.bf16.msra.mxu0 0
    %2665 = vmatprep.subr.bf16.mxu0 0
    %2666 = vmatpush1.bf16.msra.mxu0 0
    %2667 = vmatprep.subr.bf16.mxu0 0
    %2668 = vmatpush1.bf16.msra.mxu0 0
    %2669 = vmatprep.subr.bf16.mxu0 0
    %2670 = vmatpush1.bf16.msra.mxu0 0
    %2671 = vmatprep.subr.bf16.mxu0 0
    %2672 = vmatpush1.bf16.msra.mxu0 0
    %2673 = vmatprep.subr.bf16.mxu0 0
    %2674 = vmatpush1.bf16.msra.mxu0 0
    %2675 = vmatprep.subr.bf16.mxu0 0
    %2676 = vmatpush1.bf16.msra.mxu0 0
    %2677 = vmatprep.subr.bf16.mxu0 0
    %2678 = vmatpush1.bf16.msra.mxu0 0
    %2679 = vmatprep.subr.bf16.mxu0 0
    %2680 = vmatpush1.bf16.msra.mxu0 0
    %2681 = vmatprep.subr.bf16.mxu0 0
    %2682 = vmatpush1.bf16.msra.mxu0 0
    %2683 = vmatprep.mubr.bf16.mxu0 0
    %2684 = vmatmul.mubr.bf16.gmra.mrb[0].mxu0 %v2520
    %v2685 = vpop.f32.mrb[0].mxu0
    %v2686 = vadd.f32 %v2643, %v2685
    %v2687 = vpop.f32.mrb[0].mxu0
    %v2688 = vadd.f32 %v2645, %v2687
    %v2689 = vpop.f32.mrb[0].mxu0
    %v2690 = vadd.f32 %v2647, %v2689
    %v2691 = vpop.f32.mrb[0].mxu0
    %v2692 = vadd.f32 %v2649, %v2691
    %2693 = vdwg.mxu0
    %2694 = vmatprep.subr.bf16.mxu0 %v1737
    %2695 = vmatpush1.bf16.msra.mxu0 %v1736
    %2696 = vmatprep.subr.bf16.mxu0 %v1745
    %2697 = vmatpush1.bf16.msra.mxu0 %v1744
    %2698 = vmatprep.subr.bf16.mxu0 %v1753
    %2699 = vmatpush1.bf16.msra.mxu0 %v1752
    %2700 = vmatprep.subr.bf16.mxu0 %v1761
    %2701 = vmatpush1.bf16.msra.mxu0 %v1760
    %2702 = vmatprep.subr.bf16.mxu0 %v1769
    %2703 = vmatpush1.bf16.msra.mxu0 %v1768
    %2704 = vmatprep.subr.bf16.mxu0 %v1777
    %2705 = vmatpush1.bf16.msra.mxu0 %v1776
    %2706 = vmatprep.subr.bf16.mxu0 %v1785
    %2707 = vmatpush1.bf16.msra.mxu0 %v1784
    %2708 = vmatprep.subr.bf16.mxu0 %v1793
    %2709 = vmatpush1.bf16.msra.mxu0 %v1792
    %2710 = vmatprep.subr.bf16.mxu0 %v1801
    %2711 = vmatpush1.bf16.msra.mxu0 %v1800
    %2712 = vmatprep.subr.bf16.mxu0 %v1809
    %2713 = vmatpush1.bf16.msra.mxu0 %v1808
    %2714 = vmatprep.subr.bf16.mxu0 %v1817
    %2715 = vmatpush1.bf16.msra.mxu0 %v1816
    %2716 = vmatprep.subr.bf16.mxu0 %v1825
    %2717 = vmatpush1.bf16.msra.mxu0 %v1824
    %2718 = vmatprep.subr.bf16.mxu0 %v1833
    %2719 = vmatpush1.bf16.msra.mxu0 %v1832
    %2720 = vmatprep.subr.bf16.mxu0 %v1841
    %2721 = vmatpush1.bf16.msra.mxu0 %v1840
    %2722 = vmatprep.subr.bf16.mxu0 %v1849
    %2723 = vmatpush1.bf16.msra.mxu0 %v1848
    %2724 = vmatprep.subr.bf16.mxu0 %v1857
    %2725 = vmatpush1.bf16.msra.mxu0 %v1856
    %2726 = vmatprep.mubr.bf16.mxu0 %v118
    %2727 = vmatmul.mubr.bf16.gmra.mrb[0].mxu0 %v117
    %v2728 = vpop.f32.mrb[0].mxu0
    %v2729 = vadd.f32 %v529, %v2728
    %v2730 = vpop.f32.mrb[0].mxu0
    %v2731 = vadd.f32 %v533, %v2730
    %v2732 = vpop.f32.mrb[0].mxu0
    %v2733 = vadd.f32 %v529, %v2732
    %v2734 = vpop.f32.mrb[0].mxu0
    %v2735 = vadd.f32 %v533, %v2734
    %2736 = vdwg.mxu0
    %2737 = vmatprep.subr.bf16.mxu0 %v1865
    %2738 = vmatpush1.bf16.msra.mxu0 %v1864
    %2739 = vmatprep.subr.bf16.mxu0 %v1873
    %2740 = vmatpush1.bf16.msra.mxu0 %v1872
    %2741 = vmatprep.subr.bf16.mxu0 %v1881
    %2742 = vmatpush1.bf16.msra.mxu0 %v1880
    %2743 = vmatprep.subr.bf16.mxu0 %v1889
    %2744 = vmatpush1.bf16.msra.mxu0 %v1888
    %2745 = vmatprep.subr.bf16.mxu0 %v1897
    %2746 = vmatpush1.bf16.msra.mxu0 %v1896
    %2747 = vmatprep.subr.bf16.mxu0 %v1905
    %2748 = vmatpush1.bf16.msra.mxu0 %v1904
    %2749 = vmatprep.subr.bf16.mxu0 %v1913
    %2750 = vmatpush1.bf16.msra.mxu0 %v1912
    %2751 = vmatprep.subr.bf16.mxu0 %v1921
    %2752 = vmatpush1.bf16.msra.mxu0 %v1920
    %2753 = vmatprep.subr.bf16.mxu0 %v1929
    %2754 = vmatpush1.bf16.msra.mxu0 %v1928
    %2755 = vmatprep.subr.bf16.mxu0 %v1937
    %2756 = vmatpush1.bf16.msra.mxu0 %v1936
    %2757 = vmatprep.subr.bf16.mxu0 %v1945
    %2758 = vmatpush1.bf16.msra.mxu0 %v1944
    %2759 = vmatprep.subr.bf16.mxu0 %v1953
    %2760 = vmatpush1.bf16.msra.mxu0 %v1952
    %2761 = vmatprep.subr.bf16.mxu0 %v1961
    %2762 = vmatpush1.bf16.msra.mxu0 %v1960
    %2763 = vmatprep.subr.bf16.mxu0 %v1969
    %2764 = vmatpush1.bf16.msra.mxu0 %v1968
    %2765 = vmatprep.subr.bf16.mxu0 %v1977
    %2766 = vmatpush1.bf16.msra.mxu0 %v1976
    %2767 = vmatprep.subr.bf16.mxu0 %v1985
    %2768 = vmatpush1.bf16.msra.mxu0 %v1984
    %2769 = vmatprep.mubr.bf16.mxu0 %v120
    %2770 = vmatmul.mubr.bf16.gmra.mrb[0].mxu0 %v119
    %v2771 = vpop.f32.mrb[0].mxu0
    %v2772 = vadd.f32 %v2729, %v2771
    %v2773 = vpop.f32.mrb[0].mxu0
    %v2774 = vadd.f32 %v2731, %v2773
    %v2775 = vpop.f32.mrb[0].mxu0
    %v2776 = vadd.f32 %v2733, %v2775
    %v2777 = vpop.f32.mrb[0].mxu0
    %v2778 = vadd.f32 %v2735, %v2777
    %2779 = vdwg.mxu0
    %2780 = vmatprep.subr.bf16.mxu0 %v1993
    %2781 = vmatpush1.bf16.msra.mxu0 %v1992
    %2782 = vmatprep.subr.bf16.mxu0 %v2001
    %2783 = vmatpush1.bf16.msra.mxu0 %v2000
    %2784 = vmatprep.subr.bf16.mxu0 %v2009
    %2785 = vmatpush1.bf16.msra.mxu0 %v2008
    %2786 = vmatprep.subr.bf16.mxu0 %v2017
    %2787 = vmatpush1.bf16.msra.mxu0 %v2016
    %2788 = vmatprep.subr.bf16.mxu0 %v2025
    %2789 = vmatpush1.bf16.msra.mxu0 %v2024
    %2790 = vmatprep.subr.bf16.mxu0 %v2033
    %2791 = vmatpush1.bf16.msra.mxu0 %v2032
    %2792 = vmatprep.subr.bf16.mxu0 %v2041
    %2793 = vmatpush1.bf16.msra.mxu0 %v2040
    %2794 = vmatprep.subr.bf16.mxu0 %v2049
    %2795 = vmatpush1.bf16.msra.mxu0 %v2048
    %2796 = vmatprep.subr.bf16.mxu0 %v2057
    %2797 = vmatpush1.bf16.msra.mxu0 %v2056
    %2798 = vmatprep.subr.bf16.mxu0 %v2065
    %2799 = vmatpush1.bf16.msra.mxu0 %v2064
    %2800 = vmatprep.subr.bf16.mxu0 %v2073
    %2801 = vmatpush1.bf16.msra.mxu0 %v2072
    %2802 = vmatprep.subr.bf16.mxu0 %v2081
    %2803 = vmatpush1.bf16.msra.mxu0 %v2080
    %2804 = vmatprep.subr.bf16.mxu0 %v2089
    %2805 = vmatpush1.bf16.msra.mxu0 %v2088
    %2806 = vmatprep.subr.bf16.mxu0 %v2097
    %2807 = vmatpush1.bf16.msra.mxu0 %v2096
    %2808 = vmatprep.subr.bf16.mxu0 %v2105
    %2809 = vmatpush1.bf16.msra.mxu0 %v2104
    %2810 = vmatprep.subr.bf16.mxu0 %v2113
    %2811 = vmatpush1.bf16.msra.mxu0 %v2112
    %2812 = vmatprep.mubr.bf16.mxu0 %v122
    %2813 = vmatmul.mubr.bf16.gmra.mrb[0].mxu0 %v121
    %v2814 = vpop.f32.mrb[0].mxu0
    %v2815 = vadd.f32 %v2772, %v2814
    %v2816 = vpop.f32.mrb[0].mxu0
    %v2817 = vadd.f32 %v2774, %v2816
    %v2818 = vpop.f32.mrb[0].mxu0
    %v2819 = vadd.f32 %v2776, %v2818
    %v2820 = vpop.f32.mrb[0].mxu0
    %v2821 = vadd.f32 %v2778, %v2820
    %2822 = vdwg.mxu0
    %2823 = vmatprep.subr.bf16.mxu0 %v2121
    %2824 = vmatpush1.bf16.msra.mxu0 %v2120
    %2825 = vmatprep.subr.bf16.mxu0 0
    %2826 = vmatpush1.bf16.msra.mxu0 0
    %2827 = vmatprep.subr.bf16.mxu0 0
    %2828 = vmatpush1.bf16.msra.mxu0 0
    %2829 = vmatprep.subr.bf16.mxu0 0
    %2830 = vmatpush1.bf16.msra.mxu0 0
    %2831 = vmatprep.subr.bf16.mxu0 0
    %2832 = vmatpush1.bf16.msra.mxu0 0
    %2833 = vmatprep.subr.bf16.mxu0 0
    %2834 = vmatpush1.bf16.msra.mxu0 0
    %2835 = vmatprep.subr.bf16.mxu0 0
    %2836 = vmatpush1.bf16.msra.mxu0 0
    %2837 = vmatprep.subr.bf16.mxu0 0
    %2838 = vmatpush1.bf16.msra.mxu0 0
    %2839 = vmatprep.subr.bf16.mxu0 0
    %2840 = vmatpush1.bf16.msra.mxu0 0
    %2841 = vmatprep.subr.bf16.mxu0 0
    %2842 = vmatpush1.bf16.msra.mxu0 0
    %2843 = vmatprep.subr.bf16.mxu0 0
    %2844 = vmatpush1.bf16.msra.mxu0 0
    %2845 = vmatprep.subr.bf16.mxu0 0
    %2846 = vmatpush1.bf16.msra.mxu0 0
    %2847 = vmatprep.subr.bf16.mxu0 0
    %2848 = vmatpush1.bf16.msra.mxu0 0
    %2849 = vmatprep.subr.bf16.mxu0 0
    %2850 = vmatpush1.bf16.msra.mxu0 0
    %2851 = vmatprep.subr.bf16.mxu0 0
    %2852 = vmatpush1.bf16.msra.mxu0 0
    %2853 = vmatprep.subr.bf16.mxu0 0
    %2854 = vmatpush1.bf16.msra.mxu0 0
    %2855 = vmatprep.mubr.bf16.mxu0 0
    %2856 = vmatmul.mubr.bf16.gmra.mrb[0].mxu0 %v2520
    %v2857 = vpop.f32.mrb[0].mxu0
    %v2858 = vadd.f32 %v2815, %v2857
    %v2859 = vpop.f32.mrb[0].mxu0
    %v2860 = vadd.f32 %v2817, %v2859
    %v2861 = vpop.f32.mrb[0].mxu0
    %v2862 = vadd.f32 %v2819, %v2861
    %v2863 = vpop.f32.mrb[0].mxu0
    %v2864 = vadd.f32 %v2821, %v2863
    %2865 = vdwg.mxu0
    %2866 = vmatprep.subr.bf16.mxu0 %v1739
    %2867 = vmatpush1.bf16.msra.mxu0 %v1738
    %2868 = vmatprep.subr.bf16.mxu0 %v1747
    %2869 = vmatpush1.bf16.msra.mxu0 %v1746
    %2870 = vmatprep.subr.bf16.mxu0 %v1755
    %2871 = vmatpush1.bf16.msra.mxu0 %v1754
    %2872 = vmatprep.subr.bf16.mxu0 %v1763
    %2873 = vmatpush1.bf16.msra.mxu0 %v1762
    %2874 = vmatprep.subr.bf16.mxu0 %v1771
    %2875 = vmatpush1.bf16.msra.mxu0 %v1770
    %2876 = vmatprep.subr.bf16.mxu0 %v1779
    %2877 = vmatpush1.bf16.msra.mxu0 %v1778
    %2878 = vmatprep.subr.bf16.mxu0 %v1787
    %2879 = vmatpush1.bf16.msra.mxu0 %v1786
    %2880 = vmatprep.subr.bf16.mxu0 %v1795
    %2881 = vmatpush1.bf16.msra.mxu0 %v1794
    %2882 = vmatprep.subr.bf16.mxu0 %v1803
    %2883 = vmatpush1.bf16.msra.mxu0 %v1802
    %2884 = vmatprep.subr.bf16.mxu0 %v1811
    %2885 = vmatpush1.bf16.msra.mxu0 %v1810
    %2886 = vmatprep.subr.bf16.mxu0 %v1819
    %2887 = vmatpush1.bf16.msra.mxu0 %v1818
    %2888 = vmatprep.subr.bf16.mxu0 %v1827
    %2889 = vmatpush1.bf16.msra.mxu0 %v1826
    %2890 = vmatprep.subr.bf16.mxu0 %v1835
    %2891 = vmatpush1.bf16.msra.mxu0 %v1834
    %2892 = vmatprep.subr.bf16.mxu0 %v1843
    %2893 = vmatpush1.bf16.msra.mxu0 %v1842
    %2894 = vmatprep.subr.bf16.mxu0 %v1851
    %2895 = vmatpush1.bf16.msra.mxu0 %v1850
    %2896 = vmatprep.subr.bf16.mxu0 %v1859
    %2897 = vmatpush1.bf16.msra.mxu0 %v1858
    %2898 = vmatprep.mubr.bf16.mxu0 %v118
    %2899 = vmatmul.mubr.bf16.gmra.mrb[0].mxu0 %v117
    %v2900 = vpop.f32.mrb[0].mxu0
    %v2901 = vadd.f32 %v537, %v2900
    %v2902 = vpop.f32.mrb[0].mxu0
    %v2903 = vadd.f32 %v541, %v2902
    %v2904 = vpop.f32.mrb[0].mxu0
    %v2905 = vadd.f32 %v537, %v2904
    %v2906 = vpop.f32.mrb[0].mxu0
    %v2907 = vadd.f32 %v541, %v2906
    %2908 = vdwg.mxu0
    %2909 = vmatprep.subr.bf16.mxu0 %v1867
    %2910 = vmatpush1.bf16.msra.mxu0 %v1866
    %2911 = vmatprep.subr.bf16.mxu0 %v1875
    %2912 = vmatpush1.bf16.msra.mxu0 %v1874
    %2913 = vmatprep.subr.bf16.mxu0 %v1883
    %2914 = vmatpush1.bf16.msra.mxu0 %v1882
    %2915 = vmatprep.subr.bf16.mxu0 %v1891
    %2916 = vmatpush1.bf16.msra.mxu0 %v1890
    %2917 = vmatprep.subr.bf16.mxu0 %v1899
    %2918 = vmatpush1.bf16.msra.mxu0 %v1898
    %2919 = vmatprep.subr.bf16.mxu0 %v1907
    %2920 = vmatpush1.bf16.msra.mxu0 %v1906
    %2921 = vmatprep.subr.bf16.mxu0 %v1915
    %2922 = vmatpush1.bf16.msra.mxu0 %v1914
    %2923 = vmatprep.subr.bf16.mxu0 %v1923
    %2924 = vmatpush1.bf16.msra.mxu0 %v1922
    %2925 = vmatprep.subr.bf16.mxu0 %v1931
    %2926 = vmatpush1.bf16.msra.mxu0 %v1930
    %2927 = vmatprep.subr.bf16.mxu0 %v1939
    %2928 = vmatpush1.bf16.msra.mxu0 %v1938
    %2929 = vmatprep.subr.bf16.mxu0 %v1947
    %2930 = vmatpush1.bf16.msra.mxu0 %v1946
    %2931 = vmatprep.subr.bf16.mxu0 %v1955
    %2932 = vmatpush1.bf16.msra.mxu0 %v1954
    %2933 = vmatprep.subr.bf16.mxu0 %v1963
    %2934 = vmatpush1.bf16.msra.mxu0 %v1962
    %2935 = vmatprep.subr.bf16.mxu0 %v1971
    %2936 = vmatpush1.bf16.msra.mxu0 %v1970
    %2937 = vmatprep.subr.bf16.mxu0 %v1979
    %2938 = vmatpush1.bf16.msra.mxu0 %v1978
    %2939 = vmatprep.subr.bf16.mxu0 %v1987
    %2940 = vmatpush1.bf16.msra.mxu0 %v1986
    %2941 = vmatprep.mubr.bf16.mxu0 %v120
    %2942 = vmatmul.mubr.bf16.gmra.mrb[0].mxu0 %v119
    %v2943 = vpop.f32.mrb[0].mxu0
    %v2944 = vadd.f32 %v2901, %v2943
    %v2945 = vpop.f32.mrb[0].mxu0
    %v2946 = vadd.f32 %v2903, %v2945
    %v2947 = vpop.f32.mrb[0].mxu0
    %v2948 = vadd.f32 %v2905, %v2947
    %v2949 = vpop.f32.mrb[0].mxu0
    %v2950 = vadd.f32 %v2907, %v2949
    %2951 = vdwg.mxu0
    %2952 = vmatprep.subr.bf16.mxu0 %v1995
    %2953 = vmatpush1.bf16.msra.mxu0 %v1994
    %2954 = vmatprep.subr.bf16.mxu0 %v2003
    %2955 = vmatpush1.bf16.msra.mxu0 %v2002
    %2956 = vmatprep.subr.bf16.mxu0 %v2011
    %2957 = vmatpush1.bf16.msra.mxu0 %v2010
    %2958 = vmatprep.subr.bf16.mxu0 %v2019
    %2959 = vmatpush1.bf16.msra.mxu0 %v2018
    %2960 = vmatprep.subr.bf16.mxu0 %v2027
    %2961 = vmatpush1.bf16.msra.mxu0 %v2026
    %2962 = vmatprep.subr.bf16.mxu0 %v2035
    %2963 = vmatpush1.bf16.msra.mxu0 %v2034
    %2964 = vmatprep.subr.bf16.mxu0 %v2043
    %2965 = vmatpush1.bf16.msra.mxu0 %v2042
    %2966 = vmatprep.subr.bf16.mxu0 %v2051
    %2967 = vmatpush1.bf16.msra.mxu0 %v2050
    %2968 = vmatprep.subr.bf16.mxu0 %v2059
    %2969 = vmatpush1.bf16.msra.mxu0 %v2058
    %2970 = vmatprep.subr.bf16.mxu0 %v2067
    %2971 = vmatpush1.bf16.msra.mxu0 %v2066
    %2972 = vmatprep.subr.bf16.mxu0 %v2075
    %2973 = vmatpush1.bf16.msra.mxu0 %v2074
    %2974 = vmatprep.subr.bf16.mxu0 %v2083
    %2975 = vmatpush1.bf16.msra.mxu0 %v2082
    %2976 = vmatprep.subr.bf16.mxu0 %v2091
    %2977 = vmatpush1.bf16.msra.mxu0 %v2090
    %2978 = vmatprep.subr.bf16.mxu0 %v2099
    %2979 = vmatpush1.bf16.msra.mxu0 %v2098
    %2980 = vmatprep.subr.bf16.mxu0 %v2107
    %2981 = vmatpush1.bf16.msra.mxu0 %v2106
    %2982 = vmatprep.subr.bf16.mxu0 %v2115
    %2983 = vmatpush1.bf16.msra.mxu0 %v2114
    %2984 = vmatprep.mubr.bf16.mxu0 %v122
    %2985 = vmatmul.mubr.bf16.gmra.mrb[0].mxu0 %v121
    %v2986 = vpop.f32.mrb[0].mxu0
    %v2987 = vadd.f32 %v2944, %v2986
    %v2988 = vpop.f32.mrb[0].mxu0
    %v2989 = vadd.f32 %v2946, %v2988
    %v2990 = vpop.f32.mrb[0].mxu0
    %v2991 = vadd.f32 %v2948, %v2990
    %v2992 = vpop.f32.mrb[0].mxu0
    %v2993 = vadd.f32 %v2950, %v2992
    %2994 = vdwg.mxu0
    %2995 = vmatprep.subr.bf16.mxu0 %v2123
    %2996 = vmatpush1.bf16.msra.mxu0 %v2122
    %2997 = vmatprep.subr.bf16.mxu0 0
    %2998 = vmatpush1.bf16.msra.mxu0 0
    %2999 = vmatprep.subr.bf16.mxu0 0
    %3000 = vmatpush1.bf16.msra.mxu0 0
    %3001 = vmatprep.subr.bf16.mxu0 0
    %3002 = vmatpush1.bf16.msra.mxu0 0
    %3003 = vmatprep.subr.bf16.mxu0 0
    %3004 = vmatpush1.bf16.msra.mxu0 0
    %3005 = vmatprep.subr.bf16.mxu0 0
    %3006 = vmatpush1.bf16.msra.mxu0 0
    %3007 = vmatprep.subr.bf16.mxu0 0
    %3008 = vmatpush1.bf16.msra.mxu0 0
    %3009 = vmatprep.subr.bf16.mxu0 0
    %3010 = vmatpush1.bf16.msra.mxu0 0
    %3011 = vmatprep.subr.bf16.mxu0 0
    %3012 = vmatpush1.bf16.msra.mxu0 0
    %3013 = vmatprep.subr.bf16.mxu0 0
    %3014 = vmatpush1.bf16.msra.mxu0 0
    %3015 = vmatprep.subr.bf16.mxu0 0
    %3016 = vmatpush1.bf16.msra.mxu0 0
    %3017 = vmatprep.subr.bf16.mxu0 0
    %3018 = vmatpush1.bf16.msra.mxu0 0
    %3019 = vmatprep.subr.bf16.mxu0 0
    %3020 = vmatpush1.bf16.msra.mxu0 0
    %3021 = vmatprep.subr.bf16.mxu0 0
    %3022 = vmatpush1.bf16.msra.mxu0 0
    %3023 = vmatprep.subr.bf16.mxu0 0
    %3024 = vmatpush1.bf16.msra.mxu0 0
    %3025 = vmatprep.subr.bf16.mxu0 0
    %3026 = vmatpush1.bf16.msra.mxu0 0
    %3027 = vmatprep.mubr.bf16.mxu0 0
    %3028 = vmatmul.mubr.bf16.gmra.mrb[0].mxu0 %v2520
    %v3029 = vpop.f32.mrb[0].mxu0
    %v3030 = vadd.f32 %v2987, %v3029
    %v3031 = vpop.f32.mrb[0].mxu0
    %v3032 = vadd.f32 %v2989, %v3031
    %v3033 = vpop.f32.mrb[0].mxu0
    %v3034 = vadd.f32 %v2991, %v3033
    %v3035 = vpop.f32.mrb[0].mxu0
    %v3036 = vadd.f32 %v2993, %v3035
    %3037 = vdwg.mxu0
    %3038 = vmatprep.subr.bf16.mxu0 %v1741
    %3039 = vmatpush1.bf16.msra.mxu0 %v1740
    %3040 = vmatprep.subr.bf16.mxu0 %v1749
    %3041 = vmatpush1.bf16.msra.mxu0 %v1748
    %3042 = vmatprep.subr.bf16.mxu0 %v1757
    %3043 = vmatpush1.bf16.msra.mxu0 %v1756
    %3044 = vmatprep.subr.bf16.mxu0 %v1765
    %3045 = vmatpush1.bf16.msra.mxu0 %v1764
    %3046 = vmatprep.subr.bf16.mxu0 %v1773
    %3047 = vmatpush1.bf16.msra.mxu0 %v1772
    %3048 = vmatprep.subr.bf16.mxu0 %v1781
    %3049 = vmatpush1.bf16.msra.mxu0 %v1780
    %3050 = vmatprep.subr.bf16.mxu0 %v1789
    %3051 = vmatpush1.bf16.msra.mxu0 %v1788
    %3052 = vmatprep.subr.bf16.mxu0 %v1797
    %3053 = vmatpush1.bf16.msra.mxu0 %v1796
    %3054 = vmatprep.subr.bf16.mxu0 %v1805
    %3055 = vmatpush1.bf16.msra.mxu0 %v1804
    %3056 = vmatprep.subr.bf16.mxu0 %v1813
    %3057 = vmatpush1.bf16.msra.mxu0 %v1812
    %3058 = vmatprep.subr.bf16.mxu0 %v1821
    %3059 = vmatpush1.bf16.msra.mxu0 %v1820
    %3060 = vmatprep.subr.bf16.mxu0 %v1829
    %3061 = vmatpush1.bf16.msra.mxu0 %v1828
    %3062 = vmatprep.subr.bf16.mxu0 %v1837
    %3063 = vmatpush1.bf16.msra.mxu0 %v1836
    %3064 = vmatprep.subr.bf16.mxu0 %v1845
    %3065 = vmatpush1.bf16.msra.mxu0 %v1844
    %3066 = vmatprep.subr.bf16.mxu0 %v1853
    %3067 = vmatpush1.bf16.msra.mxu0 %v1852
    %3068 = vmatprep.subr.bf16.mxu0 %v1861
    %3069 = vmatpush1.bf16.msra.mxu0 %v1860
    %3070 = vmatprep.mubr.bf16.mxu0 %v118
    %3071 = vmatmul.mubr.bf16.gmra.mrb[0].mxu0 %v117
    %v3072 = vpop.f32.mrb[0].mxu0
    %v3073 = vadd.f32 %v545, %v3072
    %v3074 = vpop.f32.mrb[0].mxu0
    %v3075 = vadd.f32 %v549, %v3074
    %v3076 = vpop.f32.mrb[0].mxu0
    %v3077 = vadd.f32 %v545, %v3076
    %v3078 = vpop.f32.mrb[0].mxu0
    %v3079 = vadd.f32 %v549, %v3078
    %3080 = vdwg.mxu0
    %3081 = vmatprep.subr.bf16.mxu0 %v1869
    %3082 = vmatpush1.bf16.msra.mxu0 %v1868
    %3083 = vmatprep.subr.bf16.mxu0 %v1877
    %3084 = vmatpush1.bf16.msra.mxu0 %v1876
    %3085 = vmatprep.subr.bf16.mxu0 %v1885
    %3086 = vmatpush1.bf16.msra.mxu0 %v1884
    %3087 = vmatprep.subr.bf16.mxu0 %v1893
    %3088 = vmatpush1.bf16.msra.mxu0 %v1892
    %3089 = vmatprep.subr.bf16.mxu0 %v1901
    %3090 = vmatpush1.bf16.msra.mxu0 %v1900
    %3091 = vmatprep.subr.bf16.mxu0 %v1909
    %3092 = vmatpush1.bf16.msra.mxu0 %v1908
    %3093 = vmatprep.subr.bf16.mxu0 %v1917
    %3094 = vmatpush1.bf16.msra.mxu0 %v1916
    %3095 = vmatprep.subr.bf16.mxu0 %v1925
    %3096 = vmatpush1.bf16.msra.mxu0 %v1924
    %3097 = vmatprep.subr.bf16.mxu0 %v1933
    %3098 = vmatpush1.bf16.msra.mxu0 %v1932
    %3099 = vmatprep.subr.bf16.mxu0 %v1941
    %3100 = vmatpush1.bf16.msra.mxu0 %v1940
    %3101 = vmatprep.subr.bf16.mxu0 %v1949
    %3102 = vmatpush1.bf16.msra.mxu0 %v1948
    %3103 = vmatprep.subr.bf16.mxu0 %v1957
    %3104 = vmatpush1.bf16.msra.mxu0 %v1956
    %3105 = vmatprep.subr.bf16.mxu0 %v1965
    %3106 = vmatpush1.bf16.msra.mxu0 %v1964
    %3107 = vmatprep.subr.bf16.mxu0 %v1973
    %3108 = vmatpush1.bf16.msra.mxu0 %v1972
    %3109 = vmatprep.subr.bf16.mxu0 %v1981
    %3110 = vmatpush1.bf16.msra.mxu0 %v1980
    %3111 = vmatprep.subr.bf16.mxu0 %v1989
    %3112 = vmatpush1.bf16.msra.mxu0 %v1988
    %3113 = vmatprep.mubr.bf16.mxu0 %v120
    %3114 = vmatmul.mubr.bf16.gmra.mrb[0].mxu0 %v119
    %v3115 = vpop.f32.mrb[0].mxu0
    %v3116 = vadd.f32 %v3073, %v3115
    %v3117 = vpop.f32.mrb[0].mxu0
    %v3118 = vadd.f32 %v3075, %v3117
    %v3119 = vpop.f32.mrb[0].mxu0
    %v3120 = vadd.f32 %v3077, %v3119
    %v3121 = vpop.f32.mrb[0].mxu0
    %v3122 = vadd.f32 %v3079, %v3121
    %3123 = vdwg.mxu0
    %3124 = vmatprep.subr.bf16.mxu0 %v1997
    %3125 = vmatpush1.bf16.msra.mxu0 %v1996
    %3126 = vmatprep.subr.bf16.mxu0 %v2005
    %3127 = vmatpush1.bf16.msra.mxu0 %v2004
    %3128 = vmatprep.subr.bf16.mxu0 %v2013
    %3129 = vmatpush1.bf16.msra.mxu0 %v2012
    %3130 = vmatprep.subr.bf16.mxu0 %v2021
    %3131 = vmatpush1.bf16.msra.mxu0 %v2020
    %3132 = vmatprep.subr.bf16.mxu0 %v2029
    %3133 = vmatpush1.bf16.msra.mxu0 %v2028
    %3134 = vmatprep.subr.bf16.mxu0 %v2037
    %3135 = vmatpush1.bf16.msra.mxu0 %v2036
    %3136 = vmatprep.subr.bf16.mxu0 %v2045
    %3137 = vmatpush1.bf16.msra.mxu0 %v2044
    %3138 = vmatprep.subr.bf16.mxu0 %v2053
    %3139 = vmatpush1.bf16.msra.mxu0 %v2052
    %3140 = vmatprep.subr.bf16.mxu0 %v2061
    %3141 = vmatpush1.bf16.msra.mxu0 %v2060
    %3142 = vmatprep.subr.bf16.mxu0 %v2069
    %3143 = vmatpush1.bf16.msra.mxu0 %v2068
    %3144 = vmatprep.subr.bf16.mxu0 %v2077
    %3145 = vmatpush1.bf16.msra.mxu0 %v2076
    %3146 = vmatprep.subr.bf16.mxu0 %v2085
    %3147 = vmatpush1.bf16.msra.mxu0 %v2084
    %3148 = vmatprep.subr.bf16.mxu0 %v2093
    %3149 = vmatpush1.bf16.msra.mxu0 %v2092
    %3150 = vmatprep.subr.bf16.mxu0 %v2101
    %3151 = vmatpush1.bf16.msra.mxu0 %v2100
    %3152 = vmatprep.subr.bf16.mxu0 %v2109
    %3153 = vmatpush1.bf16.msra.mxu0 %v2108
    %3154 = vmatprep.subr.bf16.mxu0 %v2117
    %3155 = vmatpush1.bf16.msra.mxu0 %v2116
    %3156 = vmatprep.mubr.bf16.mxu0 %v122
    %3157 = vmatmul.mubr.bf16.gmra.mrb[0].mxu0 %v121
    %v3158 = vpop.f32.mrb[0].mxu0
    %v3159 = vadd.f32 %v3116, %v3158
    %v3160 = vpop.f32.mrb[0].mxu0
    %v3161 = vadd.f32 %v3118, %v3160
    %v3162 = vpop.f32.mrb[0].mxu0
    %v3163 = vadd.f32 %v3120, %v3162
    %v3164 = vpop.f32.mrb[0].mxu0
    %v3165 = vadd.f32 %v3122, %v3164
    %3166 = vdwg.mxu0
    %3167 = vmatprep.subr.bf16.mxu0 %v2125
    %3168 = vmatpush1.bf16.msra.mxu0 %v2124
    %3169 = vmatprep.subr.bf16.mxu0 0
    %3170 = vmatpush1.bf16.msra.mxu0 0
    %3171 = vmatprep.subr.bf16.mxu0 0
    %3172 = vmatpush1.bf16.msra.mxu0 0
    %3173 = vmatprep.subr.bf16.mxu0 0
    %3174 = vmatpush1.bf16.msra.mxu0 0
    %3175 = vmatprep.subr.bf16.mxu0 0
    %3176 = vmatpush1.bf16.msra.mxu0 0
    %3177 = vmatprep.subr.bf16.mxu0 0
    %3178 = vmatpush1.bf16.msra.mxu0 0
    %3179 = vmatprep.subr.bf16.mxu0 0
    %3180 = vmatpush1.bf16.msra.mxu0 0
    %3181 = vmatprep.subr.bf16.mxu0 0
    %3182 = vmatpush1.bf16.msra.mxu0 0
    %3183 = vmatprep.subr.bf16.mxu0 0
    %3184 = vmatpush1.bf16.msra.mxu0 0
    %3185 = vmatprep.subr.bf16.mxu0 0
    %3186 = vmatpush1.bf16.msra.mxu0 0
    %3187 = vmatprep.subr.bf16.mxu0 0
    %3188 = vmatpush1.bf16.msra.mxu0 0
    %3189 = vmatprep.subr.bf16.mxu0 0
    %3190 = vmatpush1.bf16.msra.mxu0 0
    %3191 = vmatprep.subr.bf16.mxu0 0
    %3192 = vmatpush1.bf16.msra.mxu0 0
    %3193 = vmatprep.subr.bf16.mxu0 0
    %3194 = vmatpush1.bf16.msra.mxu0 0
    %3195 = vmatprep.subr.bf16.mxu0 0
    %3196 = vmatpush1.bf16.msra.mxu0 0
    %3197 = vmatprep.subr.bf16.mxu0 0
    %3198 = vmatpush1.bf16.msra.mxu0 0
    %3199 = vmatprep.mubr.bf16.mxu0 0
    %3200 = vmatmul.mubr.bf16.gmra.mrb[0].mxu0 %v2520
    %v3201 = vpop.f32.mrb[0].mxu0
    %v3202 = vadd.f32 %v3159, %v3201
    %v3203 = vpop.f32.mrb[0].mxu0
    %v3204 = vadd.f32 %v3161, %v3203
    %v3205 = vpop.f32.mrb[0].mxu0
    %v3206 = vadd.f32 %v3163, %v3205
    %v3207 = vpop.f32.mrb[0].mxu0
    %v3208 = vadd.f32 %v3165, %v3207
    %3209 = vdwg.mxu0
    %v3210 = vmax.f32 %v2686, 0.0
    %v3211 = vmax.f32 %v2688, 0.0
    %v3212 = vmax.f32 %v2858, 0.0
    %v3213 = vmax.f32 %v2860, 0.0
    %v3214 = vmax.f32 %v3030, 0.0
    %v3215 = vmax.f32 %v3032, 0.0
    %v3216 = vmax.f32 %v3202, 0.0
    %v3217 = vmax.f32 %v3204, 0.0
    %v3218 = vmax.f32 %v2690, 0.0
    %v3219 = vmax.f32 %v2692, 0.0
    %v3220 = vmax.f32 %v2862, 0.0
    %v3221 = vmax.f32 %v2864, 0.0
    %v3222 = vmax.f32 %v3034, 0.0
    %v3223 = vmax.f32 %v3036, 0.0
    %v3224 = vmax.f32 %v3206, 0.0
    %v3225 = vmax.f32 %v3208, 0.0
    %v3226 = vpack.c.bf16 %v3218, %v3210
    %v3227 = vpack.c.bf16 %v3219, %v3211
    %v3228 = vpack.c.bf16 %v3220, %v3212
    %v3229 = vpack.c.bf16 %v3221, %v3213
    %v3230 = vpack.c.bf16 %v3222, %v3214
    %v3231 = vpack.c.bf16 %v3223, %v3215
    %v3232 = vpack.c.bf16 %v3224, %v3216
    %v3233 = vpack.c.bf16 %v3225, %v3217
    %v3234 = vld [vmem:[#allocation6] sm:$0xff]
    %v3235 = vld [vmem:[#allocation6 + $0x8] sm:$0xff]
    %v3236 = vld [vmem:[#allocation6 + $0x10] sm:$0xff]
    %v3237 = vld [vmem:[#allocation6 + $0x18] sm:$0xff]
    %v3238 = vld [vmem:[#allocation6 + $0x20] sm:$0xff]
    %v3239 = vld [vmem:[#allocation6 + $0x28] sm:$0xff]
    %v3240 = vld [vmem:[#allocation6 + $0x30] sm:$0xff]
    %v3241 = vld [vmem:[#allocation6 + $0x38] sm:$0xff]
    %v3242 = vld [vmem:[#allocation6 + $0x40] sm:$0xff]
    %v3243 = vld [vmem:[#allocation6 + $0x48] sm:$0xff]
    %v3244 = vld [vmem:[#allocation6 + $0x50] sm:$0xff]
    %v3245 = vld [vmem:[#allocation6 + $0x58] sm:$0xff]
    %v3246 = vld [vmem:[#allocation6 + $0x60] sm:$0xff]
    %v3247 = vld [vmem:[#allocation6 + $0x68] sm:$0xff]
    %v3248 = vld [vmem:[#allocation6 + $0x70] sm:$0xff]
    %v3249 = vld [vmem:[#allocation6 + $0x78] sm:$0xff]
    %v3250 = vld [vmem:[#allocation6 + $0x80] sm:$0xff]
    %v3251 = vld [vmem:[#allocation6 + $0x88] sm:$0xff]
    %v3252 = vld [vmem:[#allocation6 + $0x90] sm:$0xff]
    %v3253 = vld [vmem:[#allocation6 + $0x98] sm:$0xff]
    %v3254 = vld [vmem:[#allocation6 + $0xa0] sm:$0xff]
    %v3255 = vld [vmem:[#allocation6 + $0xa8] sm:$0xff]
    %v3256 = vld [vmem:[#allocation6 + $0xb0] sm:$0xff]
    %v3257 = vld [vmem:[#allocation6 + $0xb8] sm:$0xff]
    %v3258 = vld [vmem:[#allocation6 + $0xc0] sm:$0xff]
    %v3259 = vld [vmem:[#allocation6 + $0xc8] sm:$0xff]
    %v3260 = vld [vmem:[#allocation6 + $0xd0] sm:$0xff]
    %v3261 = vld [vmem:[#allocation6 + $0xd8] sm:$0xff]
    %v3262 = vld [vmem:[#allocation6 + $0xe0] sm:$0xff]
    %v3263 = vld [vmem:[#allocation6 + $0xe8] sm:$0xff]
    %v3264 = vld [vmem:[#allocation6 + $0xf0] sm:$0xff]
    %v3265 = vld [vmem:[#allocation6 + $0xf8] sm:$0xff]
    %v3266 = vld [vmem:[#allocation6 + $0x100] sm:$0xff]
    %v3267 = vld [vmem:[#allocation6 + $0x108] sm:$0xff]
    %v3268 = vld [vmem:[#allocation6 + $0x110] sm:$0xff]
    %v3269 = vld [vmem:[#allocation6 + $0x118] sm:$0xff]
    %v3270 = vld [vmem:[#allocation6 + $0x120] sm:$0xff]
    %v3271 = vld [vmem:[#allocation6 + $0x128] sm:$0xff]
    %v3272 = vld [vmem:[#allocation6 + $0x130] sm:$0xff]
    %v3273 = vld [vmem:[#allocation6 + $0x138] sm:$0xff]
    %v3274 = vld [vmem:[#allocation6 + $0x140] sm:$0xff]
    %v3275 = vld [vmem:[#allocation6 + $0x148] sm:$0xff]
    %v3276 = vld [vmem:[#allocation6 + $0x150] sm:$0xff]
    %v3277 = vld [vmem:[#allocation6 + $0x158] sm:$0xff]
    %v3278 = vld [vmem:[#allocation6 + $0x160] sm:$0xff]
    %v3279 = vld [vmem:[#allocation6 + $0x168] sm:$0xff]
    %v3280 = vld [vmem:[#allocation6 + $0x170] sm:$0xff]
    %v3281 = vld [vmem:[#allocation6 + $0x178] sm:$0xff]
    %v3282 = vld [vmem:[#allocation6 + $0x180] sm:$0xff]
    %v3283 = vld [vmem:[#allocation6 + $0x188] sm:$0xff]
    %v3284 = vld [vmem:[#allocation6 + $0x190] sm:$0xff]
    %v3285 = vld [vmem:[#allocation6 + $0x198] sm:$0xff]
    %v3286 = vld [vmem:[#allocation6 + $0x1a0] sm:$0xff]
    %v3287 = vld [vmem:[#allocation6 + $0x1a8] sm:$0xff]
    %v3288 = vld [vmem:[#allocation6 + $0x1b0] sm:$0xff]
    %v3289 = vld [vmem:[#allocation6 + $0x1b8] sm:$0xff]
    %v3290 = vld [vmem:[#allocation6 + $0x1c0] sm:$0xff]
    %v3291 = vld [vmem:[#allocation6 + $0x1c8] sm:$0xff]
    %v3292 = vld [vmem:[#allocation6 + $0x1d0] sm:$0xff]
    %v3293 = vld [vmem:[#allocation6 + $0x1d8] sm:$0xff]
    %v3294 = vld [vmem:[#allocation6 + $0x1e0] sm:$0xff]
    %v3295 = vld [vmem:[#allocation6 + $0x1e8] sm:$0xff]
    %v3296 = vld [vmem:[#allocation6 + $0x1f0] sm:$0xff]
    %v3297 = vld [vmem:[#allocation6 + $0x1f8] sm:$0xff]
    %v3298 = vld [vmem:[#allocation6 + $0x200] sm:$0xff]
    %v3299 = vld [vmem:[#allocation6 + $0x208] sm:$0xff]
    %v3300 = vld [vmem:[#allocation6 + $0x210] sm:$0xff]
    %v3301 = vld [vmem:[#allocation6 + $0x218] sm:$0xff]
    %v3302 = vld [vmem:[#allocation6 + $0x220] sm:$0xff]
    %v3303 = vld [vmem:[#allocation6 + $0x228] sm:$0xff]
    %v3304 = vld [vmem:[#allocation6 + $0x230] sm:$0xff]
    %v3305 = vld [vmem:[#allocation6 + $0x238] sm:$0xff]
    %v3306 = vld [vmem:[#allocation6 + $0x240] sm:$0xff]
    %v3307 = vld [vmem:[#allocation6 + $0x248] sm:$0xff]
    %v3308 = vld [vmem:[#allocation6 + $0x250] sm:$0xff]
    %v3309 = vld [vmem:[#allocation6 + $0x258] sm:$0xff]
    %v3310 = vld [vmem:[#allocation6 + $0x260] sm:$0xff]
    %v3311 = vld [vmem:[#allocation6 + $0x268] sm:$0xff]
    %v3312 = vld [vmem:[#allocation6 + $0x270] sm:$0xff]
    %v3313 = vld [vmem:[#allocation6 + $0x278] sm:$0xff]
    %v3314 = vld [vmem:[#allocation6 + $0x280] sm:$0xff]
    %v3315 = vld [vmem:[#allocation6 + $0x288] sm:$0xff]
    %v3316 = vld [vmem:[#allocation6 + $0x290] sm:$0xff]
    %v3317 = vld [vmem:[#allocation6 + $0x298] sm:$0xff]
    %v3318 = vld [vmem:[#allocation6 + $0x2a0] sm:$0xff]
    %v3319 = vld [vmem:[#allocation6 + $0x2a8] sm:$0xff]
    %v3320 = vld [vmem:[#allocation6 + $0x2b0] sm:$0xff]
    %v3321 = vld [vmem:[#allocation6 + $0x2b8] sm:$0xff]
    %v3322 = vld [vmem:[#allocation6 + $0x2c0] sm:$0xff]
    %v3323 = vld [vmem:[#allocation6 + $0x2c8] sm:$0xff]
    %v3324 = vld [vmem:[#allocation6 + $0x2d0] sm:$0xff]
    %v3325 = vld [vmem:[#allocation6 + $0x2d8] sm:$0xff]
    %v3326 = vld [vmem:[#allocation6 + $0x2e0] sm:$0xff]
    %v3327 = vld [vmem:[#allocation6 + $0x2e8] sm:$0xff]
    %v3328 = vld [vmem:[#allocation6 + $0x2f0] sm:$0xff]
    %v3329 = vld [vmem:[#allocation6 + $0x2f8] sm:$0xff]
    %v3330 = vld [vmem:[#allocation6 + $0x300] sm:$0xff]
    %v3331 = vld [vmem:[#allocation6 + $0x308] sm:$0xff]
    %v3332 = vld [vmem:[#allocation6 + $0x310] sm:$0xff]
    %v3333 = vld [vmem:[#allocation6 + $0x318] sm:$0xff]
    %v3334 = vld [vmem:[#allocation6 + $0x320] sm:$0xff]
    %v3335 = vld [vmem:[#allocation6 + $0x328] sm:$0xff]
    %v3336 = vld [vmem:[#allocation6 + $0x330] sm:$0xff]
    %v3337 = vld [vmem:[#allocation6 + $0x338] sm:$0xff]
    %v3338 = vld [vmem:[#allocation6 + $0x340] sm:$0xff]
    %v3339 = vld [vmem:[#allocation6 + $0x348] sm:$0xff]
    %v3340 = vld [vmem:[#allocation6 + $0x350] sm:$0xff]
    %v3341 = vld [vmem:[#allocation6 + $0x358] sm:$0xff]
    %v3342 = vld [vmem:[#allocation6 + $0x360] sm:$0xff]
    %v3343 = vld [vmem:[#allocation6 + $0x368] sm:$0xff]
    %v3344 = vld [vmem:[#allocation6 + $0x370] sm:$0xff]
    %v3345 = vld [vmem:[#allocation6 + $0x378] sm:$0xff]
    %v3346 = vld [vmem:[#allocation6 + $0x380] sm:$0xff]
    %v3347 = vld [vmem:[#allocation6 + $0x388] sm:$0xff]
    %v3348 = vld [vmem:[#allocation6 + $0x390] sm:$0xff]
    %v3349 = vld [vmem:[#allocation6 + $0x398] sm:$0xff]
    %v3350 = vld [vmem:[#allocation6 + $0x3a0] sm:$0xff]
    %v3351 = vld [vmem:[#allocation6 + $0x3a8] sm:$0xff]
    %v3352 = vld [vmem:[#allocation6 + $0x3b0] sm:$0xff]
    %v3353 = vld [vmem:[#allocation6 + $0x3b8] sm:$0xff]
    %v3354 = vld [vmem:[#allocation6 + $0x3c0] sm:$0xff]
    %v3355 = vld [vmem:[#allocation6 + $0x3c8] sm:$0xff]
    %v3356 = vld [vmem:[#allocation6 + $0x3d0] sm:$0xff]
    %v3357 = vld [vmem:[#allocation6 + $0x3d8] sm:$0xff]
    %v3358 = vld [vmem:[#allocation6 + $0x3e0] sm:$0xff]
    %v3359 = vld [vmem:[#allocation6 + $0x3e8] sm:$0xff]
    %v3360 = vld [vmem:[#allocation6 + $0x3f0] sm:$0xff]
    %v3361 = vld [vmem:[#allocation6 + $0x3f8] sm:$0xff]
    %v3362 = vld [vmem:[#allocation6 + $0x400] sm:$0xff]
    %v3363 = vld [vmem:[#allocation6 + $0x408] sm:$0xff]
    %v3364 = vld [vmem:[#allocation6 + $0x410] sm:$0xff]
    %v3365 = vld [vmem:[#allocation6 + $0x418] sm:$0xff]
    %v3366 = vld [vmem:[#allocation6 + $0x420] sm:$0xff]
    %v3367 = vld [vmem:[#allocation6 + $0x428] sm:$0xff]
    %v3368 = vld [vmem:[#allocation6 + $0x430] sm:$0xff]
    %v3369 = vld [vmem:[#allocation6 + $0x438] sm:$0xff]
    %v3370 = vld [vmem:[#allocation6 + $0x440] sm:$0xff]
    %v3371 = vld [vmem:[#allocation6 + $0x448] sm:$0xff]
    %v3372 = vld [vmem:[#allocation6 + $0x450] sm:$0xff]
    %v3373 = vld [vmem:[#allocation6 + $0x458] sm:$0xff]
    %v3374 = vld [vmem:[#allocation6 + $0x460] sm:$0xff]
    %v3375 = vld [vmem:[#allocation6 + $0x468] sm:$0xff]
    %v3376 = vld [vmem:[#allocation6 + $0x470] sm:$0xff]
    %v3377 = vld [vmem:[#allocation6 + $0x478] sm:$0xff]
    %v3378 = vld [vmem:[#allocation6 + $0x480] sm:$0xff]
    %v3379 = vld [vmem:[#allocation6 + $0x488] sm:$0xff]
    %v3380 = vld [vmem:[#allocation6 + $0x490] sm:$0xff]
    %v3381 = vld [vmem:[#allocation6 + $0x498] sm:$0xff]
    %v3382 = vld [vmem:[#allocation6 + $0x4a0] sm:$0xff]
    %v3383 = vld [vmem:[#allocation6 + $0x4a8] sm:$0xff]
    %v3384 = vld [vmem:[#allocation6 + $0x4b0] sm:$0xff]
    %v3385 = vld [vmem:[#allocation6 + $0x4b8] sm:$0xff]
    %v3386 = vld [vmem:[#allocation6 + $0x4c0] sm:$0xff]
    %v3387 = vld [vmem:[#allocation6 + $0x4c8] sm:$0xff]
    %v3388 = vld [vmem:[#allocation6 + $0x4d0] sm:$0xff]
    %v3389 = vld [vmem:[#allocation6 + $0x4d8] sm:$0xff]
    %v3390 = vld [vmem:[#allocation6 + $0x4e0] sm:$0xff]
    %v3391 = vld [vmem:[#allocation6 + $0x4e8] sm:$0xff]
    %v3392 = vld [vmem:[#allocation6 + $0x4f0] sm:$0xff]
    %v3393 = vld [vmem:[#allocation6 + $0x4f8] sm:$0xff]
    %v3394 = vld [vmem:[#allocation6 + $0x500] sm:$0xff]
    %v3395 = vld [vmem:[#allocation6 + $0x508] sm:$0xff]
    %v3396 = vld [vmem:[#allocation6 + $0x510] sm:$0xff]
    %v3397 = vld [vmem:[#allocation6 + $0x518] sm:$0xff]
    %v3398 = vld [vmem:[#allocation6 + $0x520] sm:$0xff]
    %v3399 = vld [vmem:[#allocation6 + $0x528] sm:$0xff]
    %v3400 = vld [vmem:[#allocation6 + $0x530] sm:$0xff]
    %v3401 = vld [vmem:[#allocation6 + $0x538] sm:$0xff]
    %v3402 = vld [vmem:[#allocation6 + $0x540] sm:$0xff]
    %v3403 = vld [vmem:[#allocation6 + $0x548] sm:$0xff]
    %v3404 = vld [vmem:[#allocation6 + $0x550] sm:$0xff]
    %v3405 = vld [vmem:[#allocation6 + $0x558] sm:$0xff]
    %v3406 = vld [vmem:[#allocation6 + $0x560] sm:$0xff]
    %v3407 = vld [vmem:[#allocation6 + $0x568] sm:$0xff]
    %v3408 = vld [vmem:[#allocation6 + $0x570] sm:$0xff]
    %v3409 = vld [vmem:[#allocation6 + $0x578] sm:$0xff]
    %v3410 = vld [vmem:[#allocation6 + $0x580] sm:$0xff]
    %v3411 = vld [vmem:[#allocation6 + $0x588] sm:$0xff]
    %v3412 = vld [vmem:[#allocation6 + $0x590] sm:$0xff]
    %v3413 = vld [vmem:[#allocation6 + $0x598] sm:$0xff]
    %v3414 = vld [vmem:[#allocation6 + $0x5a0] sm:$0xff]
    %v3415 = vld [vmem:[#allocation6 + $0x5a8] sm:$0xff]
    %v3416 = vld [vmem:[#allocation6 + $0x5b0] sm:$0xff]
    %v3417 = vld [vmem:[#allocation6 + $0x5b8] sm:$0xff]
    %v3418 = vld [vmem:[#allocation6 + $0x5c0] sm:$0xff]
    %v3419 = vld [vmem:[#allocation6 + $0x5c8] sm:$0xff]
    %v3420 = vld [vmem:[#allocation6 + $0x5d0] sm:$0xff]
    %v3421 = vld [vmem:[#allocation6 + $0x5d8] sm:$0xff]
    %v3422 = vld [vmem:[#allocation6 + $0x5e0] sm:$0xff]
    %v3423 = vld [vmem:[#allocation6 + $0x5e8] sm:$0xff]
    %v3424 = vld [vmem:[#allocation6 + $0x5f0] sm:$0xff]
    %v3425 = vld [vmem:[#allocation6 + $0x5f8] sm:$0xff]
    %v3426 = vld [vmem:[#allocation6 + $0x600] sm:$0xff]
    %v3427 = vld [vmem:[#allocation6 + $0x608] sm:$0xff]
    %v3428 = vld [vmem:[#allocation6 + $0x610] sm:$0xff]
    %v3429 = vld [vmem:[#allocation6 + $0x618] sm:$0xff]
    %v3430 = vld [vmem:[#allocation6 + $0x620] sm:$0xff]
    %v3431 = vld [vmem:[#allocation6 + $0x628] sm:$0xff]
    %v3432 = vld [vmem:[#allocation6 + $0x630] sm:$0xff]
    %v3433 = vld [vmem:[#allocation6 + $0x638] sm:$0xff]
    %v3434 = vld [vmem:[#allocation6 + $0x640] sm:$0xff]
    %v3435 = vld [vmem:[#allocation6 + $0x648] sm:$0xff]
    %v3436 = vld [vmem:[#allocation6 + $0x650] sm:$0xff]
    %v3437 = vld [vmem:[#allocation6 + $0x658] sm:$0xff]
    %v3438 = vld [vmem:[#allocation6 + $0x660] sm:$0xff]
    %v3439 = vld [vmem:[#allocation6 + $0x668] sm:$0xff]
    %v3440 = vld [vmem:[#allocation6 + $0x670] sm:$0xff]
    %v3441 = vld [vmem:[#allocation6 + $0x678] sm:$0xff]
    %v3442 = vld [vmem:[#allocation6 + $0x680] sm:$0xff]
    %v3443 = vld [vmem:[#allocation6 + $0x688] sm:$0xff]
    %v3444 = vld [vmem:[#allocation6 + $0x690] sm:$0xff]
    %v3445 = vld [vmem:[#allocation6 + $0x698] sm:$0xff]
    %v3446 = vld [vmem:[#allocation6 + $0x6a0] sm:$0xff]
    %v3447 = vld [vmem:[#allocation6 + $0x6a8] sm:$0xff]
    %v3448 = vld [vmem:[#allocation6 + $0x6b0] sm:$0xff]
    %v3449 = vld [vmem:[#allocation6 + $0x6b8] sm:$0xff]
    %v3450 = vld [vmem:[#allocation6 + $0x6c0] sm:$0xff]
    %v3451 = vld [vmem:[#allocation6 + $0x6c8] sm:$0xff]
    %v3452 = vld [vmem:[#allocation6 + $0x6d0] sm:$0xff]
    %v3453 = vld [vmem:[#allocation6 + $0x6d8] sm:$0xff]
    %v3454 = vld [vmem:[#allocation6 + $0x6e0] sm:$0xff]
    %v3455 = vld [vmem:[#allocation6 + $0x6e8] sm:$0xff]
    %v3456 = vld [vmem:[#allocation6 + $0x6f0] sm:$0xff]
    %v3457 = vld [vmem:[#allocation6 + $0x6f8] sm:$0xff]
    %v3458 = vld [vmem:[#allocation6 + $0x700] sm:$0xff]
    %v3459 = vld [vmem:[#allocation6 + $0x708] sm:$0xff]
    %v3460 = vld [vmem:[#allocation6 + $0x710] sm:$0xff]
    %v3461 = vld [vmem:[#allocation6 + $0x718] sm:$0xff]
    %v3462 = vld [vmem:[#allocation6 + $0x720] sm:$0xff]
    %v3463 = vld [vmem:[#allocation6 + $0x728] sm:$0xff]
    %v3464 = vld [vmem:[#allocation6 + $0x730] sm:$0xff]
    %v3465 = vld [vmem:[#allocation6 + $0x738] sm:$0xff]
    %v3466 = vld [vmem:[#allocation6 + $0x740] sm:$0xff]
    %v3467 = vld [vmem:[#allocation6 + $0x748] sm:$0xff]
    %v3468 = vld [vmem:[#allocation6 + $0x750] sm:$0xff]
    %v3469 = vld [vmem:[#allocation6 + $0x758] sm:$0xff]
    %v3470 = vld [vmem:[#allocation6 + $0x760] sm:$0xff]
    %v3471 = vld [vmem:[#allocation6 + $0x768] sm:$0xff]
    %v3472 = vld [vmem:[#allocation6 + $0x770] sm:$0xff]
    %v3473 = vld [vmem:[#allocation6 + $0x778] sm:$0xff]
    %v3474 = vld [vmem:[#allocation6 + $0x780] sm:$0xff]
    %v3475 = vld [vmem:[#allocation6 + $0x788] sm:$0xff]
    %v3476 = vld [vmem:[#allocation6 + $0x790] sm:$0xff]
    %v3477 = vld [vmem:[#allocation6 + $0x798] sm:$0xff]
    %v3478 = vld [vmem:[#allocation6 + $0x7a0] sm:$0xff]
    %v3479 = vld [vmem:[#allocation6 + $0x7a8] sm:$0xff]
    %v3480 = vld [vmem:[#allocation6 + $0x7b0] sm:$0xff]
    %v3481 = vld [vmem:[#allocation6 + $0x7b8] sm:$0xff]
    %v3482 = vld [vmem:[#allocation6 + $0x7c0] sm:$0xff]
    %v3483 = vld [vmem:[#allocation6 + $0x7c8] sm:$0xff]
    %v3484 = vld [vmem:[#allocation6 + $0x7d0] sm:$0xff]
    %v3485 = vld [vmem:[#allocation6 + $0x7d8] sm:$0xff]
    %v3486 = vld [vmem:[#allocation6 + $0x7e0] sm:$0xff]
    %v3487 = vld [vmem:[#allocation6 + $0x7e8] sm:$0xff]
    %v3488 = vld [vmem:[#allocation6 + $0x7f0] sm:$0xff]
    %v3489 = vld [vmem:[#allocation6 + $0x7f8] sm:$0xff]
    %v3490 = vld [vmem:[#allocation6 + $0x800] sm:$0xff]
    %v3491 = vld [vmem:[#allocation6 + $0x808] sm:$0xff]
    %v3492 = vld [vmem:[#allocation6 + $0x810] sm:$0xff]
    %v3493 = vld [vmem:[#allocation6 + $0x818] sm:$0xff]
    %v3494 = vld [vmem:[#allocation6 + $0x820] sm:$0xff]
    %v3495 = vld [vmem:[#allocation6 + $0x828] sm:$0xff]
    %v3496 = vld [vmem:[#allocation6 + $0x830] sm:$0xff]
    %v3497 = vld [vmem:[#allocation6 + $0x838] sm:$0xff]
    %v3498 = vld [vmem:[#allocation6 + $0x840] sm:$0xff]
    %v3499 = vld [vmem:[#allocation6 + $0x848] sm:$0xff]
    %v3500 = vld [vmem:[#allocation6 + $0x850] sm:$0xff]
    %v3501 = vld [vmem:[#allocation6 + $0x858] sm:$0xff]
    %v3502 = vld [vmem:[#allocation6 + $0x860] sm:$0xff]
    %v3503 = vld [vmem:[#allocation6 + $0x868] sm:$0xff]
    %v3504 = vld [vmem:[#allocation6 + $0x870] sm:$0xff]
    %v3505 = vld [vmem:[#allocation6 + $0x878] sm:$0xff]
    %v3506 = vld [vmem:[#allocation6 + $0x880] sm:$0xff]
    %v3507 = vld [vmem:[#allocation6 + $0x888] sm:$0xff]
    %v3508 = vld [vmem:[#allocation6 + $0x890] sm:$0xff]
    %v3509 = vld [vmem:[#allocation6 + $0x898] sm:$0xff]
    %v3510 = vld [vmem:[#allocation6 + $0x8a0] sm:$0xff]
    %v3511 = vld [vmem:[#allocation6 + $0x8a8] sm:$0xff]
    %v3512 = vld [vmem:[#allocation6 + $0x8b0] sm:$0xff]
    %v3513 = vld [vmem:[#allocation6 + $0x8b8] sm:$0xff]
    %v3514 = vld [vmem:[#allocation6 + $0x8c0] sm:$0xff]
    %v3515 = vld [vmem:[#allocation6 + $0x8c8] sm:$0xff]
    %v3516 = vld [vmem:[#allocation6 + $0x8d0] sm:$0xff]
    %v3517 = vld [vmem:[#allocation6 + $0x8d8] sm:$0xff]
    %v3518 = vld [vmem:[#allocation6 + $0x8e0] sm:$0xff]
    %v3519 = vld [vmem:[#allocation6 + $0x8e8] sm:$0xff]
    %v3520 = vld [vmem:[#allocation6 + $0x8f0] sm:$0xff]
    %v3521 = vld [vmem:[#allocation6 + $0x8f8] sm:$0xff]
    %v3522 = vld [vmem:[#allocation6 + $0x900] sm:$0xff]
    %v3523 = vld [vmem:[#allocation6 + $0x908] sm:$0xff]
    %v3524 = vld [vmem:[#allocation6 + $0x910] sm:$0xff]
    %v3525 = vld [vmem:[#allocation6 + $0x918] sm:$0xff]
    %v3526 = vld [vmem:[#allocation6 + $0x920] sm:$0xff]
    %v3527 = vld [vmem:[#allocation6 + $0x928] sm:$0xff]
    %v3528 = vld [vmem:[#allocation6 + $0x930] sm:$0xff]
    %v3529 = vld [vmem:[#allocation6 + $0x938] sm:$0xff]
    %v3530 = vld [vmem:[#allocation6 + $0x940] sm:$0xff]
    %v3531 = vld [vmem:[#allocation6 + $0x948] sm:$0xff]
    %v3532 = vld [vmem:[#allocation6 + $0x950] sm:$0xff]
    %v3533 = vld [vmem:[#allocation6 + $0x958] sm:$0xff]
    %v3534 = vld [vmem:[#allocation6 + $0x960] sm:$0xff]
    %v3535 = vld [vmem:[#allocation6 + $0x968] sm:$0xff]
    %v3536 = vld [vmem:[#allocation6 + $0x970] sm:$0xff]
    %v3537 = vld [vmem:[#allocation6 + $0x978] sm:$0xff]
    %v3538 = vld [vmem:[#allocation6 + $0x980] sm:$0xff]
    %v3539 = vld [vmem:[#allocation6 + $0x988] sm:$0xff]
    %v3540 = vld [vmem:[#allocation6 + $0x990] sm:$0xff]
    %v3541 = vld [vmem:[#allocation6 + $0x998] sm:$0xff]
    %v3542 = vld [vmem:[#allocation6 + $0x9a0] sm:$0xff]
    %v3543 = vld [vmem:[#allocation6 + $0x9a8] sm:$0xff]
    %v3544 = vld [vmem:[#allocation6 + $0x9b0] sm:$0xff]
    %v3545 = vld [vmem:[#allocation6 + $0x9b8] sm:$0xff]
    %v3546 = vld [vmem:[#allocation6 + $0x9c0] sm:$0xff]
    %v3547 = vld [vmem:[#allocation6 + $0x9c8] sm:$0xff]
    %v3548 = vld [vmem:[#allocation6 + $0x9d0] sm:$0xff]
    %v3549 = vld [vmem:[#allocation6 + $0x9d8] sm:$0xff]
    %v3550 = vld [vmem:[#allocation6 + $0x9e0] sm:$0xff]
    %v3551 = vld [vmem:[#allocation6 + $0x9e8] sm:$0xff]
    %v3552 = vld [vmem:[#allocation6 + $0x9f0] sm:$0xff]
    %v3553 = vld [vmem:[#allocation6 + $0x9f8] sm:$0xff]
    %v3554 = vld [vmem:[#allocation6 + $0xa00] sm:$0xff]
    %v3555 = vld [vmem:[#allocation6 + $0xa08] sm:$0xff]
    %v3556 = vld [vmem:[#allocation6 + $0xa10] sm:$0xff]
    %v3557 = vld [vmem:[#allocation6 + $0xa18] sm:$0xff]
    %v3558 = vld [vmem:[#allocation6 + $0xa20] sm:$0xff]
    %v3559 = vld [vmem:[#allocation6 + $0xa28] sm:$0xff]
    %v3560 = vld [vmem:[#allocation6 + $0xa30] sm:$0xff]
    %v3561 = vld [vmem:[#allocation6 + $0xa38] sm:$0xff]
    %v3562 = vld [vmem:[#allocation6 + $0xa40] sm:$0xff]
    %v3563 = vld [vmem:[#allocation6 + $0xa48] sm:$0xff]
    %v3564 = vld [vmem:[#allocation6 + $0xa50] sm:$0xff]
    %v3565 = vld [vmem:[#allocation6 + $0xa58] sm:$0xff]
    %v3566 = vld [vmem:[#allocation6 + $0xa60] sm:$0xff]
    %v3567 = vld [vmem:[#allocation6 + $0xa68] sm:$0xff]
    %v3568 = vld [vmem:[#allocation6 + $0xa70] sm:$0xff]
    %v3569 = vld [vmem:[#allocation6 + $0xa78] sm:$0xff]
    %v3570 = vld [vmem:[#allocation6 + $0xa80] sm:$0xff]
    %v3571 = vld [vmem:[#allocation6 + $0xa88] sm:$0xff]
    %v3572 = vld [vmem:[#allocation6 + $0xa90] sm:$0xff]
    %v3573 = vld [vmem:[#allocation6 + $0xa98] sm:$0xff]
    %v3574 = vld [vmem:[#allocation6 + $0xaa0] sm:$0xff]
    %v3575 = vld [vmem:[#allocation6 + $0xaa8] sm:$0xff]
    %v3576 = vld [vmem:[#allocation6 + $0xab0] sm:$0xff]
    %v3577 = vld [vmem:[#allocation6 + $0xab8] sm:$0xff]
    %v3578 = vld [vmem:[#allocation6 + $0xac0] sm:$0xff]
    %v3579 = vld [vmem:[#allocation6 + $0xac8] sm:$0xff]
    %v3580 = vld [vmem:[#allocation6 + $0xad0] sm:$0xff]
    %v3581 = vld [vmem:[#allocation6 + $0xad8] sm:$0xff]
    %v3582 = vld [vmem:[#allocation6 + $0xae0] sm:$0xff]
    %v3583 = vld [vmem:[#allocation6 + $0xae8] sm:$0xff]
    %v3584 = vld [vmem:[#allocation6 + $0xaf0] sm:$0xff]
    %v3585 = vld [vmem:[#allocation6 + $0xaf8] sm:$0xff]
    %v3586 = vld [vmem:[#allocation6 + $0xb00] sm:$0xff]
    %v3587 = vld [vmem:[#allocation6 + $0xb08] sm:$0xff]
    %v3588 = vld [vmem:[#allocation6 + $0xb10] sm:$0xff]
    %v3589 = vld [vmem:[#allocation6 + $0xb18] sm:$0xff]
    %v3590 = vld [vmem:[#allocation6 + $0xb20] sm:$0xff]
    %v3591 = vld [vmem:[#allocation6 + $0xb28] sm:$0xff]
    %v3592 = vld [vmem:[#allocation6 + $0xb30] sm:$0xff]
    %v3593 = vld [vmem:[#allocation6 + $0xb38] sm:$0xff]
    %v3594 = vld [vmem:[#allocation6 + $0xb40] sm:$0xff]
    %v3595 = vld [vmem:[#allocation6 + $0xb48] sm:$0xff]
    %v3596 = vld [vmem:[#allocation6 + $0xb50] sm:$0xff]
    %v3597 = vld [vmem:[#allocation6 + $0xb58] sm:$0xff]
    %v3598 = vld [vmem:[#allocation6 + $0xb60] sm:$0xff]
    %v3599 = vld [vmem:[#allocation6 + $0xb68] sm:$0xff]
    %v3600 = vld [vmem:[#allocation6 + $0xb70] sm:$0xff]
    %v3601 = vld [vmem:[#allocation6 + $0xb78] sm:$0xff]
    %v3602 = vld [vmem:[#allocation6 + $0xb80] sm:$0xff]
    %v3603 = vld [vmem:[#allocation6 + $0xb88] sm:$0xff]
    %v3604 = vld [vmem:[#allocation6 + $0xb90] sm:$0xff]
    %v3605 = vld [vmem:[#allocation6 + $0xb98] sm:$0xff]
    %v3606 = vld [vmem:[#allocation6 + $0xba0] sm:$0xff]
    %v3607 = vld [vmem:[#allocation6 + $0xba8] sm:$0xff]
    %v3608 = vld [vmem:[#allocation6 + $0xbb0] sm:$0xff]
    %v3609 = vld [vmem:[#allocation6 + $0xbb8] sm:$0xff]
    %v3610 = vld [vmem:[#allocation6 + $0xbc0] sm:$0xff]
    %v3611 = vld [vmem:[#allocation6 + $0xbc8] sm:$0xff]
    %v3612 = vld [vmem:[#allocation6 + $0xbd0] sm:$0xff]
    %v3613 = vld [vmem:[#allocation6 + $0xbd8] sm:$0xff]
    %v3614 = vld [vmem:[#allocation6 + $0xbe0] sm:$0xff]
    %v3615 = vld [vmem:[#allocation6 + $0xbe8] sm:$0xff]
    %v3616 = vld [vmem:[#allocation6 + $0xbf0] sm:$0xff]
    %v3617 = vld [vmem:[#allocation6 + $0xbf8] sm:$0xff]
    %v3618 = vld [vmem:[#allocation6 + $0xc00] sm:$0xff]
    %v3619 = vld [vmem:[#allocation6 + $0xc08] sm:$0xff]
    %v3620 = vld [vmem:[#allocation6 + $0xc10] sm:$0xff]
    %v3621 = vld [vmem:[#allocation6 + $0xc18] sm:$0xff]
    %v3622 = vld [vmem:[#allocation6 + $0xc20] sm:$0xff]
    %v3623 = vld [vmem:[#allocation6 + $0xc28] sm:$0xff]
    %v3624 = vld [vmem:[#allocation6 + $0xc30] sm:$0xff]
    %v3625 = vld [vmem:[#allocation6 + $0xc38] sm:$0xff]
    %v3626 = vld [vmem:[#allocation6 + $0xc40] sm:$0xff]
    %v3627 = vld [vmem:[#allocation6 + $0xc48] sm:$0xff]
    %v3628 = vld [vmem:[#allocation6 + $0xc50] sm:$0xff]
    %v3629 = vld [vmem:[#allocation6 + $0xc58] sm:$0xff]
    %v3630 = vld [vmem:[#allocation6 + $0xc60] sm:$0xff]
    %v3631 = vld [vmem:[#allocation6 + $0xc68] sm:$0xff]
    %v3632 = vld [vmem:[#allocation6 + $0xc70] sm:$0xff]
    %v3633 = vld [vmem:[#allocation6 + $0xc78] sm:$0xff]
    %v3634 = vld [vmem:[#allocation6 + $0xc80] sm:$0xff]
    %v3635 = vld [vmem:[#allocation6 + $0xc88] sm:$0xff]
    %v3636 = vld [vmem:[#allocation6 + $0xc90] sm:$0xff]
    %v3637 = vld [vmem:[#allocation6 + $0xc98] sm:$0xff]
    %v3638 = vld [vmem:[#allocation6 + $0xca0] sm:$0xff]
    %v3639 = vld [vmem:[#allocation6 + $0xca8] sm:$0xff]
    %v3640 = vld [vmem:[#allocation6 + $0xcb0] sm:$0xff]
    %v3641 = vld [vmem:[#allocation6 + $0xcb8] sm:$0xff]
    %v3642 = vld [vmem:[#allocation6 + $0xcc0] sm:$0xff]
    %v3643 = vld [vmem:[#allocation6 + $0xcc8] sm:$0xff]
    %v3644 = vld [vmem:[#allocation6 + $0xcd0] sm:$0xff]
    %v3645 = vld [vmem:[#allocation6 + $0xcd8] sm:$0xff]
    %v3646 = vld [vmem:[#allocation6 + $0xce0] sm:$0xff]
    %v3647 = vld [vmem:[#allocation6 + $0xce8] sm:$0xff]
    %v3648 = vld [vmem:[#allocation6 + $0xcf0] sm:$0xff]
    %v3649 = vld [vmem:[#allocation6 + $0xcf8] sm:$0xff]
    %v3650 = vld [vmem:[#allocation6 + $0xd00] sm:$0xff]
    %v3651 = vld [vmem:[#allocation6 + $0xd08] sm:$0xff]
    %v3652 = vld [vmem:[#allocation6 + $0xd10] sm:$0xff]
    %v3653 = vld [vmem:[#allocation6 + $0xd18] sm:$0xff]
    %v3654 = vld [vmem:[#allocation6 + $0xd20] sm:$0xff]
    %v3655 = vld [vmem:[#allocation6 + $0xd28] sm:$0xff]
    %v3656 = vld [vmem:[#allocation6 + $0xd30] sm:$0xff]
    %v3657 = vld [vmem:[#allocation6 + $0xd38] sm:$0xff]
    %v3658 = vld [vmem:[#allocation6 + $0xd40] sm:$0xff]
    %v3659 = vld [vmem:[#allocation6 + $0xd48] sm:$0xff]
    %v3660 = vld [vmem:[#allocation6 + $0xd50] sm:$0xff]
    %v3661 = vld [vmem:[#allocation6 + $0xd58] sm:$0xff]
    %v3662 = vld [vmem:[#allocation6 + $0xd60] sm:$0xff]
    %v3663 = vld [vmem:[#allocation6 + $0xd68] sm:$0xff]
    %v3664 = vld [vmem:[#allocation6 + $0xd70] sm:$0xff]
    %v3665 = vld [vmem:[#allocation6 + $0xd78] sm:$0xff]
    %v3666 = vld [vmem:[#allocation6 + $0xd80] sm:$0xff]
    %v3667 = vld [vmem:[#allocation6 + $0xd88] sm:$0xff]
    %v3668 = vld [vmem:[#allocation6 + $0xd90] sm:$0xff]
    %v3669 = vld [vmem:[#allocation6 + $0xd98] sm:$0xff]
    %v3670 = vld [vmem:[#allocation6 + $0xda0] sm:$0xff]
    %v3671 = vld [vmem:[#allocation6 + $0xda8] sm:$0xff]
    %v3672 = vld [vmem:[#allocation6 + $0xdb0] sm:$0xff]
    %v3673 = vld [vmem:[#allocation6 + $0xdb8] sm:$0xff]
    %v3674 = vld [vmem:[#allocation6 + $0xdc0] sm:$0xff]
    %v3675 = vld [vmem:[#allocation6 + $0xdc8] sm:$0xff]
    %v3676 = vld [vmem:[#allocation6 + $0xdd0] sm:$0xff]
    %v3677 = vld [vmem:[#allocation6 + $0xdd8] sm:$0xff]
    %v3678 = vld [vmem:[#allocation6 + $0xde0] sm:$0xff]
    %v3679 = vld [vmem:[#allocation6 + $0xde8] sm:$0xff]
    %v3680 = vld [vmem:[#allocation6 + $0xdf0] sm:$0xff]
    %v3681 = vld [vmem:[#allocation6 + $0xdf8] sm:$0xff]
    %v3682 = vld [vmem:[#allocation6 + $0xe00] sm:$0xff]
    %v3683 = vld [vmem:[#allocation6 + $0xe08] sm:$0xff]
    %v3684 = vld [vmem:[#allocation6 + $0xe10] sm:$0xff]
    %v3685 = vld [vmem:[#allocation6 + $0xe18] sm:$0xff]
    %v3686 = vld [vmem:[#allocation6 + $0xe20] sm:$0xff]
    %v3687 = vld [vmem:[#allocation6 + $0xe28] sm:$0xff]
    %v3688 = vld [vmem:[#allocation6 + $0xe30] sm:$0xff]
    %v3689 = vld [vmem:[#allocation6 + $0xe38] sm:$0xff]
    %v3690 = vld [vmem:[#allocation6 + $0xe40] sm:$0xff]
    %v3691 = vld [vmem:[#allocation6 + $0xe48] sm:$0xff]
    %v3692 = vld [vmem:[#allocation6 + $0xe50] sm:$0xff]
    %v3693 = vld [vmem:[#allocation6 + $0xe58] sm:$0xff]
    %v3694 = vld [vmem:[#allocation6 + $0xe60] sm:$0xff]
    %v3695 = vld [vmem:[#allocation6 + $0xe68] sm:$0xff]
    %v3696 = vld [vmem:[#allocation6 + $0xe70] sm:$0xff]
    %v3697 = vld [vmem:[#allocation6 + $0xe78] sm:$0xff]
    %v3698 = vld [vmem:[#allocation6 + $0xe80] sm:$0xff]
    %v3699 = vld [vmem:[#allocation6 + $0xe88] sm:$0xff]
    %v3700 = vld [vmem:[#allocation6 + $0xe90] sm:$0xff]
    %v3701 = vld [vmem:[#allocation6 + $0xe98] sm:$0xff]
    %v3702 = vld [vmem:[#allocation6 + $0xea0] sm:$0xff]
    %v3703 = vld [vmem:[#allocation6 + $0xea8] sm:$0xff]
    %v3704 = vld [vmem:[#allocation6 + $0xeb0] sm:$0xff]
    %v3705 = vld [vmem:[#allocation6 + $0xeb8] sm:$0xff]
    %v3706 = vld [vmem:[#allocation6 + $0xec0] sm:$0xff]
    %v3707 = vld [vmem:[#allocation6 + $0xec8] sm:$0xff]
    %v3708 = vld [vmem:[#allocation6 + $0xed0] sm:$0xff]
    %v3709 = vld [vmem:[#allocation6 + $0xed8] sm:$0xff]
    %v3710 = vld [vmem:[#allocation6 + $0xee0] sm:$0xff]
    %v3711 = vld [vmem:[#allocation6 + $0xee8] sm:$0xff]
    %v3712 = vld [vmem:[#allocation6 + $0xef0] sm:$0xff]
    %v3713 = vld [vmem:[#allocation6 + $0xef8] sm:$0xff]
    %v3714 = vld [vmem:[#allocation6 + $0xf00] sm:$0xff]
    %v3715 = vld [vmem:[#allocation6 + $0xf08] sm:$0xff]
    %v3716 = vld [vmem:[#allocation6 + $0xf10] sm:$0xff]
    %v3717 = vld [vmem:[#allocation6 + $0xf18] sm:$0xff]
    %v3718 = vld [vmem:[#allocation6 + $0xf20] sm:$0xff]
    %v3719 = vld [vmem:[#allocation6 + $0xf28] sm:$0xff]
    %v3720 = vld [vmem:[#allocation6 + $0xf30] sm:$0xff]
    %v3721 = vld [vmem:[#allocation6 + $0xf38] sm:$0xff]
    %v3722 = vld [vmem:[#allocation6 + $0xf40] sm:$0xff]
    %v3723 = vld [vmem:[#allocation6 + $0xf48] sm:$0xff]
    %v3724 = vld [vmem:[#allocation6 + $0xf50] sm:$0xff]
    %v3725 = vld [vmem:[#allocation6 + $0xf58] sm:$0xff]
    %v3726 = vld [vmem:[#allocation6 + $0xf60] sm:$0xff]
    %v3727 = vld [vmem:[#allocation6 + $0xf68] sm:$0xff]
    %v3728 = vld [vmem:[#allocation6 + $0xf70] sm:$0xff]
    %v3729 = vld [vmem:[#allocation6 + $0xf78] sm:$0xff]
    %v3730 = vld [vmem:[#allocation6 + $0xf80] sm:$0xff]
    %v3731 = vld [vmem:[#allocation6 + $0xf88] sm:$0xff]
    %v3732 = vld [vmem:[#allocation6 + $0xf90] sm:$0xff]
    %v3733 = vld [vmem:[#allocation6 + $0xf98] sm:$0xff]
    %v3734 = vld [vmem:[#allocation6 + $0xfa0] sm:$0xff]
    %v3735 = vld [vmem:[#allocation6 + $0xfa8] sm:$0xff]
    %v3736 = vld [vmem:[#allocation6 + $0xfb0] sm:$0xff]
    %v3737 = vld [vmem:[#allocation6 + $0xfb8] sm:$0xff]
    %v3738 = vld [vmem:[#allocation6 + $0xfc0] sm:$0xff]
    %v3739 = vld [vmem:[#allocation6 + $0xfc8] sm:$0xff]
    %v3740 = vld [vmem:[#allocation6 + $0xfd0] sm:$0xff]
    %v3741 = vld [vmem:[#allocation6 + $0xfd8] sm:$0xff]
    %v3742 = vld [vmem:[#allocation6 + $0xfe0] sm:$0xff]
    %v3743 = vld [vmem:[#allocation6 + $0xfe8] sm:$0xff]
    %v3744 = vld [vmem:[#allocation6 + $0xff0] sm:$0xff]
    %v3745 = vld [vmem:[#allocation6 + $0xff8] sm:$0xff]
    %v3746 = vld [vmem:[#allocation7] sm:$0xff]
    %v3748 = vlaneseq
    %v3749 = vshrl.u32 %v3748, 7
    %v3750 = vsub.s32 0, %v3749
    %v3751 = vrot.slane %v3746, %v3750
    %v3752 = vlaneseq
    %v3753 = vshrl.u32 %v3752, 7
    %v3754 = vsub.s32 1, %v3753
    %v3755 = vrot.slane %v3746, %v3754
    %v3756 = vlaneseq
    %v3757 = vshrl.u32 %v3756, 7
    %v3758 = vsub.s32 2, %v3757
    %v3759 = vrot.slane %v3746, %v3758
    %v3760 = vlaneseq
    %v3761 = vshrl.u32 %v3760, 7
    %v3762 = vsub.s32 3, %v3761
    %v3763 = vrot.slane %v3746, %v3762
    %v3764 = vlaneseq
    %v3765 = vshrl.u32 %v3764, 7
    %v3766 = vsub.s32 4, %v3765
    %v3767 = vrot.slane %v3746, %v3766
    %v3768 = vlaneseq
    %v3769 = vshrl.u32 %v3768, 7
    %v3770 = vsub.s32 5, %v3769
    %v3771 = vrot.slane %v3746, %v3770
    %v3772 = vlaneseq
    %v3773 = vshrl.u32 %v3772, 7
    %v3774 = vsub.s32 6, %v3773
    %v3775 = vrot.slane %v3746, %v3774
    %v3776 = vlaneseq
    %v3777 = vshrl.u32 %v3776, 7
    %v3778 = vsub.s32 7, %v3777
    %v3779 = vrot.slane %v3746, %v3778
    %v4300 = vunpack.c.l.b16 %v3234
    %v4301 = vunpack.c.h.b16 %v3234
    %v4302 = vunpack.c.l.b16 %v3235
    %v4303 = vunpack.c.h.b16 %v3235
    %v4304 = vunpack.c.l.b16 %v3236
    %v4305 = vunpack.c.h.b16 %v3236
    %v4306 = vunpack.c.l.b16 %v3237
    %v4307 = vunpack.c.h.b16 %v3237
    %v4308 = vunpack.c.l.b16 %v3238
    %v4309 = vunpack.c.h.b16 %v3238
    %v4310 = vunpack.c.l.b16 %v3239
    %v4311 = vunpack.c.h.b16 %v3239
    %v4312 = vunpack.c.l.b16 %v3240
    %v4313 = vunpack.c.h.b16 %v3240
    %v4314 = vunpack.c.l.b16 %v3241
    %v4315 = vunpack.c.h.b16 %v3241
    %v4316 = vunpack.c.l.b16 %v3242
    %v4317 = vunpack.c.h.b16 %v3242
    %v4318 = vunpack.c.l.b16 %v3243
    %v4319 = vunpack.c.h.b16 %v3243
    %v4320 = vunpack.c.l.b16 %v3244
    %v4321 = vunpack.c.h.b16 %v3244
    %v4322 = vunpack.c.l.b16 %v3245
    %v4323 = vunpack.c.h.b16 %v3245
    %v4324 = vunpack.c.l.b16 %v3246
    %v4325 = vunpack.c.h.b16 %v3246
    %v4326 = vunpack.c.l.b16 %v3247
    %v4327 = vunpack.c.h.b16 %v3247
    %v4328 = vunpack.c.l.b16 %v3248
    %v4329 = vunpack.c.h.b16 %v3248
    %v4330 = vunpack.c.l.b16 %v3249
    %v4331 = vunpack.c.h.b16 %v3249
    %v4332 = vunpack.c.l.b16 %v3250
    %v4333 = vunpack.c.h.b16 %v3250
    %v4334 = vunpack.c.l.b16 %v3251
    %v4335 = vunpack.c.h.b16 %v3251
    %v4336 = vunpack.c.l.b16 %v3252
    %v4337 = vunpack.c.h.b16 %v3252
    %v4338 = vunpack.c.l.b16 %v3253
    %v4339 = vunpack.c.h.b16 %v3253
    %v4340 = vunpack.c.l.b16 %v3254
    %v4341 = vunpack.c.h.b16 %v3254
    %v4342 = vunpack.c.l.b16 %v3255
    %v4343 = vunpack.c.h.b16 %v3255
    %v4344 = vunpack.c.l.b16 %v3256
    %v4345 = vunpack.c.h.b16 %v3256
    %v4346 = vunpack.c.l.b16 %v3257
    %v4347 = vunpack.c.h.b16 %v3257
    %v4348 = vunpack.c.l.b16 %v3258
    %v4349 = vunpack.c.h.b16 %v3258
    %v4350 = vunpack.c.l.b16 %v3259
    %v4351 = vunpack.c.h.b16 %v3259
    %v4352 = vunpack.c.l.b16 %v3260
    %v4353 = vunpack.c.h.b16 %v3260
    %v4354 = vunpack.c.l.b16 %v3261
    %v4355 = vunpack.c.h.b16 %v3261
    %v4356 = vunpack.c.l.b16 %v3262
    %v4357 = vunpack.c.h.b16 %v3262
    %v4358 = vunpack.c.l.b16 %v3263
    %v4359 = vunpack.c.h.b16 %v3263
    %v4360 = vunpack.c.l.b16 %v3264
    %v4361 = vunpack.c.h.b16 %v3264
    %v4362 = vunpack.c.l.b16 %v3265
    %v4363 = vunpack.c.h.b16 %v3265
    %v4364 = vunpack.c.l.b16 %v3266
    %v4365 = vunpack.c.h.b16 %v3266
    %v4366 = vunpack.c.l.b16 %v3267
    %v4367 = vunpack.c.h.b16 %v3267
    %v4368 = vunpack.c.l.b16 %v3268
    %v4369 = vunpack.c.h.b16 %v3268
    %v4370 = vunpack.c.l.b16 %v3269
    %v4371 = vunpack.c.h.b16 %v3269
    %v4372 = vunpack.c.l.b16 %v3270
    %v4373 = vunpack.c.h.b16 %v3270
    %v4374 = vunpack.c.l.b16 %v3271
    %v4375 = vunpack.c.h.b16 %v3271
    %v4376 = vunpack.c.l.b16 %v3272
    %v4377 = vunpack.c.h.b16 %v3272
    %v4378 = vunpack.c.l.b16 %v3273
    %v4379 = vunpack.c.h.b16 %v3273
    %v4380 = vunpack.c.l.b16 %v3274
    %v4381 = vunpack.c.h.b16 %v3274
    %v4382 = vunpack.c.l.b16 %v3275
    %v4383 = vunpack.c.h.b16 %v3275
    %v4384 = vunpack.c.l.b16 %v3276
    %v4385 = vunpack.c.h.b16 %v3276
    %v4386 = vunpack.c.l.b16 %v3277
    %v4387 = vunpack.c.h.b16 %v3277
    %v4388 = vunpack.c.l.b16 %v3278
    %v4389 = vunpack.c.h.b16 %v3278
    %v4390 = vunpack.c.l.b16 %v3279
    %v4391 = vunpack.c.h.b16 %v3279
    %v4392 = vunpack.c.l.b16 %v3280
    %v4393 = vunpack.c.h.b16 %v3280
    %v4394 = vunpack.c.l.b16 %v3281
    %v4395 = vunpack.c.h.b16 %v3281
    %v4396 = vunpack.c.l.b16 %v3282
    %v4397 = vunpack.c.h.b16 %v3282
    %v4398 = vunpack.c.l.b16 %v3283
    %v4399 = vunpack.c.h.b16 %v3283
    %v4400 = vunpack.c.l.b16 %v3284
    %v4401 = vunpack.c.h.b16 %v3284
    %v4402 = vunpack.c.l.b16 %v3285
    %v4403 = vunpack.c.h.b16 %v3285
    %v4404 = vunpack.c.l.b16 %v3286
    %v4405 = vunpack.c.h.b16 %v3286
    %v4406 = vunpack.c.l.b16 %v3287
    %v4407 = vunpack.c.h.b16 %v3287
    %v4408 = vunpack.c.l.b16 %v3288
    %v4409 = vunpack.c.h.b16 %v3288
    %v4410 = vunpack.c.l.b16 %v3289
    %v4411 = vunpack.c.h.b16 %v3289
    %v4412 = vunpack.c.l.b16 %v3290
    %v4413 = vunpack.c.h.b16 %v3290
    %v4414 = vunpack.c.l.b16 %v3291
    %v4415 = vunpack.c.h.b16 %v3291
    %v4416 = vunpack.c.l.b16 %v3292
    %v4417 = vunpack.c.h.b16 %v3292
    %v4418 = vunpack.c.l.b16 %v3293
    %v4419 = vunpack.c.h.b16 %v3293
    %v4420 = vunpack.c.l.b16 %v3294
    %v4421 = vunpack.c.h.b16 %v3294
    %v4422 = vunpack.c.l.b16 %v3295
    %v4423 = vunpack.c.h.b16 %v3295
    %v4424 = vunpack.c.l.b16 %v3296
    %v4425 = vunpack.c.h.b16 %v3296
    %v4426 = vunpack.c.l.b16 %v3297
    %v4427 = vunpack.c.h.b16 %v3297
    %v4428 = vunpack.c.l.b16 %v3298
    %v4429 = vunpack.c.h.b16 %v3298
    %v4430 = vunpack.c.l.b16 %v3299
    %v4431 = vunpack.c.h.b16 %v3299
    %v4432 = vunpack.c.l.b16 %v3300
    %v4433 = vunpack.c.h.b16 %v3300
    %v4434 = vunpack.c.l.b16 %v3301
    %v4435 = vunpack.c.h.b16 %v3301
    %v4436 = vunpack.c.l.b16 %v3302
    %v4437 = vunpack.c.h.b16 %v3302
    %v4438 = vunpack.c.l.b16 %v3303
    %v4439 = vunpack.c.h.b16 %v3303
    %v4440 = vunpack.c.l.b16 %v3304
    %v4441 = vunpack.c.h.b16 %v3304
    %v4442 = vunpack.c.l.b16 %v3305
    %v4443 = vunpack.c.h.b16 %v3305
    %v4444 = vunpack.c.l.b16 %v3306
    %v4445 = vunpack.c.h.b16 %v3306
    %v4446 = vunpack.c.l.b16 %v3307
    %v4447 = vunpack.c.h.b16 %v3307
    %v4448 = vunpack.c.l.b16 %v3308
    %v4449 = vunpack.c.h.b16 %v3308
    %v4450 = vunpack.c.l.b16 %v3309
    %v4451 = vunpack.c.h.b16 %v3309
    %v4452 = vunpack.c.l.b16 %v3310
    %v4453 = vunpack.c.h.b16 %v3310
    %v4454 = vunpack.c.l.b16 %v3311
    %v4455 = vunpack.c.h.b16 %v3311
    %v4456 = vunpack.c.l.b16 %v3312
    %v4457 = vunpack.c.h.b16 %v3312
    %v4458 = vunpack.c.l.b16 %v3313
    %v4459 = vunpack.c.h.b16 %v3313
    %v4460 = vunpack.c.l.b16 %v3314
    %v4461 = vunpack.c.h.b16 %v3314
    %v4462 = vunpack.c.l.b16 %v3315
    %v4463 = vunpack.c.h.b16 %v3315
    %v4464 = vunpack.c.l.b16 %v3316
    %v4465 = vunpack.c.h.b16 %v3316
    %v4466 = vunpack.c.l.b16 %v3317
    %v4467 = vunpack.c.h.b16 %v3317
    %v4468 = vunpack.c.l.b16 %v3318
    %v4469 = vunpack.c.h.b16 %v3318
    %v4470 = vunpack.c.l.b16 %v3319
    %v4471 = vunpack.c.h.b16 %v3319
    %v4472 = vunpack.c.l.b16 %v3320
    %v4473 = vunpack.c.h.b16 %v3320
    %v4474 = vunpack.c.l.b16 %v3321
    %v4475 = vunpack.c.h.b16 %v3321
    %v4476 = vunpack.c.l.b16 %v3322
    %v4477 = vunpack.c.h.b16 %v3322
    %v4478 = vunpack.c.l.b16 %v3323
    %v4479 = vunpack.c.h.b16 %v3323
    %v4480 = vunpack.c.l.b16 %v3324
    %v4481 = vunpack.c.h.b16 %v3324
    %v4482 = vunpack.c.l.b16 %v3325
    %v4483 = vunpack.c.h.b16 %v3325
    %v4484 = vunpack.c.l.b16 %v3326
    %v4485 = vunpack.c.h.b16 %v3326
    %v4486 = vunpack.c.l.b16 %v3327
    %v4487 = vunpack.c.h.b16 %v3327
    %v4488 = vunpack.c.l.b16 %v3328
    %v4489 = vunpack.c.h.b16 %v3328
    %v4490 = vunpack.c.l.b16 %v3329
    %v4491 = vunpack.c.h.b16 %v3329
    %v4492 = vunpack.c.l.b16 %v3330
    %v4493 = vunpack.c.h.b16 %v3330
    %v4494 = vunpack.c.l.b16 %v3331
    %v4495 = vunpack.c.h.b16 %v3331
    %v4496 = vunpack.c.l.b16 %v3332
    %v4497 = vunpack.c.h.b16 %v3332
    %v4498 = vunpack.c.l.b16 %v3333
    %v4499 = vunpack.c.h.b16 %v3333
    %v4500 = vunpack.c.l.b16 %v3334
    %v4501 = vunpack.c.h.b16 %v3334
    %v4502 = vunpack.c.l.b16 %v3335
    %v4503 = vunpack.c.h.b16 %v3335
    %v4504 = vunpack.c.l.b16 %v3336
    %v4505 = vunpack.c.h.b16 %v3336
    %v4506 = vunpack.c.l.b16 %v3337
    %v4507 = vunpack.c.h.b16 %v3337
    %v4508 = vunpack.c.l.b16 %v3338
    %v4509 = vunpack.c.h.b16 %v3338
    %v4510 = vunpack.c.l.b16 %v3339
    %v4511 = vunpack.c.h.b16 %v3339
    %v4512 = vunpack.c.l.b16 %v3340
    %v4513 = vunpack.c.h.b16 %v3340
    %v4514 = vunpack.c.l.b16 %v3341
    %v4515 = vunpack.c.h.b16 %v3341
    %v4516 = vunpack.c.l.b16 %v3342
    %v4517 = vunpack.c.h.b16 %v3342
    %v4518 = vunpack.c.l.b16 %v3343
    %v4519 = vunpack.c.h.b16 %v3343
    %v4520 = vunpack.c.l.b16 %v3344
    %v4521 = vunpack.c.h.b16 %v3344
    %v4522 = vunpack.c.l.b16 %v3345
    %v4523 = vunpack.c.h.b16 %v3345
    %v4524 = vunpack.c.l.b16 %v3346
    %v4525 = vunpack.c.h.b16 %v3346
    %v4526 = vunpack.c.l.b16 %v3347
    %v4527 = vunpack.c.h.b16 %v3347
    %v4528 = vunpack.c.l.b16 %v3348
    %v4529 = vunpack.c.h.b16 %v3348
    %v4530 = vunpack.c.l.b16 %v3349
    %v4531 = vunpack.c.h.b16 %v3349
    %v4532 = vunpack.c.l.b16 %v3350
    %v4533 = vunpack.c.h.b16 %v3350
    %v4534 = vunpack.c.l.b16 %v3351
    %v4535 = vunpack.c.h.b16 %v3351
    %v4536 = vunpack.c.l.b16 %v3352
    %v4537 = vunpack.c.h.b16 %v3352
    %v4538 = vunpack.c.l.b16 %v3353
    %v4539 = vunpack.c.h.b16 %v3353
    %v4540 = vunpack.c.l.b16 %v3354
    %v4541 = vunpack.c.h.b16 %v3354
    %v4542 = vunpack.c.l.b16 %v3355
    %v4543 = vunpack.c.h.b16 %v3355
    %v4544 = vunpack.c.l.b16 %v3356
    %v4545 = vunpack.c.h.b16 %v3356
    %v4546 = vunpack.c.l.b16 %v3357
    %v4547 = vunpack.c.h.b16 %v3357
    %v4548 = vunpack.c.l.b16 %v3358
    %v4549 = vunpack.c.h.b16 %v3358
    %v4550 = vunpack.c.l.b16 %v3359
    %v4551 = vunpack.c.h.b16 %v3359
    %v4552 = vunpack.c.l.b16 %v3360
    %v4553 = vunpack.c.h.b16 %v3360
    %v4554 = vunpack.c.l.b16 %v3361
    %v4555 = vunpack.c.h.b16 %v3361
    %v4556 = vunpack.c.l.b16 %v3362
    %v4557 = vunpack.c.h.b16 %v3362
    %v4558 = vunpack.c.l.b16 %v3363
    %v4559 = vunpack.c.h.b16 %v3363
    %v4560 = vunpack.c.l.b16 %v3364
    %v4561 = vunpack.c.h.b16 %v3364
    %v4562 = vunpack.c.l.b16 %v3365
    %v4563 = vunpack.c.h.b16 %v3365
    %v4564 = vunpack.c.l.b16 %v3366
    %v4565 = vunpack.c.h.b16 %v3366
    %v4566 = vunpack.c.l.b16 %v3367
    %v4567 = vunpack.c.h.b16 %v3367
    %v4568 = vunpack.c.l.b16 %v3368
    %v4569 = vunpack.c.h.b16 %v3368
    %v4570 = vunpack.c.l.b16 %v3369
    %v4571 = vunpack.c.h.b16 %v3369
    %v4572 = vunpack.c.l.b16 %v3370
    %v4573 = vunpack.c.h.b16 %v3370
    %v4574 = vunpack.c.l.b16 %v3371
    %v4575 = vunpack.c.h.b16 %v3371
    %v4576 = vunpack.c.l.b16 %v3372
    %v4577 = vunpack.c.h.b16 %v3372
    %v4578 = vunpack.c.l.b16 %v3373
    %v4579 = vunpack.c.h.b16 %v3373
    %v4580 = vunpack.c.l.b16 %v3374
    %v4581 = vunpack.c.h.b16 %v3374
    %v4582 = vunpack.c.l.b16 %v3375
    %v4583 = vunpack.c.h.b16 %v3375
    %v4584 = vunpack.c.l.b16 %v3376
    %v4585 = vunpack.c.h.b16 %v3376
    %v4586 = vunpack.c.l.b16 %v3377
    %v4587 = vunpack.c.h.b16 %v3377
    %v4588 = vunpack.c.l.b16 %v3378
    %v4589 = vunpack.c.h.b16 %v3378
    %v4590 = vunpack.c.l.b16 %v3379
    %v4591 = vunpack.c.h.b16 %v3379
    %v4592 = vunpack.c.l.b16 %v3380
    %v4593 = vunpack.c.h.b16 %v3380
    %v4594 = vunpack.c.l.b16 %v3381
    %v4595 = vunpack.c.h.b16 %v3381
    %v4596 = vunpack.c.l.b16 %v3382
    %v4597 = vunpack.c.h.b16 %v3382
    %v4598 = vunpack.c.l.b16 %v3383
    %v4599 = vunpack.c.h.b16 %v3383
    %v4600 = vunpack.c.l.b16 %v3384
    %v4601 = vunpack.c.h.b16 %v3384
    %v4602 = vunpack.c.l.b16 %v3385
    %v4603 = vunpack.c.h.b16 %v3385
    %v4604 = vunpack.c.l.b16 %v3386
    %v4605 = vunpack.c.h.b16 %v3386
    %v4606 = vunpack.c.l.b16 %v3387
    %v4607 = vunpack.c.h.b16 %v3387
    %v4608 = vunpack.c.l.b16 %v3388
    %v4609 = vunpack.c.h.b16 %v3388
    %v4610 = vunpack.c.l.b16 %v3389
    %v4611 = vunpack.c.h.b16 %v3389
    %v4612 = vunpack.c.l.b16 %v3390
    %v4613 = vunpack.c.h.b16 %v3390
    %v4614 = vunpack.c.l.b16 %v3391
    %v4615 = vunpack.c.h.b16 %v3391
    %v4616 = vunpack.c.l.b16 %v3392
    %v4617 = vunpack.c.h.b16 %v3392
    %v4618 = vunpack.c.l.b16 %v3393
    %v4619 = vunpack.c.h.b16 %v3393
    %v4620 = vunpack.c.l.b16 %v3394
    %v4621 = vunpack.c.h.b16 %v3394
    %v4622 = vunpack.c.l.b16 %v3395
    %v4623 = vunpack.c.h.b16 %v3395
    %v4624 = vunpack.c.l.b16 %v3396
    %v4625 = vunpack.c.h.b16 %v3396
    %v4626 = vunpack.c.l.b16 %v3397
    %v4627 = vunpack.c.h.b16 %v3397
    %v4628 = vunpack.c.l.b16 %v3398
    %v4629 = vunpack.c.h.b16 %v3398
    %v4630 = vunpack.c.l.b16 %v3399
    %v4631 = vunpack.c.h.b16 %v3399
    %v4632 = vunpack.c.l.b16 %v3400
    %v4633 = vunpack.c.h.b16 %v3400
    %v4634 = vunpack.c.l.b16 %v3401
    %v4635 = vunpack.c.h.b16 %v3401
    %v4636 = vunpack.c.l.b16 %v3402
    %v4637 = vunpack.c.h.b16 %v3402
    %v4638 = vunpack.c.l.b16 %v3403
    %v4639 = vunpack.c.h.b16 %v3403
    %v4640 = vunpack.c.l.b16 %v3404
    %v4641 = vunpack.c.h.b16 %v3404
    %v4642 = vunpack.c.l.b16 %v3405
    %v4643 = vunpack.c.h.b16 %v3405
    %v4644 = vunpack.c.l.b16 %v3406
    %v4645 = vunpack.c.h.b16 %v3406
    %v4646 = vunpack.c.l.b16 %v3407
    %v4647 = vunpack.c.h.b16 %v3407
    %v4648 = vunpack.c.l.b16 %v3408
    %v4649 = vunpack.c.h.b16 %v3408
    %v4650 = vunpack.c.l.b16 %v3409
    %v4651 = vunpack.c.h.b16 %v3409
    %v4652 = vunpack.c.l.b16 %v3410
    %v4653 = vunpack.c.h.b16 %v3410
    %v4654 = vunpack.c.l.b16 %v3411
    %v4655 = vunpack.c.h.b16 %v3411
    %v4656 = vunpack.c.l.b16 %v3412
    %v4657 = vunpack.c.h.b16 %v3412
    %v4658 = vunpack.c.l.b16 %v3413
    %v4659 = vunpack.c.h.b16 %v3413
    %v4660 = vunpack.c.l.b16 %v3414
    %v4661 = vunpack.c.h.b16 %v3414
    %v4662 = vunpack.c.l.b16 %v3415
    %v4663 = vunpack.c.h.b16 %v3415
    %v4664 = vunpack.c.l.b16 %v3416
    %v4665 = vunpack.c.h.b16 %v3416
    %v4666 = vunpack.c.l.b16 %v3417
    %v4667 = vunpack.c.h.b16 %v3417
    %v4668 = vunpack.c.l.b16 %v3418
    %v4669 = vunpack.c.h.b16 %v3418
    %v4670 = vunpack.c.l.b16 %v3419
    %v4671 = vunpack.c.h.b16 %v3419
    %v4672 = vunpack.c.l.b16 %v3420
    %v4673 = vunpack.c.h.b16 %v3420
    %v4674 = vunpack.c.l.b16 %v3421
    %v4675 = vunpack.c.h.b16 %v3421
    %v4676 = vunpack.c.l.b16 %v3422
    %v4677 = vunpack.c.h.b16 %v3422
    %v4678 = vunpack.c.l.b16 %v3423
    %v4679 = vunpack.c.h.b16 %v3423
    %v4680 = vunpack.c.l.b16 %v3424
    %v4681 = vunpack.c.h.b16 %v3424
    %v4682 = vunpack.c.l.b16 %v3425
    %v4683 = vunpack.c.h.b16 %v3425
    %v4684 = vunpack.c.l.b16 %v3426
    %v4685 = vunpack.c.h.b16 %v3426
    %v4686 = vunpack.c.l.b16 %v3427
    %v4687 = vunpack.c.h.b16 %v3427
    %v4688 = vunpack.c.l.b16 %v3428
    %v4689 = vunpack.c.h.b16 %v3428
    %v4690 = vunpack.c.l.b16 %v3429
    %v4691 = vunpack.c.h.b16 %v3429
    %v4692 = vunpack.c.l.b16 %v3430
    %v4693 = vunpack.c.h.b16 %v3430
    %v4694 = vunpack.c.l.b16 %v3431
    %v4695 = vunpack.c.h.b16 %v3431
    %v4696 = vunpack.c.l.b16 %v3432
    %v4697 = vunpack.c.h.b16 %v3432
    %v4698 = vunpack.c.l.b16 %v3433
    %v4699 = vunpack.c.h.b16 %v3433
    %v4700 = vunpack.c.l.b16 %v3434
    %v4701 = vunpack.c.h.b16 %v3434
    %v4702 = vunpack.c.l.b16 %v3435
    %v4703 = vunpack.c.h.b16 %v3435
    %v4704 = vunpack.c.l.b16 %v3436
    %v4705 = vunpack.c.h.b16 %v3436
    %v4706 = vunpack.c.l.b16 %v3437
    %v4707 = vunpack.c.h.b16 %v3437
    %v4708 = vunpack.c.l.b16 %v3438
    %v4709 = vunpack.c.h.b16 %v3438
    %v4710 = vunpack.c.l.b16 %v3439
    %v4711 = vunpack.c.h.b16 %v3439
    %v4712 = vunpack.c.l.b16 %v3440
    %v4713 = vunpack.c.h.b16 %v3440
    %v4714 = vunpack.c.l.b16 %v3441
    %v4715 = vunpack.c.h.b16 %v3441
    %v4716 = vunpack.c.l.b16 %v3442
    %v4717 = vunpack.c.h.b16 %v3442
    %v4718 = vunpack.c.l.b16 %v3443
    %v4719 = vunpack.c.h.b16 %v3443
    %v4720 = vunpack.c.l.b16 %v3444
    %v4721 = vunpack.c.h.b16 %v3444
    %v4722 = vunpack.c.l.b16 %v3445
    %v4723 = vunpack.c.h.b16 %v3445
    %v4724 = vunpack.c.l.b16 %v3446
    %v4725 = vunpack.c.h.b16 %v3446
    %v4726 = vunpack.c.l.b16 %v3447
    %v4727 = vunpack.c.h.b16 %v3447
    %v4728 = vunpack.c.l.b16 %v3448
    %v4729 = vunpack.c.h.b16 %v3448
    %v4730 = vunpack.c.l.b16 %v3449
    %v4731 = vunpack.c.h.b16 %v3449
    %v4732 = vunpack.c.l.b16 %v3450
    %v4733 = vunpack.c.h.b16 %v3450
    %v4734 = vunpack.c.l.b16 %v3451
    %v4735 = vunpack.c.h.b16 %v3451
    %v4736 = vunpack.c.l.b16 %v3452
    %v4737 = vunpack.c.h.b16 %v3452
    %v4738 = vunpack.c.l.b16 %v3453
    %v4739 = vunpack.c.h.b16 %v3453
    %v4740 = vunpack.c.l.b16 %v3454
    %v4741 = vunpack.c.h.b16 %v3454
    %v4742 = vunpack.c.l.b16 %v3455
    %v4743 = vunpack.c.h.b16 %v3455
    %v4744 = vunpack.c.l.b16 %v3456
    %v4745 = vunpack.c.h.b16 %v3456
    %v4746 = vunpack.c.l.b16 %v3457
    %v4747 = vunpack.c.h.b16 %v3457
    %v4748 = vunpack.c.l.b16 %v3458
    %v4749 = vunpack.c.h.b16 %v3458
    %v4750 = vunpack.c.l.b16 %v3459
    %v4751 = vunpack.c.h.b16 %v3459
    %v4752 = vunpack.c.l.b16 %v3460
    %v4753 = vunpack.c.h.b16 %v3460
    %v4754 = vunpack.c.l.b16 %v3461
    %v4755 = vunpack.c.h.b16 %v3461
    %v4756 = vunpack.c.l.b16 %v3462
    %v4757 = vunpack.c.h.b16 %v3462
    %v4758 = vunpack.c.l.b16 %v3463
    %v4759 = vunpack.c.h.b16 %v3463
    %v4760 = vunpack.c.l.b16 %v3464
    %v4761 = vunpack.c.h.b16 %v3464
    %v4762 = vunpack.c.l.b16 %v3465
    %v4763 = vunpack.c.h.b16 %v3465
    %v4764 = vunpack.c.l.b16 %v3466
    %v4765 = vunpack.c.h.b16 %v3466
    %v4766 = vunpack.c.l.b16 %v3467
    %v4767 = vunpack.c.h.b16 %v3467
    %v4768 = vunpack.c.l.b16 %v3468
    %v4769 = vunpack.c.h.b16 %v3468
    %v4770 = vunpack.c.l.b16 %v3469
    %v4771 = vunpack.c.h.b16 %v3469
    %v4772 = vunpack.c.l.b16 %v3470
    %v4773 = vunpack.c.h.b16 %v3470
    %v4774 = vunpack.c.l.b16 %v3471
    %v4775 = vunpack.c.h.b16 %v3471
    %v4776 = vunpack.c.l.b16 %v3472
    %v4777 = vunpack.c.h.b16 %v3472
    %v4778 = vunpack.c.l.b16 %v3473
    %v4779 = vunpack.c.h.b16 %v3473
    %v4780 = vunpack.c.l.b16 %v3474
    %v4781 = vunpack.c.h.b16 %v3474
    %v4782 = vunpack.c.l.b16 %v3475
    %v4783 = vunpack.c.h.b16 %v3475
    %v4784 = vunpack.c.l.b16 %v3476
    %v4785 = vunpack.c.h.b16 %v3476
    %v4786 = vunpack.c.l.b16 %v3477
    %v4787 = vunpack.c.h.b16 %v3477
    %v4788 = vunpack.c.l.b16 %v3478
    %v4789 = vunpack.c.h.b16 %v3478
    %v4790 = vunpack.c.l.b16 %v3479
    %v4791 = vunpack.c.h.b16 %v3479
    %v4792 = vunpack.c.l.b16 %v3480
    %v4793 = vunpack.c.h.b16 %v3480
    %v4794 = vunpack.c.l.b16 %v3481
    %v4795 = vunpack.c.h.b16 %v3481
    %v4796 = vunpack.c.l.b16 %v3482
    %v4797 = vunpack.c.h.b16 %v3482
    %v4798 = vunpack.c.l.b16 %v3483
    %v4799 = vunpack.c.h.b16 %v3483
    %v4800 = vunpack.c.l.b16 %v3484
    %v4801 = vunpack.c.h.b16 %v3484
    %v4802 = vunpack.c.l.b16 %v3485
    %v4803 = vunpack.c.h.b16 %v3485
    %v4804 = vunpack.c.l.b16 %v3486
    %v4805 = vunpack.c.h.b16 %v3486
    %v4806 = vunpack.c.l.b16 %v3487
    %v4807 = vunpack.c.h.b16 %v3487
    %v4808 = vunpack.c.l.b16 %v3488
    %v4809 = vunpack.c.h.b16 %v3488
    %v4810 = vunpack.c.l.b16 %v3489
    %v4811 = vunpack.c.h.b16 %v3489
    %v4812 = vunpack.c.l.b16 %v3490
    %v4813 = vunpack.c.h.b16 %v3490
    %v4814 = vunpack.c.l.b16 %v3491
    %v4815 = vunpack.c.h.b16 %v3491
    %v4816 = vunpack.c.l.b16 %v3492
    %v4817 = vunpack.c.h.b16 %v3492
    %v4818 = vunpack.c.l.b16 %v3493
    %v4819 = vunpack.c.h.b16 %v3493
    %v4820 = vunpack.c.l.b16 %v3494
    %v4821 = vunpack.c.h.b16 %v3494
    %v4822 = vunpack.c.l.b16 %v3495
    %v4823 = vunpack.c.h.b16 %v3495
    %v4824 = vunpack.c.l.b16 %v3496
    %v4825 = vunpack.c.h.b16 %v3496
    %v4826 = vunpack.c.l.b16 %v3497
    %v4827 = vunpack.c.h.b16 %v3497
    %v4828 = vunpack.c.l.b16 %v3498
    %v4829 = vunpack.c.h.b16 %v3498
    %v4830 = vunpack.c.l.b16 %v3499
    %v4831 = vunpack.c.h.b16 %v3499
    %v4832 = vunpack.c.l.b16 %v3500
    %v4833 = vunpack.c.h.b16 %v3500
    %v4834 = vunpack.c.l.b16 %v3501
    %v4835 = vunpack.c.h.b16 %v3501
    %v4836 = vunpack.c.l.b16 %v3502
    %v4837 = vunpack.c.h.b16 %v3502
    %v4838 = vunpack.c.l.b16 %v3503
    %v4839 = vunpack.c.h.b16 %v3503
    %v4840 = vunpack.c.l.b16 %v3504
    %v4841 = vunpack.c.h.b16 %v3504
    %v4842 = vunpack.c.l.b16 %v3505
    %v4843 = vunpack.c.h.b16 %v3505
    %v4844 = vunpack.c.l.b16 %v3506
    %v4845 = vunpack.c.h.b16 %v3506
    %v4846 = vunpack.c.l.b16 %v3507
    %v4847 = vunpack.c.h.b16 %v3507
    %v4848 = vunpack.c.l.b16 %v3508
    %v4849 = vunpack.c.h.b16 %v3508
    %v4850 = vunpack.c.l.b16 %v3509
    %v4851 = vunpack.c.h.b16 %v3509
    %v4852 = vunpack.c.l.b16 %v3510
    %v4853 = vunpack.c.h.b16 %v3510
    %v4854 = vunpack.c.l.b16 %v3511
    %v4855 = vunpack.c.h.b16 %v3511
    %v4856 = vunpack.c.l.b16 %v3512
    %v4857 = vunpack.c.h.b16 %v3512
    %v4858 = vunpack.c.l.b16 %v3513
    %v4859 = vunpack.c.h.b16 %v3513
    %v4860 = vunpack.c.l.b16 %v3514
    %v4861 = vunpack.c.h.b16 %v3514
    %v4862 = vunpack.c.l.b16 %v3515
    %v4863 = vunpack.c.h.b16 %v3515
    %v4864 = vunpack.c.l.b16 %v3516
    %v4865 = vunpack.c.h.b16 %v3516
    %v4866 = vunpack.c.l.b16 %v3517
    %v4867 = vunpack.c.h.b16 %v3517
    %v4868 = vunpack.c.l.b16 %v3518
    %v4869 = vunpack.c.h.b16 %v3518
    %v4870 = vunpack.c.l.b16 %v3519
    %v4871 = vunpack.c.h.b16 %v3519
    %v4872 = vunpack.c.l.b16 %v3520
    %v4873 = vunpack.c.h.b16 %v3520
    %v4874 = vunpack.c.l.b16 %v3521
    %v4875 = vunpack.c.h.b16 %v3521
    %v4876 = vunpack.c.l.b16 %v3522
    %v4877 = vunpack.c.h.b16 %v3522
    %v4878 = vunpack.c.l.b16 %v3523
    %v4879 = vunpack.c.h.b16 %v3523
    %v4880 = vunpack.c.l.b16 %v3524
    %v4881 = vunpack.c.h.b16 %v3524
    %v4882 = vunpack.c.l.b16 %v3525
    %v4883 = vunpack.c.h.b16 %v3525
    %v4884 = vunpack.c.l.b16 %v3526
    %v4885 = vunpack.c.h.b16 %v3526
    %v4886 = vunpack.c.l.b16 %v3527
    %v4887 = vunpack.c.h.b16 %v3527
    %v4888 = vunpack.c.l.b16 %v3528
    %v4889 = vunpack.c.h.b16 %v3528
    %v4890 = vunpack.c.l.b16 %v3529
    %v4891 = vunpack.c.h.b16 %v3529
    %v4892 = vunpack.c.l.b16 %v3530
    %v4893 = vunpack.c.h.b16 %v3530
    %v4894 = vunpack.c.l.b16 %v3531
    %v4895 = vunpack.c.h.b16 %v3531
    %v4896 = vunpack.c.l.b16 %v3532
    %v4897 = vunpack.c.h.b16 %v3532
    %v4898 = vunpack.c.l.b16 %v3533
    %v4899 = vunpack.c.h.b16 %v3533
    %v4900 = vunpack.c.l.b16 %v3534
    %v4901 = vunpack.c.h.b16 %v3534
    %v4902 = vunpack.c.l.b16 %v3535
    %v4903 = vunpack.c.h.b16 %v3535
    %v4904 = vunpack.c.l.b16 %v3536
    %v4905 = vunpack.c.h.b16 %v3536
    %v4906 = vunpack.c.l.b16 %v3537
    %v4907 = vunpack.c.h.b16 %v3537
    %v4908 = vunpack.c.l.b16 %v3538
    %v4909 = vunpack.c.h.b16 %v3538
    %v4910 = vunpack.c.l.b16 %v3539
    %v4911 = vunpack.c.h.b16 %v3539
    %v4912 = vunpack.c.l.b16 %v3540
    %v4913 = vunpack.c.h.b16 %v3540
    %v4914 = vunpack.c.l.b16 %v3541
    %v4915 = vunpack.c.h.b16 %v3541
    %v4916 = vunpack.c.l.b16 %v3542
    %v4917 = vunpack.c.h.b16 %v3542
    %v4918 = vunpack.c.l.b16 %v3543
    %v4919 = vunpack.c.h.b16 %v3543
    %v4920 = vunpack.c.l.b16 %v3544
    %v4921 = vunpack.c.h.b16 %v3544
    %v4922 = vunpack.c.l.b16 %v3545
    %v4923 = vunpack.c.h.b16 %v3545
    %v4924 = vunpack.c.l.b16 %v3546
    %v4925 = vunpack.c.h.b16 %v3546
    %v4926 = vunpack.c.l.b16 %v3547
    %v4927 = vunpack.c.h.b16 %v3547
    %v4928 = vunpack.c.l.b16 %v3548
    %v4929 = vunpack.c.h.b16 %v3548
    %v4930 = vunpack.c.l.b16 %v3549
    %v4931 = vunpack.c.h.b16 %v3549
    %v4932 = vunpack.c.l.b16 %v3550
    %v4933 = vunpack.c.h.b16 %v3550
    %v4934 = vunpack.c.l.b16 %v3551
    %v4935 = vunpack.c.h.b16 %v3551
    %v4936 = vunpack.c.l.b16 %v3552
    %v4937 = vunpack.c.h.b16 %v3552
    %v4938 = vunpack.c.l.b16 %v3553
    %v4939 = vunpack.c.h.b16 %v3553
    %v4940 = vunpack.c.l.b16 %v3554
    %v4941 = vunpack.c.h.b16 %v3554
    %v4942 = vunpack.c.l.b16 %v3555
    %v4943 = vunpack.c.h.b16 %v3555
    %v4944 = vunpack.c.l.b16 %v3556
    %v4945 = vunpack.c.h.b16 %v3556
    %v4946 = vunpack.c.l.b16 %v3557
    %v4947 = vunpack.c.h.b16 %v3557
    %v4948 = vunpack.c.l.b16 %v3558
    %v4949 = vunpack.c.h.b16 %v3558
    %v4950 = vunpack.c.l.b16 %v3559
    %v4951 = vunpack.c.h.b16 %v3559
    %v4952 = vunpack.c.l.b16 %v3560
    %v4953 = vunpack.c.h.b16 %v3560
    %v4954 = vunpack.c.l.b16 %v3561
    %v4955 = vunpack.c.h.b16 %v3561
    %v4956 = vunpack.c.l.b16 %v3562
    %v4957 = vunpack.c.h.b16 %v3562
    %v4958 = vunpack.c.l.b16 %v3563
    %v4959 = vunpack.c.h.b16 %v3563
    %v4960 = vunpack.c.l.b16 %v3564
    %v4961 = vunpack.c.h.b16 %v3564
    %v4962 = vunpack.c.l.b16 %v3565
    %v4963 = vunpack.c.h.b16 %v3565
    %v4964 = vunpack.c.l.b16 %v3566
    %v4965 = vunpack.c.h.b16 %v3566
    %v4966 = vunpack.c.l.b16 %v3567
    %v4967 = vunpack.c.h.b16 %v3567
    %v4968 = vunpack.c.l.b16 %v3568
    %v4969 = vunpack.c.h.b16 %v3568
    %v4970 = vunpack.c.l.b16 %v3569
    %v4971 = vunpack.c.h.b16 %v3569
    %v4972 = vunpack.c.l.b16 %v3570
    %v4973 = vunpack.c.h.b16 %v3570
    %v4974 = vunpack.c.l.b16 %v3571
    %v4975 = vunpack.c.h.b16 %v3571
    %v4976 = vunpack.c.l.b16 %v3572
    %v4977 = vunpack.c.h.b16 %v3572
    %v4978 = vunpack.c.l.b16 %v3573
    %v4979 = vunpack.c.h.b16 %v3573
    %v4980 = vunpack.c.l.b16 %v3574
    %v4981 = vunpack.c.h.b16 %v3574
    %v4982 = vunpack.c.l.b16 %v3575
    %v4983 = vunpack.c.h.b16 %v3575
    %v4984 = vunpack.c.l.b16 %v3576
    %v4985 = vunpack.c.h.b16 %v3576
    %v4986 = vunpack.c.l.b16 %v3577
    %v4987 = vunpack.c.h.b16 %v3577
    %v4988 = vunpack.c.l.b16 %v3578
    %v4989 = vunpack.c.h.b16 %v3578
    %v4990 = vunpack.c.l.b16 %v3579
    %v4991 = vunpack.c.h.b16 %v3579
    %v4992 = vunpack.c.l.b16 %v3580
    %v4993 = vunpack.c.h.b16 %v3580
    %v4994 = vunpack.c.l.b16 %v3581
    %v4995 = vunpack.c.h.b16 %v3581
    %v4996 = vunpack.c.l.b16 %v3582
    %v4997 = vunpack.c.h.b16 %v3582
    %v4998 = vunpack.c.l.b16 %v3583
    %v4999 = vunpack.c.h.b16 %v3583
    %v5000 = vunpack.c.l.b16 %v3584
    %v5001 = vunpack.c.h.b16 %v3584
    %v5002 = vunpack.c.l.b16 %v3585
    %v5003 = vunpack.c.h.b16 %v3585
    %v5004 = vunpack.c.l.b16 %v3586
    %v5005 = vunpack.c.h.b16 %v3586
    %v5006 = vunpack.c.l.b16 %v3587
    %v5007 = vunpack.c.h.b16 %v3587
    %v5008 = vunpack.c.l.b16 %v3588
    %v5009 = vunpack.c.h.b16 %v3588
    %v5010 = vunpack.c.l.b16 %v3589
    %v5011 = vunpack.c.h.b16 %v3589
    %v5012 = vunpack.c.l.b16 %v3590
    %v5013 = vunpack.c.h.b16 %v3590
    %v5014 = vunpack.c.l.b16 %v3591
    %v5015 = vunpack.c.h.b16 %v3591
    %v5016 = vunpack.c.l.b16 %v3592
    %v5017 = vunpack.c.h.b16 %v3592
    %v5018 = vunpack.c.l.b16 %v3593
    %v5019 = vunpack.c.h.b16 %v3593
    %v5020 = vunpack.c.l.b16 %v3594
    %v5021 = vunpack.c.h.b16 %v3594
    %v5022 = vunpack.c.l.b16 %v3595
    %v5023 = vunpack.c.h.b16 %v3595
    %v5024 = vunpack.c.l.b16 %v3596
    %v5025 = vunpack.c.h.b16 %v3596
    %v5026 = vunpack.c.l.b16 %v3597
    %v5027 = vunpack.c.h.b16 %v3597
    %v5028 = vunpack.c.l.b16 %v3598
    %v5029 = vunpack.c.h.b16 %v3598
    %v5030 = vunpack.c.l.b16 %v3599
    %v5031 = vunpack.c.h.b16 %v3599
    %v5032 = vunpack.c.l.b16 %v3600
    %v5033 = vunpack.c.h.b16 %v3600
    %v5034 = vunpack.c.l.b16 %v3601
    %v5035 = vunpack.c.h.b16 %v3601
    %v5036 = vunpack.c.l.b16 %v3602
    %v5037 = vunpack.c.h.b16 %v3602
    %v5038 = vunpack.c.l.b16 %v3603
    %v5039 = vunpack.c.h.b16 %v3603
    %v5040 = vunpack.c.l.b16 %v3604
    %v5041 = vunpack.c.h.b16 %v3604
    %v5042 = vunpack.c.l.b16 %v3605
    %v5043 = vunpack.c.h.b16 %v3605
    %v5044 = vunpack.c.l.b16 %v3606
    %v5045 = vunpack.c.h.b16 %v3606
    %v5046 = vunpack.c.l.b16 %v3607
    %v5047 = vunpack.c.h.b16 %v3607
    %v5048 = vunpack.c.l.b16 %v3608
    %v5049 = vunpack.c.h.b16 %v3608
    %v5050 = vunpack.c.l.b16 %v3609
    %v5051 = vunpack.c.h.b16 %v3609
    %v5052 = vunpack.c.l.b16 %v3610
    %v5053 = vunpack.c.h.b16 %v3610
    %v5054 = vunpack.c.l.b16 %v3611
    %v5055 = vunpack.c.h.b16 %v3611
    %v5056 = vunpack.c.l.b16 %v3612
    %v5057 = vunpack.c.h.b16 %v3612
    %v5058 = vunpack.c.l.b16 %v3613
    %v5059 = vunpack.c.h.b16 %v3613
    %v5060 = vunpack.c.l.b16 %v3614
    %v5061 = vunpack.c.h.b16 %v3614
    %v5062 = vunpack.c.l.b16 %v3615
    %v5063 = vunpack.c.h.b16 %v3615
    %v5064 = vunpack.c.l.b16 %v3616
    %v5065 = vunpack.c.h.b16 %v3616
    %v5066 = vunpack.c.l.b16 %v3617
    %v5067 = vunpack.c.h.b16 %v3617
    %v5068 = vunpack.c.l.b16 %v3618
    %v5069 = vunpack.c.h.b16 %v3618
    %v5070 = vunpack.c.l.b16 %v3619
    %v5071 = vunpack.c.h.b16 %v3619
    %v5072 = vunpack.c.l.b16 %v3620
    %v5073 = vunpack.c.h.b16 %v3620
    %v5074 = vunpack.c.l.b16 %v3621
    %v5075 = vunpack.c.h.b16 %v3621
    %v5076 = vunpack.c.l.b16 %v3622
    %v5077 = vunpack.c.h.b16 %v3622
    %v5078 = vunpack.c.l.b16 %v3623
    %v5079 = vunpack.c.h.b16 %v3623
    %v5080 = vunpack.c.l.b16 %v3624
    %v5081 = vunpack.c.h.b16 %v3624
    %v5082 = vunpack.c.l.b16 %v3625
    %v5083 = vunpack.c.h.b16 %v3625
    %v5084 = vunpack.c.l.b16 %v3626
    %v5085 = vunpack.c.h.b16 %v3626
    %v5086 = vunpack.c.l.b16 %v3627
    %v5087 = vunpack.c.h.b16 %v3627
    %v5088 = vunpack.c.l.b16 %v3628
    %v5089 = vunpack.c.h.b16 %v3628
    %v5090 = vunpack.c.l.b16 %v3629
    %v5091 = vunpack.c.h.b16 %v3629
    %v5092 = vunpack.c.l.b16 %v3630
    %v5093 = vunpack.c.h.b16 %v3630
    %v5094 = vunpack.c.l.b16 %v3631
    %v5095 = vunpack.c.h.b16 %v3631
    %v5096 = vunpack.c.l.b16 %v3632
    %v5097 = vunpack.c.h.b16 %v3632
    %v5098 = vunpack.c.l.b16 %v3633
    %v5099 = vunpack.c.h.b16 %v3633
    %v5100 = vunpack.c.l.b16 %v3634
    %v5101 = vunpack.c.h.b16 %v3634
    %v5102 = vunpack.c.l.b16 %v3635
    %v5103 = vunpack.c.h.b16 %v3635
    %v5104 = vunpack.c.l.b16 %v3636
    %v5105 = vunpack.c.h.b16 %v3636
    %v5106 = vunpack.c.l.b16 %v3637
    %v5107 = vunpack.c.h.b16 %v3637
    %v5108 = vunpack.c.l.b16 %v3638
    %v5109 = vunpack.c.h.b16 %v3638
    %v5110 = vunpack.c.l.b16 %v3639
    %v5111 = vunpack.c.h.b16 %v3639
    %v5112 = vunpack.c.l.b16 %v3640
    %v5113 = vunpack.c.h.b16 %v3640
    %v5114 = vunpack.c.l.b16 %v3641
    %v5115 = vunpack.c.h.b16 %v3641
    %v5116 = vunpack.c.l.b16 %v3642
    %v5117 = vunpack.c.h.b16 %v3642
    %v5118 = vunpack.c.l.b16 %v3643
    %v5119 = vunpack.c.h.b16 %v3643
    %v5120 = vunpack.c.l.b16 %v3644
    %v5121 = vunpack.c.h.b16 %v3644
    %v5122 = vunpack.c.l.b16 %v3645
    %v5123 = vunpack.c.h.b16 %v3645
    %v5124 = vunpack.c.l.b16 %v3646
    %v5125 = vunpack.c.h.b16 %v3646
    %v5126 = vunpack.c.l.b16 %v3647
    %v5127 = vunpack.c.h.b16 %v3647
    %v5128 = vunpack.c.l.b16 %v3648
    %v5129 = vunpack.c.h.b16 %v3648
    %v5130 = vunpack.c.l.b16 %v3649
    %v5131 = vunpack.c.h.b16 %v3649
    %v5132 = vunpack.c.l.b16 %v3650
    %v5133 = vunpack.c.h.b16 %v3650
    %v5134 = vunpack.c.l.b16 %v3651
    %v5135 = vunpack.c.h.b16 %v3651
    %v5136 = vunpack.c.l.b16 %v3652
    %v5137 = vunpack.c.h.b16 %v3652
    %v5138 = vunpack.c.l.b16 %v3653
    %v5139 = vunpack.c.h.b16 %v3653
    %v5140 = vunpack.c.l.b16 %v3654
    %v5141 = vunpack.c.h.b16 %v3654
    %v5142 = vunpack.c.l.b16 %v3655
    %v5143 = vunpack.c.h.b16 %v3655
    %v5144 = vunpack.c.l.b16 %v3656
    %v5145 = vunpack.c.h.b16 %v3656
    %v5146 = vunpack.c.l.b16 %v3657
    %v5147 = vunpack.c.h.b16 %v3657
    %v5148 = vunpack.c.l.b16 %v3658
    %v5149 = vunpack.c.h.b16 %v3658
    %v5150 = vunpack.c.l.b16 %v3659
    %v5151 = vunpack.c.h.b16 %v3659
    %v5152 = vunpack.c.l.b16 %v3660
    %v5153 = vunpack.c.h.b16 %v3660
    %v5154 = vunpack.c.l.b16 %v3661
    %v5155 = vunpack.c.h.b16 %v3661
    %v5156 = vunpack.c.l.b16 %v3662
    %v5157 = vunpack.c.h.b16 %v3662
    %v5158 = vunpack.c.l.b16 %v3663
    %v5159 = vunpack.c.h.b16 %v3663
    %v5160 = vunpack.c.l.b16 %v3664
    %v5161 = vunpack.c.h.b16 %v3664
    %v5162 = vunpack.c.l.b16 %v3665
    %v5163 = vunpack.c.h.b16 %v3665
    %v5164 = vunpack.c.l.b16 %v3666
    %v5165 = vunpack.c.h.b16 %v3666
    %v5166 = vunpack.c.l.b16 %v3667
    %v5167 = vunpack.c.h.b16 %v3667
    %v5168 = vunpack.c.l.b16 %v3668
    %v5169 = vunpack.c.h.b16 %v3668
    %v5170 = vunpack.c.l.b16 %v3669
    %v5171 = vunpack.c.h.b16 %v3669
    %v5172 = vunpack.c.l.b16 %v3670
    %v5173 = vunpack.c.h.b16 %v3670
    %v5174 = vunpack.c.l.b16 %v3671
    %v5175 = vunpack.c.h.b16 %v3671
    %v5176 = vunpack.c.l.b16 %v3672
    %v5177 = vunpack.c.h.b16 %v3672
    %v5178 = vunpack.c.l.b16 %v3673
    %v5179 = vunpack.c.h.b16 %v3673
    %v5180 = vunpack.c.l.b16 %v3674
    %v5181 = vunpack.c.h.b16 %v3674
    %v5182 = vunpack.c.l.b16 %v3675
    %v5183 = vunpack.c.h.b16 %v3675
    %v5184 = vunpack.c.l.b16 %v3676
    %v5185 = vunpack.c.h.b16 %v3676
    %v5186 = vunpack.c.l.b16 %v3677
    %v5187 = vunpack.c.h.b16 %v3677
    %v5188 = vunpack.c.l.b16 %v3678
    %v5189 = vunpack.c.h.b16 %v3678
    %v5190 = vunpack.c.l.b16 %v3679
    %v5191 = vunpack.c.h.b16 %v3679
    %v5192 = vunpack.c.l.b16 %v3680
    %v5193 = vunpack.c.h.b16 %v3680
    %v5194 = vunpack.c.l.b16 %v3681
    %v5195 = vunpack.c.h.b16 %v3681
    %v5196 = vunpack.c.l.b16 %v3682
    %v5197 = vunpack.c.h.b16 %v3682
    %v5198 = vunpack.c.l.b16 %v3683
    %v5199 = vunpack.c.h.b16 %v3683
    %v5200 = vunpack.c.l.b16 %v3684
    %v5201 = vunpack.c.h.b16 %v3684
    %v5202 = vunpack.c.l.b16 %v3685
    %v5203 = vunpack.c.h.b16 %v3685
    %v5204 = vunpack.c.l.b16 %v3686
    %v5205 = vunpack.c.h.b16 %v3686
    %v5206 = vunpack.c.l.b16 %v3687
    %v5207 = vunpack.c.h.b16 %v3687
    %v5208 = vunpack.c.l.b16 %v3688
    %v5209 = vunpack.c.h.b16 %v3688
    %v5210 = vunpack.c.l.b16 %v3689
    %v5211 = vunpack.c.h.b16 %v3689
    %v5212 = vunpack.c.l.b16 %v3690
    %v5213 = vunpack.c.h.b16 %v3690
    %v5214 = vunpack.c.l.b16 %v3691
    %v5215 = vunpack.c.h.b16 %v3691
    %v5216 = vunpack.c.l.b16 %v3692
    %v5217 = vunpack.c.h.b16 %v3692
    %v5218 = vunpack.c.l.b16 %v3693
    %v5219 = vunpack.c.h.b16 %v3693
    %v5220 = vunpack.c.l.b16 %v3694
    %v5221 = vunpack.c.h.b16 %v3694
    %v5222 = vunpack.c.l.b16 %v3695
    %v5223 = vunpack.c.h.b16 %v3695
    %v5224 = vunpack.c.l.b16 %v3696
    %v5225 = vunpack.c.h.b16 %v3696
    %v5226 = vunpack.c.l.b16 %v3697
    %v5227 = vunpack.c.h.b16 %v3697
    %v5228 = vunpack.c.l.b16 %v3698
    %v5229 = vunpack.c.h.b16 %v3698
    %v5230 = vunpack.c.l.b16 %v3699
    %v5231 = vunpack.c.h.b16 %v3699
    %v5232 = vunpack.c.l.b16 %v3700
    %v5233 = vunpack.c.h.b16 %v3700
    %v5234 = vunpack.c.l.b16 %v3701
    %v5235 = vunpack.c.h.b16 %v3701
    %v5236 = vunpack.c.l.b16 %v3702
    %v5237 = vunpack.c.h.b16 %v3702
    %v5238 = vunpack.c.l.b16 %v3703
    %v5239 = vunpack.c.h.b16 %v3703
    %v5240 = vunpack.c.l.b16 %v3704
    %v5241 = vunpack.c.h.b16 %v3704
    %v5242 = vunpack.c.l.b16 %v3705
    %v5243 = vunpack.c.h.b16 %v3705
    %v5244 = vunpack.c.l.b16 %v3706
    %v5245 = vunpack.c.h.b16 %v3706
    %v5246 = vunpack.c.l.b16 %v3707
    %v5247 = vunpack.c.h.b16 %v3707
    %v5248 = vunpack.c.l.b16 %v3708
    %v5249 = vunpack.c.h.b16 %v3708
    %v5250 = vunpack.c.l.b16 %v3709
    %v5251 = vunpack.c.h.b16 %v3709
    %v5252 = vunpack.c.l.b16 %v3710
    %v5253 = vunpack.c.h.b16 %v3710
    %v5254 = vunpack.c.l.b16 %v3711
    %v5255 = vunpack.c.h.b16 %v3711
    %v5256 = vunpack.c.l.b16 %v3712
    %v5257 = vunpack.c.h.b16 %v3712
    %v5258 = vunpack.c.l.b16 %v3713
    %v5259 = vunpack.c.h.b16 %v3713
    %v5260 = vunpack.c.l.b16 %v3714
    %v5261 = vunpack.c.h.b16 %v3714
    %v5262 = vunpack.c.l.b16 %v3715
    %v5263 = vunpack.c.h.b16 %v3715
    %v5264 = vunpack.c.l.b16 %v3716
    %v5265 = vunpack.c.h.b16 %v3716
    %v5266 = vunpack.c.l.b16 %v3717
    %v5267 = vunpack.c.h.b16 %v3717
    %v5268 = vunpack.c.l.b16 %v3718
    %v5269 = vunpack.c.h.b16 %v3718
    %v5270 = vunpack.c.l.b16 %v3719
    %v5271 = vunpack.c.h.b16 %v3719
    %v5272 = vunpack.c.l.b16 %v3720
    %v5273 = vunpack.c.h.b16 %v3720
    %v5274 = vunpack.c.l.b16 %v3721
    %v5275 = vunpack.c.h.b16 %v3721
    %v5276 = vunpack.c.l.b16 %v3722
    %v5277 = vunpack.c.h.b16 %v3722
    %v5278 = vunpack.c.l.b16 %v3723
    %v5279 = vunpack.c.h.b16 %v3723
    %v5280 = vunpack.c.l.b16 %v3724
    %v5281 = vunpack.c.h.b16 %v3724
    %v5282 = vunpack.c.l.b16 %v3725
    %v5283 = vunpack.c.h.b16 %v3725
    %v5284 = vunpack.c.l.b16 %v3726
    %v5285 = vunpack.c.h.b16 %v3726
    %v5286 = vunpack.c.l.b16 %v3727
    %v5287 = vunpack.c.h.b16 %v3727
    %v5288 = vunpack.c.l.b16 %v3728
    %v5289 = vunpack.c.h.b16 %v3728
    %v5290 = vunpack.c.l.b16 %v3729
    %v5291 = vunpack.c.h.b16 %v3729
    %v5292 = vunpack.c.l.b16 %v3730
    %v5293 = vunpack.c.h.b16 %v3730
    %v5294 = vunpack.c.l.b16 %v3731
    %v5295 = vunpack.c.h.b16 %v3731
    %v5296 = vunpack.c.l.b16 %v3732
    %v5297 = vunpack.c.h.b16 %v3732
    %v5298 = vunpack.c.l.b16 %v3733
    %v5299 = vunpack.c.h.b16 %v3733
    %v5300 = vunpack.c.l.b16 %v3734
    %v5301 = vunpack.c.h.b16 %v3734
    %v5302 = vunpack.c.l.b16 %v3735
    %v5303 = vunpack.c.h.b16 %v3735
    %v5304 = vunpack.c.l.b16 %v3736
    %v5305 = vunpack.c.h.b16 %v3736
    %v5306 = vunpack.c.l.b16 %v3737
    %v5307 = vunpack.c.h.b16 %v3737
    %v5308 = vunpack.c.l.b16 %v3738
    %v5309 = vunpack.c.h.b16 %v3738
    %v5310 = vunpack.c.l.b16 %v3739
    %v5311 = vunpack.c.h.b16 %v3739
    %v5312 = vunpack.c.l.b16 %v3740
    %v5313 = vunpack.c.h.b16 %v3740
    %v5314 = vunpack.c.l.b16 %v3741
    %v5315 = vunpack.c.h.b16 %v3741
    %v5316 = vunpack.c.l.b16 %v3742
    %v5317 = vunpack.c.h.b16 %v3742
    %v5318 = vunpack.c.l.b16 %v3743
    %v5319 = vunpack.c.h.b16 %v3743
    %v5320 = vunpack.c.l.b16 %v3744
    %v5321 = vunpack.c.h.b16 %v3744
    %v5322 = vunpack.c.l.b16 %v3745
    %v5323 = vunpack.c.h.b16 %v3745
    %v5324 = vpack.c.b16 %v4308, %v4300
    %v5325 = vpack.c.b16 %v4309, %v4301
    %v5326 = vpack.c.b16 %v4310, %v4302
    %v5327 = vpack.c.b16 %v4311, %v4303
    %v5328 = vpack.c.b16 %v4312, %v4304
    %v5329 = vpack.c.b16 %v4313, %v4305
    %v5330 = vpack.c.b16 %v4314, %v4306
    %v5331 = vpack.c.b16 %v4315, %v4307
    %v5332 = vpack.c.b16 %v4324, %v4316
    %v5333 = vpack.c.b16 %v4325, %v4317
    %v5334 = vpack.c.b16 %v4326, %v4318
    %v5335 = vpack.c.b16 %v4327, %v4319
    %v5336 = vpack.c.b16 %v4328, %v4320
    %v5337 = vpack.c.b16 %v4329, %v4321
    %v5338 = vpack.c.b16 %v4330, %v4322
    %v5339 = vpack.c.b16 %v4331, %v4323
    %v5340 = vpack.c.b16 %v4340, %v4332
    %v5341 = vpack.c.b16 %v4341, %v4333
    %v5342 = vpack.c.b16 %v4342, %v4334
    %v5343 = vpack.c.b16 %v4343, %v4335
    %v5344 = vpack.c.b16 %v4344, %v4336
    %v5345 = vpack.c.b16 %v4345, %v4337
    %v5346 = vpack.c.b16 %v4346, %v4338
    %v5347 = vpack.c.b16 %v4347, %v4339
    %v5348 = vpack.c.b16 %v4356, %v4348
    %v5349 = vpack.c.b16 %v4357, %v4349
    %v5350 = vpack.c.b16 %v4358, %v4350
    %v5351 = vpack.c.b16 %v4359, %v4351
    %v5352 = vpack.c.b16 %v4360, %v4352
    %v5353 = vpack.c.b16 %v4361, %v4353
    %v5354 = vpack.c.b16 %v4362, %v4354
    %v5355 = vpack.c.b16 %v4363, %v4355
    %v5356 = vpack.c.b16 %v4372, %v4364
    %v5357 = vpack.c.b16 %v4373, %v4365
    %v5358 = vpack.c.b16 %v4374, %v4366
    %v5359 = vpack.c.b16 %v4375, %v4367
    %v5360 = vpack.c.b16 %v4376, %v4368
    %v5361 = vpack.c.b16 %v4377, %v4369
    %v5362 = vpack.c.b16 %v4378, %v4370
    %v5363 = vpack.c.b16 %v4379, %v4371
    %v5364 = vpack.c.b16 %v4388, %v4380
    %v5365 = vpack.c.b16 %v4389, %v4381
    %v5366 = vpack.c.b16 %v4390, %v4382
    %v5367 = vpack.c.b16 %v4391, %v4383
    %v5368 = vpack.c.b16 %v4392, %v4384
    %v5369 = vpack.c.b16 %v4393, %v4385
    %v5370 = vpack.c.b16 %v4394, %v4386
    %v5371 = vpack.c.b16 %v4395, %v4387
    %v5372 = vpack.c.b16 %v4404, %v4396
    %v5373 = vpack.c.b16 %v4405, %v4397
    %v5374 = vpack.c.b16 %v4406, %v4398
    %v5375 = vpack.c.b16 %v4407, %v4399
    %v5376 = vpack.c.b16 %v4408, %v4400
    %v5377 = vpack.c.b16 %v4409, %v4401
    %v5378 = vpack.c.b16 %v4410, %v4402
    %v5379 = vpack.c.b16 %v4411, %v4403
    %v5380 = vpack.c.b16 %v4420, %v4412
    %v5381 = vpack.c.b16 %v4421, %v4413
    %v5382 = vpack.c.b16 %v4422, %v4414
    %v5383 = vpack.c.b16 %v4423, %v4415
    %v5384 = vpack.c.b16 %v4424, %v4416
    %v5385 = vpack.c.b16 %v4425, %v4417
    %v5386 = vpack.c.b16 %v4426, %v4418
    %v5387 = vpack.c.b16 %v4427, %v4419
    %v5388 = vpack.c.b16 %v4436, %v4428
    %v5389 = vpack.c.b16 %v4437, %v4429
    %v5390 = vpack.c.b16 %v4438, %v4430
    %v5391 = vpack.c.b16 %v4439, %v4431
    %v5392 = vpack.c.b16 %v4440, %v4432
    %v5393 = vpack.c.b16 %v4441, %v4433
    %v5394 = vpack.c.b16 %v4442, %v4434
    %v5395 = vpack.c.b16 %v4443, %v4435
    %v5396 = vpack.c.b16 %v4452, %v4444
    %v5397 = vpack.c.b16 %v4453, %v4445
    %v5398 = vpack.c.b16 %v4454, %v4446
    %v5399 = vpack.c.b16 %v4455, %v4447
    %v5400 = vpack.c.b16 %v4456, %v4448
    %v5401 = vpack.c.b16 %v4457, %v4449
    %v5402 = vpack.c.b16 %v4458, %v4450
    %v5403 = vpack.c.b16 %v4459, %v4451
    %v5404 = vpack.c.b16 %v4468, %v4460
    %v5405 = vpack.c.b16 %v4469, %v4461
    %v5406 = vpack.c.b16 %v4470, %v4462
    %v5407 = vpack.c.b16 %v4471, %v4463
    %v5408 = vpack.c.b16 %v4472, %v4464
    %v5409 = vpack.c.b16 %v4473, %v4465
    %v5410 = vpack.c.b16 %v4474, %v4466
    %v5411 = vpack.c.b16 %v4475, %v4467
    %v5412 = vpack.c.b16 %v4484, %v4476
    %v5413 = vpack.c.b16 %v4485, %v4477
    %v5414 = vpack.c.b16 %v4486, %v4478
    %v5415 = vpack.c.b16 %v4487, %v4479
    %v5416 = vpack.c.b16 %v4488, %v4480
    %v5417 = vpack.c.b16 %v4489, %v4481
    %v5418 = vpack.c.b16 %v4490, %v4482
    %v5419 = vpack.c.b16 %v4491, %v4483
    %v5420 = vpack.c.b16 %v4500, %v4492
    %v5421 = vpack.c.b16 %v4501, %v4493
    %v5422 = vpack.c.b16 %v4502, %v4494
    %v5423 = vpack.c.b16 %v4503, %v4495
    %v5424 = vpack.c.b16 %v4504, %v4496
    %v5425 = vpack.c.b16 %v4505, %v4497
    %v5426 = vpack.c.b16 %v4506, %v4498
    %v5427 = vpack.c.b16 %v4507, %v4499
    %v5428 = vpack.c.b16 %v4516, %v4508
    %v5429 = vpack.c.b16 %v4517, %v4509
    %v5430 = vpack.c.b16 %v4518, %v4510
    %v5431 = vpack.c.b16 %v4519, %v4511
    %v5432 = vpack.c.b16 %v4520, %v4512
    %v5433 = vpack.c.b16 %v4521, %v4513
    %v5434 = vpack.c.b16 %v4522, %v4514
    %v5435 = vpack.c.b16 %v4523, %v4515
    %v5436 = vpack.c.b16 %v4532, %v4524
    %v5437 = vpack.c.b16 %v4533, %v4525
    %v5438 = vpack.c.b16 %v4534, %v4526
    %v5439 = vpack.c.b16 %v4535, %v4527
    %v5440 = vpack.c.b16 %v4536, %v4528
    %v5441 = vpack.c.b16 %v4537, %v4529
    %v5442 = vpack.c.b16 %v4538, %v4530
    %v5443 = vpack.c.b16 %v4539, %v4531
    %v5444 = vpack.c.b16 %v4548, %v4540
    %v5445 = vpack.c.b16 %v4549, %v4541
    %v5446 = vpack.c.b16 %v4550, %v4542
    %v5447 = vpack.c.b16 %v4551, %v4543
    %v5448 = vpack.c.b16 %v4552, %v4544
    %v5449 = vpack.c.b16 %v4553, %v4545
    %v5450 = vpack.c.b16 %v4554, %v4546
    %v5451 = vpack.c.b16 %v4555, %v4547
    %v5452 = vpack.c.b16 %v4564, %v4556
    %v5453 = vpack.c.b16 %v4565, %v4557
    %v5454 = vpack.c.b16 %v4566, %v4558
    %v5455 = vpack.c.b16 %v4567, %v4559
    %v5456 = vpack.c.b16 %v4568, %v4560
    %v5457 = vpack.c.b16 %v4569, %v4561
    %v5458 = vpack.c.b16 %v4570, %v4562
    %v5459 = vpack.c.b16 %v4571, %v4563
    %v5460 = vpack.c.b16 %v4580, %v4572
    %v5461 = vpack.c.b16 %v4581, %v4573
    %v5462 = vpack.c.b16 %v4582, %v4574
    %v5463 = vpack.c.b16 %v4583, %v4575
    %v5464 = vpack.c.b16 %v4584, %v4576
    %v5465 = vpack.c.b16 %v4585, %v4577
    %v5466 = vpack.c.b16 %v4586, %v4578
    %v5467 = vpack.c.b16 %v4587, %v4579
    %v5468 = vpack.c.b16 %v4596, %v4588
    %v5469 = vpack.c.b16 %v4597, %v4589
    %v5470 = vpack.c.b16 %v4598, %v4590
    %v5471 = vpack.c.b16 %v4599, %v4591
    %v5472 = vpack.c.b16 %v4600, %v4592
    %v5473 = vpack.c.b16 %v4601, %v4593
    %v5474 = vpack.c.b16 %v4602, %v4594
    %v5475 = vpack.c.b16 %v4603, %v4595
    %v5476 = vpack.c.b16 %v4612, %v4604
    %v5477 = vpack.c.b16 %v4613, %v4605
    %v5478 = vpack.c.b16 %v4614, %v4606
    %v5479 = vpack.c.b16 %v4615, %v4607
    %v5480 = vpack.c.b16 %v4616, %v4608
    %v5481 = vpack.c.b16 %v4617, %v4609
    %v5482 = vpack.c.b16 %v4618, %v4610
    %v5483 = vpack.c.b16 %v4619, %v4611
    %v5484 = vpack.c.b16 %v4628, %v4620
    %v5485 = vpack.c.b16 %v4629, %v4621
    %v5486 = vpack.c.b16 %v4630, %v4622
    %v5487 = vpack.c.b16 %v4631, %v4623
    %v5488 = vpack.c.b16 %v4632, %v4624
    %v5489 = vpack.c.b16 %v4633, %v4625
    %v5490 = vpack.c.b16 %v4634, %v4626
    %v5491 = vpack.c.b16 %v4635, %v4627
    %v5492 = vpack.c.b16 %v4644, %v4636
    %v5493 = vpack.c.b16 %v4645, %v4637
    %v5494 = vpack.c.b16 %v4646, %v4638
    %v5495 = vpack.c.b16 %v4647, %v4639
    %v5496 = vpack.c.b16 %v4648, %v4640
    %v5497 = vpack.c.b16 %v4649, %v4641
    %v5498 = vpack.c.b16 %v4650, %v4642
    %v5499 = vpack.c.b16 %v4651, %v4643
    %v5500 = vpack.c.b16 %v4660, %v4652
    %v5501 = vpack.c.b16 %v4661, %v4653
    %v5502 = vpack.c.b16 %v4662, %v4654
    %v5503 = vpack.c.b16 %v4663, %v4655
    %v5504 = vpack.c.b16 %v4664, %v4656
    %v5505 = vpack.c.b16 %v4665, %v4657
    %v5506 = vpack.c.b16 %v4666, %v4658
    %v5507 = vpack.c.b16 %v4667, %v4659
    %v5508 = vpack.c.b16 %v4676, %v4668
    %v5509 = vpack.c.b16 %v4677, %v4669
    %v5510 = vpack.c.b16 %v4678, %v4670
    %v5511 = vpack.c.b16 %v4679, %v4671
    %v5512 = vpack.c.b16 %v4680, %v4672
    %v5513 = vpack.c.b16 %v4681, %v4673
    %v5514 = vpack.c.b16 %v4682, %v4674
    %v5515 = vpack.c.b16 %v4683, %v4675
    %v5516 = vpack.c.b16 %v4692, %v4684
    %v5517 = vpack.c.b16 %v4693, %v4685
    %v5518 = vpack.c.b16 %v4694, %v4686
    %v5519 = vpack.c.b16 %v4695, %v4687
    %v5520 = vpack.c.b16 %v4696, %v4688
    %v5521 = vpack.c.b16 %v4697, %v4689
    %v5522 = vpack.c.b16 %v4698, %v4690
    %v5523 = vpack.c.b16 %v4699, %v4691
    %v5524 = vpack.c.b16 %v4708, %v4700
    %v5525 = vpack.c.b16 %v4709, %v4701
    %v5526 = vpack.c.b16 %v4710, %v4702
    %v5527 = vpack.c.b16 %v4711, %v4703
    %v5528 = vpack.c.b16 %v4712, %v4704
    %v5529 = vpack.c.b16 %v4713, %v4705
    %v5530 = vpack.c.b16 %v4714, %v4706
    %v5531 = vpack.c.b16 %v4715, %v4707
    %v5532 = vpack.c.b16 %v4724, %v4716
    %v5533 = vpack.c.b16 %v4725, %v4717
    %v5534 = vpack.c.b16 %v4726, %v4718
    %v5535 = vpack.c.b16 %v4727, %v4719
    %v5536 = vpack.c.b16 %v4728, %v4720
    %v5537 = vpack.c.b16 %v4729, %v4721
    %v5538 = vpack.c.b16 %v4730, %v4722
    %v5539 = vpack.c.b16 %v4731, %v4723
    %v5540 = vpack.c.b16 %v4740, %v4732
    %v5541 = vpack.c.b16 %v4741, %v4733
    %v5542 = vpack.c.b16 %v4742, %v4734
    %v5543 = vpack.c.b16 %v4743, %v4735
    %v5544 = vpack.c.b16 %v4744, %v4736
    %v5545 = vpack.c.b16 %v4745, %v4737
    %v5546 = vpack.c.b16 %v4746, %v4738
    %v5547 = vpack.c.b16 %v4747, %v4739
    %v5548 = vpack.c.b16 %v4756, %v4748
    %v5549 = vpack.c.b16 %v4757, %v4749
    %v5550 = vpack.c.b16 %v4758, %v4750
    %v5551 = vpack.c.b16 %v4759, %v4751
    %v5552 = vpack.c.b16 %v4760, %v4752
    %v5553 = vpack.c.b16 %v4761, %v4753
    %v5554 = vpack.c.b16 %v4762, %v4754
    %v5555 = vpack.c.b16 %v4763, %v4755
    %v5556 = vpack.c.b16 %v4772, %v4764
    %v5557 = vpack.c.b16 %v4773, %v4765
    %v5558 = vpack.c.b16 %v4774, %v4766
    %v5559 = vpack.c.b16 %v4775, %v4767
    %v5560 = vpack.c.b16 %v4776, %v4768
    %v5561 = vpack.c.b16 %v4777, %v4769
    %v5562 = vpack.c.b16 %v4778, %v4770
    %v5563 = vpack.c.b16 %v4779, %v4771
    %v5564 = vpack.c.b16 %v4788, %v4780
    %v5565 = vpack.c.b16 %v4789, %v4781
    %v5566 = vpack.c.b16 %v4790, %v4782
    %v5567 = vpack.c.b16 %v4791, %v4783
    %v5568 = vpack.c.b16 %v4792, %v4784
    %v5569 = vpack.c.b16 %v4793, %v4785
    %v5570 = vpack.c.b16 %v4794, %v4786
    %v5571 = vpack.c.b16 %v4795, %v4787
    %v5572 = vpack.c.b16 %v4804, %v4796
    %v5573 = vpack.c.b16 %v4805, %v4797
    %v5574 = vpack.c.b16 %v4806, %v4798
    %v5575 = vpack.c.b16 %v4807, %v4799
    %v5576 = vpack.c.b16 %v4808, %v4800
    %v5577 = vpack.c.b16 %v4809, %v4801
    %v5578 = vpack.c.b16 %v4810, %v4802
    %v5579 = vpack.c.b16 %v4811, %v4803
    %v5580 = vpack.c.b16 %v4820, %v4812
    %v5581 = vpack.c.b16 %v4821, %v4813
    %v5582 = vpack.c.b16 %v4822, %v4814
    %v5583 = vpack.c.b16 %v4823, %v4815
    %v5584 = vpack.c.b16 %v4824, %v4816
    %v5585 = vpack.c.b16 %v4825, %v4817
    %v5586 = vpack.c.b16 %v4826, %v4818
    %v5587 = vpack.c.b16 %v4827, %v4819
    %v5588 = vpack.c.b16 %v4836, %v4828
    %v5589 = vpack.c.b16 %v4837, %v4829
    %v5590 = vpack.c.b16 %v4838, %v4830
    %v5591 = vpack.c.b16 %v4839, %v4831
    %v5592 = vpack.c.b16 %v4840, %v4832
    %v5593 = vpack.c.b16 %v4841, %v4833
    %v5594 = vpack.c.b16 %v4842, %v4834
    %v5595 = vpack.c.b16 %v4843, %v4835
    %v5596 = vpack.c.b16 %v4852, %v4844
    %v5597 = vpack.c.b16 %v4853, %v4845
    %v5598 = vpack.c.b16 %v4854, %v4846
    %v5599 = vpack.c.b16 %v4855, %v4847
    %v5600 = vpack.c.b16 %v4856, %v4848
    %v5601 = vpack.c.b16 %v4857, %v4849
    %v5602 = vpack.c.b16 %v4858, %v4850
    %v5603 = vpack.c.b16 %v4859, %v4851
    %v5604 = vpack.c.b16 %v4868, %v4860
    %v5605 = vpack.c.b16 %v4869, %v4861
    %v5606 = vpack.c.b16 %v4870, %v4862
    %v5607 = vpack.c.b16 %v4871, %v4863
    %v5608 = vpack.c.b16 %v4872, %v4864
    %v5609 = vpack.c.b16 %v4873, %v4865
    %v5610 = vpack.c.b16 %v4874, %v4866
    %v5611 = vpack.c.b16 %v4875, %v4867
    %v5612 = vpack.c.b16 %v4884, %v4876
    %v5613 = vpack.c.b16 %v4885, %v4877
    %v5614 = vpack.c.b16 %v4886, %v4878
    %v5615 = vpack.c.b16 %v4887, %v4879
    %v5616 = vpack.c.b16 %v4888, %v4880
    %v5617 = vpack.c.b16 %v4889, %v4881
    %v5618 = vpack.c.b16 %v4890, %v4882
    %v5619 = vpack.c.b16 %v4891, %v4883
    %v5620 = vpack.c.b16 %v4900, %v4892
    %v5621 = vpack.c.b16 %v4901, %v4893
    %v5622 = vpack.c.b16 %v4902, %v4894
    %v5623 = vpack.c.b16 %v4903, %v4895
    %v5624 = vpack.c.b16 %v4904, %v4896
    %v5625 = vpack.c.b16 %v4905, %v4897
    %v5626 = vpack.c.b16 %v4906, %v4898
    %v5627 = vpack.c.b16 %v4907, %v4899
    %v5628 = vpack.c.b16 %v4916, %v4908
    %v5629 = vpack.c.b16 %v4917, %v4909
    %v5630 = vpack.c.b16 %v4918, %v4910
    %v5631 = vpack.c.b16 %v4919, %v4911
    %v5632 = vpack.c.b16 %v4920, %v4912
    %v5633 = vpack.c.b16 %v4921, %v4913
    %v5634 = vpack.c.b16 %v4922, %v4914
    %v5635 = vpack.c.b16 %v4923, %v4915
    %v5636 = vpack.c.b16 %v4932, %v4924
    %v5637 = vpack.c.b16 %v4933, %v4925
    %v5638 = vpack.c.b16 %v4934, %v4926
    %v5639 = vpack.c.b16 %v4935, %v4927
    %v5640 = vpack.c.b16 %v4936, %v4928
    %v5641 = vpack.c.b16 %v4937, %v4929
    %v5642 = vpack.c.b16 %v4938, %v4930
    %v5643 = vpack.c.b16 %v4939, %v4931
    %v5644 = vpack.c.b16 %v4948, %v4940
    %v5645 = vpack.c.b16 %v4949, %v4941
    %v5646 = vpack.c.b16 %v4950, %v4942
    %v5647 = vpack.c.b16 %v4951, %v4943
    %v5648 = vpack.c.b16 %v4952, %v4944
    %v5649 = vpack.c.b16 %v4953, %v4945
    %v5650 = vpack.c.b16 %v4954, %v4946
    %v5651 = vpack.c.b16 %v4955, %v4947
    %v5652 = vpack.c.b16 %v4964, %v4956
    %v5653 = vpack.c.b16 %v4965, %v4957
    %v5654 = vpack.c.b16 %v4966, %v4958
    %v5655 = vpack.c.b16 %v4967, %v4959
    %v5656 = vpack.c.b16 %v4968, %v4960
    %v5657 = vpack.c.b16 %v4969, %v4961
    %v5658 = vpack.c.b16 %v4970, %v4962
    %v5659 = vpack.c.b16 %v4971, %v4963
    %v5660 = vpack.c.b16 %v4980, %v4972
    %v5661 = vpack.c.b16 %v4981, %v4973
    %v5662 = vpack.c.b16 %v4982, %v4974
    %v5663 = vpack.c.b16 %v4983, %v4975
    %v5664 = vpack.c.b16 %v4984, %v4976
    %v5665 = vpack.c.b16 %v4985, %v4977
    %v5666 = vpack.c.b16 %v4986, %v4978
    %v5667 = vpack.c.b16 %v4987, %v4979
    %v5668 = vpack.c.b16 %v4996, %v4988
    %v5669 = vpack.c.b16 %v4997, %v4989
    %v5670 = vpack.c.b16 %v4998, %v4990
    %v5671 = vpack.c.b16 %v4999, %v4991
    %v5672 = vpack.c.b16 %v5000, %v4992
    %v5673 = vpack.c.b16 %v5001, %v4993
    %v5674 = vpack.c.b16 %v5002, %v4994
    %v5675 = vpack.c.b16 %v5003, %v4995
    %v5676 = vpack.c.b16 %v5012, %v5004
    %v5677 = vpack.c.b16 %v5013, %v5005
    %v5678 = vpack.c.b16 %v5014, %v5006
    %v5679 = vpack.c.b16 %v5015, %v5007
    %v5680 = vpack.c.b16 %v5016, %v5008
    %v5681 = vpack.c.b16 %v5017, %v5009
    %v5682 = vpack.c.b16 %v5018, %v5010
    %v5683 = vpack.c.b16 %v5019, %v5011
    %v5684 = vpack.c.b16 %v5028, %v5020
    %v5685 = vpack.c.b16 %v5029, %v5021
    %v5686 = vpack.c.b16 %v5030, %v5022
    %v5687 = vpack.c.b16 %v5031, %v5023
    %v5688 = vpack.c.b16 %v5032, %v5024
    %v5689 = vpack.c.b16 %v5033, %v5025
    %v5690 = vpack.c.b16 %v5034, %v5026
    %v5691 = vpack.c.b16 %v5035, %v5027
    %v5692 = vpack.c.b16 %v5044, %v5036
    %v5693 = vpack.c.b16 %v5045, %v5037
    %v5694 = vpack.c.b16 %v5046, %v5038
    %v5695 = vpack.c.b16 %v5047, %v5039
    %v5696 = vpack.c.b16 %v5048, %v5040
    %v5697 = vpack.c.b16 %v5049, %v5041
    %v5698 = vpack.c.b16 %v5050, %v5042
    %v5699 = vpack.c.b16 %v5051, %v5043
    %v5700 = vpack.c.b16 %v5060, %v5052
    %v5701 = vpack.c.b16 %v5061, %v5053
    %v5702 = vpack.c.b16 %v5062, %v5054
    %v5703 = vpack.c.b16 %v5063, %v5055
    %v5704 = vpack.c.b16 %v5064, %v5056
    %v5705 = vpack.c.b16 %v5065, %v5057
    %v5706 = vpack.c.b16 %v5066, %v5058
    %v5707 = vpack.c.b16 %v5067, %v5059
    %v5708 = vpack.c.b16 %v5076, %v5068
    %v5709 = vpack.c.b16 %v5077, %v5069
    %v5710 = vpack.c.b16 %v5078, %v5070
    %v5711 = vpack.c.b16 %v5079, %v5071
    %v5712 = vpack.c.b16 %v5080, %v5072
    %v5713 = vpack.c.b16 %v5081, %v5073
    %v5714 = vpack.c.b16 %v5082, %v5074
    %v5715 = vpack.c.b16 %v5083, %v5075
    %v5716 = vpack.c.b16 %v5092, %v5084
    %v5717 = vpack.c.b16 %v5093, %v5085
    %v5718 = vpack.c.b16 %v5094, %v5086
    %v5719 = vpack.c.b16 %v5095, %v5087
    %v5720 = vpack.c.b16 %v5096, %v5088
    %v5721 = vpack.c.b16 %v5097, %v5089
    %v5722 = vpack.c.b16 %v5098, %v5090
    %v5723 = vpack.c.b16 %v5099, %v5091
    %v5724 = vpack.c.b16 %v5108, %v5100
    %v5725 = vpack.c.b16 %v5109, %v5101
    %v5726 = vpack.c.b16 %v5110, %v5102
    %v5727 = vpack.c.b16 %v5111, %v5103
    %v5728 = vpack.c.b16 %v5112, %v5104
    %v5729 = vpack.c.b16 %v5113, %v5105
    %v5730 = vpack.c.b16 %v5114, %v5106
    %v5731 = vpack.c.b16 %v5115, %v5107
    %v5732 = vpack.c.b16 %v5124, %v5116
    %v5733 = vpack.c.b16 %v5125, %v5117
    %v5734 = vpack.c.b16 %v5126, %v5118
    %v5735 = vpack.c.b16 %v5127, %v5119
    %v5736 = vpack.c.b16 %v5128, %v5120
    %v5737 = vpack.c.b16 %v5129, %v5121
    %v5738 = vpack.c.b16 %v5130, %v5122
    %v5739 = vpack.c.b16 %v5131, %v5123
    %v5740 = vpack.c.b16 %v5140, %v5132
    %v5741 = vpack.c.b16 %v5141, %v5133
    %v5742 = vpack.c.b16 %v5142, %v5134
    %v5743 = vpack.c.b16 %v5143, %v5135
    %v5744 = vpack.c.b16 %v5144, %v5136
    %v5745 = vpack.c.b16 %v5145, %v5137
    %v5746 = vpack.c.b16 %v5146, %v5138
    %v5747 = vpack.c.b16 %v5147, %v5139
    %v5748 = vpack.c.b16 %v5156, %v5148
    %v5749 = vpack.c.b16 %v5157, %v5149
    %v5750 = vpack.c.b16 %v5158, %v5150
    %v5751 = vpack.c.b16 %v5159, %v5151
    %v5752 = vpack.c.b16 %v5160, %v5152
    %v5753 = vpack.c.b16 %v5161, %v5153
    %v5754 = vpack.c.b16 %v5162, %v5154
    %v5755 = vpack.c.b16 %v5163, %v5155
    %v5756 = vpack.c.b16 %v5172, %v5164
    %v5757 = vpack.c.b16 %v5173, %v5165
    %v5758 = vpack.c.b16 %v5174, %v5166
    %v5759 = vpack.c.b16 %v5175, %v5167
    %v5760 = vpack.c.b16 %v5176, %v5168
    %v5761 = vpack.c.b16 %v5177, %v5169
    %v5762 = vpack.c.b16 %v5178, %v5170
    %v5763 = vpack.c.b16 %v5179, %v5171
    %v5764 = vpack.c.b16 %v5188, %v5180
    %v5765 = vpack.c.b16 %v5189, %v5181
    %v5766 = vpack.c.b16 %v5190, %v5182
    %v5767 = vpack.c.b16 %v5191, %v5183
    %v5768 = vpack.c.b16 %v5192, %v5184
    %v5769 = vpack.c.b16 %v5193, %v5185
    %v5770 = vpack.c.b16 %v5194, %v5186
    %v5771 = vpack.c.b16 %v5195, %v5187
    %v5772 = vpack.c.b16 %v5204, %v5196
    %v5773 = vpack.c.b16 %v5205, %v5197
    %v5774 = vpack.c.b16 %v5206, %v5198
    %v5775 = vpack.c.b16 %v5207, %v5199
    %v5776 = vpack.c.b16 %v5208, %v5200
    %v5777 = vpack.c.b16 %v5209, %v5201
    %v5778 = vpack.c.b16 %v5210, %v5202
    %v5779 = vpack.c.b16 %v5211, %v5203
    %v5780 = vpack.c.b16 %v5220, %v5212
    %v5781 = vpack.c.b16 %v5221, %v5213
    %v5782 = vpack.c.b16 %v5222, %v5214
    %v5783 = vpack.c.b16 %v5223, %v5215
    %v5784 = vpack.c.b16 %v5224, %v5216
    %v5785 = vpack.c.b16 %v5225, %v5217
    %v5786 = vpack.c.b16 %v5226, %v5218
    %v5787 = vpack.c.b16 %v5227, %v5219
    %v5788 = vpack.c.b16 %v5236, %v5228
    %v5789 = vpack.c.b16 %v5237, %v5229
    %v5790 = vpack.c.b16 %v5238, %v5230
    %v5791 = vpack.c.b16 %v5239, %v5231
    %v5792 = vpack.c.b16 %v5240, %v5232
    %v5793 = vpack.c.b16 %v5241, %v5233
    %v5794 = vpack.c.b16 %v5242, %v5234
    %v5795 = vpack.c.b16 %v5243, %v5235
    %v5796 = vpack.c.b16 %v5252, %v5244
    %v5797 = vpack.c.b16 %v5253, %v5245
    %v5798 = vpack.c.b16 %v5254, %v5246
    %v5799 = vpack.c.b16 %v5255, %v5247
    %v5800 = vpack.c.b16 %v5256, %v5248
    %v5801 = vpack.c.b16 %v5257, %v5249
    %v5802 = vpack.c.b16 %v5258, %v5250
    %v5803 = vpack.c.b16 %v5259, %v5251
    %v5804 = vpack.c.b16 %v5268, %v5260
    %v5805 = vpack.c.b16 %v5269, %v5261
    %v5806 = vpack.c.b16 %v5270, %v5262
    %v5807 = vpack.c.b16 %v5271, %v5263
    %v5808 = vpack.c.b16 %v5272, %v5264
    %v5809 = vpack.c.b16 %v5273, %v5265
    %v5810 = vpack.c.b16 %v5274, %v5266
    %v5811 = vpack.c.b16 %v5275, %v5267
    %v5812 = vpack.c.b16 %v5284, %v5276
    %v5813 = vpack.c.b16 %v5285, %v5277
    %v5814 = vpack.c.b16 %v5286, %v5278
    %v5815 = vpack.c.b16 %v5287, %v5279
    %v5816 = vpack.c.b16 %v5288, %v5280
    %v5817 = vpack.c.b16 %v5289, %v5281
    %v5818 = vpack.c.b16 %v5290, %v5282
    %v5819 = vpack.c.b16 %v5291, %v5283
    %v5820 = vpack.c.b16 %v5300, %v5292
    %v5821 = vpack.c.b16 %v5301, %v5293
    %v5822 = vpack.c.b16 %v5302, %v5294
    %v5823 = vpack.c.b16 %v5303, %v5295
    %v5824 = vpack.c.b16 %v5304, %v5296
    %v5825 = vpack.c.b16 %v5305, %v5297
    %v5826 = vpack.c.b16 %v5306, %v5298
    %v5827 = vpack.c.b16 %v5307, %v5299
    %v5828 = vpack.c.b16 %v5316, %v5308
    %v5829 = vpack.c.b16 %v5317, %v5309
    %v5830 = vpack.c.b16 %v5318, %v5310
    %v5831 = vpack.c.b16 %v5319, %v5311
    %v5832 = vpack.c.b16 %v5320, %v5312
    %v5833 = vpack.c.b16 %v5321, %v5313
    %v5834 = vpack.c.b16 %v5322, %v5314
    %v5835 = vpack.c.b16 %v5323, %v5315
    %6348 = vmatprep.subr.bf16.mxu0 %v5325
    %6349 = vmatpush1.bf16.msra.mxu0 %v5324
    %6350 = vmatprep.subr.bf16.mxu0 %v5333
    %6351 = vmatpush1.bf16.msra.mxu0 %v5332
    %6352 = vmatprep.subr.bf16.mxu0 %v5341
    %6353 = vmatpush1.bf16.msra.mxu0 %v5340
    %6354 = vmatprep.subr.bf16.mxu0 %v5349
    %6355 = vmatpush1.bf16.msra.mxu0 %v5348
    %6356 = vmatprep.subr.bf16.mxu0 %v5357
    %6357 = vmatpush1.bf16.msra.mxu0 %v5356
    %6358 = vmatprep.subr.bf16.mxu0 %v5365
    %6359 = vmatpush1.bf16.msra.mxu0 %v5364
    %6360 = vmatprep.subr.bf16.mxu0 %v5373
    %6361 = vmatpush1.bf16.msra.mxu0 %v5372
    %6362 = vmatprep.subr.bf16.mxu0 %v5381
    %6363 = vmatpush1.bf16.msra.mxu0 %v5380
    %6364 = vmatprep.subr.bf16.mxu0 %v5389
    %6365 = vmatpush1.bf16.msra.mxu0 %v5388
    %6366 = vmatprep.subr.bf16.mxu0 %v5397
    %6367 = vmatpush1.bf16.msra.mxu0 %v5396
    %6368 = vmatprep.subr.bf16.mxu0 %v5405
    %6369 = vmatpush1.bf16.msra.mxu0 %v5404
    %6370 = vmatprep.subr.bf16.mxu0 %v5413
    %6371 = vmatpush1.bf16.msra.mxu0 %v5412
    %6372 = vmatprep.subr.bf16.mxu0 %v5421
    %6373 = vmatpush1.bf16.msra.mxu0 %v5420
    %6374 = vmatprep.subr.bf16.mxu0 %v5429
    %6375 = vmatpush1.bf16.msra.mxu0 %v5428
    %6376 = vmatprep.subr.bf16.mxu0 %v5437
    %6377 = vmatpush1.bf16.msra.mxu0 %v5436
    %6378 = vmatprep.subr.bf16.mxu0 %v5445
    %6379 = vmatpush1.bf16.msra.mxu0 %v5444
    %6380 = vmatprep.mubr.bf16.mxu0 %v3227
    %6381 = vmatmul.mubr.bf16.gmra.mrb[0].mxu0 %v3226
    %v6382 = vpop.f32.mrb[0].mxu0
    %v6383 = vadd.f32 %v3751, %v6382
    %v6384 = vpop.f32.mrb[0].mxu0
    %v6385 = vadd.f32 %v3755, %v6384
    %v6386 = vpop.f32.mrb[0].mxu0
    %v6387 = vadd.f32 %v3751, %v6386
    %v6388 = vpop.f32.mrb[0].mxu0
    %v6389 = vadd.f32 %v3755, %v6388
    %6390 = vdwg.mxu0
    %6391 = vmatprep.subr.bf16.mxu0 %v5453
    %6392 = vmatpush1.bf16.msra.mxu0 %v5452
    %6393 = vmatprep.subr.bf16.mxu0 %v5461
    %6394 = vmatpush1.bf16.msra.mxu0 %v5460
    %6395 = vmatprep.subr.bf16.mxu0 %v5469
    %6396 = vmatpush1.bf16.msra.mxu0 %v5468
    %6397 = vmatprep.subr.bf16.mxu0 %v5477
    %6398 = vmatpush1.bf16.msra.mxu0 %v5476
    %6399 = vmatprep.subr.bf16.mxu0 %v5485
    %6400 = vmatpush1.bf16.msra.mxu0 %v5484
    %6401 = vmatprep.subr.bf16.mxu0 %v5493
    %6402 = vmatpush1.bf16.msra.mxu0 %v5492
    %6403 = vmatprep.subr.bf16.mxu0 %v5501
    %6404 = vmatpush1.bf16.msra.mxu0 %v5500
    %6405 = vmatprep.subr.bf16.mxu0 %v5509
    %6406 = vmatpush1.bf16.msra.mxu0 %v5508
    %6407 = vmatprep.subr.bf16.mxu0 %v5517
    %6408 = vmatpush1.bf16.msra.mxu0 %v5516
    %6409 = vmatprep.subr.bf16.mxu0 %v5525
    %6410 = vmatpush1.bf16.msra.mxu0 %v5524
    %6411 = vmatprep.subr.bf16.mxu0 %v5533
    %6412 = vmatpush1.bf16.msra.mxu0 %v5532
    %6413 = vmatprep.subr.bf16.mxu0 %v5541
    %6414 = vmatpush1.bf16.msra.mxu0 %v5540
    %6415 = vmatprep.subr.bf16.mxu0 %v5549
    %6416 = vmatpush1.bf16.msra.mxu0 %v5548
    %6417 = vmatprep.subr.bf16.mxu0 %v5557
    %6418 = vmatpush1.bf16.msra.mxu0 %v5556
    %6419 = vmatprep.subr.bf16.mxu0 %v5565
    %6420 = vmatpush1.bf16.msra.mxu0 %v5564
    %6421 = vmatprep.subr.bf16.mxu0 %v5573
    %6422 = vmatpush1.bf16.msra.mxu0 %v5572
    %6423 = vmatprep.mubr.bf16.mxu0 %v3229
    %6424 = vmatmul.mubr.bf16.gmra.mrb[0].mxu0 %v3228
    %v6425 = vpop.f32.mrb[0].mxu0
    %v6426 = vadd.f32 %v6383, %v6425
    %v6427 = vpop.f32.mrb[0].mxu0
    %v6428 = vadd.f32 %v6385, %v6427
    %v6429 = vpop.f32.mrb[0].mxu0
    %v6430 = vadd.f32 %v6387, %v6429
    %v6431 = vpop.f32.mrb[0].mxu0
    %v6432 = vadd.f32 %v6389, %v6431
    %6433 = vdwg.mxu0
    %6434 = vmatprep.subr.bf16.mxu0 %v5581
    %6435 = vmatpush1.bf16.msra.mxu0 %v5580
    %6436 = vmatprep.subr.bf16.mxu0 %v5589
    %6437 = vmatpush1.bf16.msra.mxu0 %v5588
    %6438 = vmatprep.subr.bf16.mxu0 %v5597
    %6439 = vmatpush1.bf16.msra.mxu0 %v5596
    %6440 = vmatprep.subr.bf16.mxu0 %v5605
    %6441 = vmatpush1.bf16.msra.mxu0 %v5604
    %6442 = vmatprep.subr.bf16.mxu0 %v5613
    %6443 = vmatpush1.bf16.msra.mxu0 %v5612
    %6444 = vmatprep.subr.bf16.mxu0 %v5621
    %6445 = vmatpush1.bf16.msra.mxu0 %v5620
    %6446 = vmatprep.subr.bf16.mxu0 %v5629
    %6447 = vmatpush1.bf16.msra.mxu0 %v5628
    %6448 = vmatprep.subr.bf16.mxu0 %v5637
    %6449 = vmatpush1.bf16.msra.mxu0 %v5636
    %6450 = vmatprep.subr.bf16.mxu0 %v5645
    %6451 = vmatpush1.bf16.msra.mxu0 %v5644
    %6452 = vmatprep.subr.bf16.mxu0 %v5653
    %6453 = vmatpush1.bf16.msra.mxu0 %v5652
    %6454 = vmatprep.subr.bf16.mxu0 %v5661
    %6455 = vmatpush1.bf16.msra.mxu0 %v5660
    %6456 = vmatprep.subr.bf16.mxu0 %v5669
    %6457 = vmatpush1.bf16.msra.mxu0 %v5668
    %6458 = vmatprep.subr.bf16.mxu0 %v5677
    %6459 = vmatpush1.bf16.msra.mxu0 %v5676
    %6460 = vmatprep.subr.bf16.mxu0 %v5685
    %6461 = vmatpush1.bf16.msra.mxu0 %v5684
    %6462 = vmatprep.subr.bf16.mxu0 %v5693
    %6463 = vmatpush1.bf16.msra.mxu0 %v5692
    %6464 = vmatprep.subr.bf16.mxu0 %v5701
    %6465 = vmatpush1.bf16.msra.mxu0 %v5700
    %6466 = vmatprep.mubr.bf16.mxu0 %v3231
    %6467 = vmatmul.mubr.bf16.gmra.mrb[0].mxu0 %v3230
    %v6468 = vpop.f32.mrb[0].mxu0
    %v6469 = vadd.f32 %v6426, %v6468
    %v6470 = vpop.f32.mrb[0].mxu0
    %v6471 = vadd.f32 %v6428, %v6470
    %v6472 = vpop.f32.mrb[0].mxu0
    %v6473 = vadd.f32 %v6430, %v6472
    %v6474 = vpop.f32.mrb[0].mxu0
    %v6475 = vadd.f32 %v6432, %v6474
    %6476 = vdwg.mxu0
    %6477 = vmatprep.subr.bf16.mxu0 %v5709
    %6478 = vmatpush1.bf16.msra.mxu0 %v5708
    %6479 = vmatprep.subr.bf16.mxu0 %v5717
    %6480 = vmatpush1.bf16.msra.mxu0 %v5716
    %6481 = vmatprep.subr.bf16.mxu0 %v5725
    %6482 = vmatpush1.bf16.msra.mxu0 %v5724
    %6483 = vmatprep.subr.bf16.mxu0 %v5733
    %6484 = vmatpush1.bf16.msra.mxu0 %v5732
    %6485 = vmatprep.subr.bf16.mxu0 %v5741
    %6486 = vmatpush1.bf16.msra.mxu0 %v5740
    %6487 = vmatprep.subr.bf16.mxu0 %v5749
    %6488 = vmatpush1.bf16.msra.mxu0 %v5748
    %6489 = vmatprep.subr.bf16.mxu0 %v5757
    %6490 = vmatpush1.bf16.msra.mxu0 %v5756
    %6491 = vmatprep.subr.bf16.mxu0 %v5765
    %6492 = vmatpush1.bf16.msra.mxu0 %v5764
    %6493 = vmatprep.subr.bf16.mxu0 %v5773
    %6494 = vmatpush1.bf16.msra.mxu0 %v5772
    %6495 = vmatprep.subr.bf16.mxu0 %v5781
    %6496 = vmatpush1.bf16.msra.mxu0 %v5780
    %6497 = vmatprep.subr.bf16.mxu0 %v5789
    %6498 = vmatpush1.bf16.msra.mxu0 %v5788
    %6499 = vmatprep.subr.bf16.mxu0 %v5797
    %6500 = vmatpush1.bf16.msra.mxu0 %v5796
    %6501 = vmatprep.subr.bf16.mxu0 %v5805
    %6502 = vmatpush1.bf16.msra.mxu0 %v5804
    %6503 = vmatprep.subr.bf16.mxu0 %v5813
    %6504 = vmatpush1.bf16.msra.mxu0 %v5812
    %6505 = vmatprep.subr.bf16.mxu0 %v5821
    %6506 = vmatpush1.bf16.msra.mxu0 %v5820
    %6507 = vmatprep.subr.bf16.mxu0 %v5829
    %6508 = vmatpush1.bf16.msra.mxu0 %v5828
    %6509 = vmatprep.mubr.bf16.mxu0 %v3233
    %6510 = vmatmul.mubr.bf16.gmra.mrb[0].mxu0 %v3232
    %v6511 = vpop.f32.mrb[0].mxu0
    %v6512 = vadd.f32 %v6469, %v6511
    %v6513 = vpop.f32.mrb[0].mxu0
    %v6514 = vadd.f32 %v6471, %v6513
    %v6515 = vpop.f32.mrb[0].mxu0
    %v6516 = vadd.f32 %v6473, %v6515
    %v6517 = vpop.f32.mrb[0].mxu0
    %v6518 = vadd.f32 %v6475, %v6517
    %6519 = vdwg.mxu0
    %6520 = vmatprep.subr.bf16.mxu0 %v5327
    %6521 = vmatpush1.bf16.msra.mxu0 %v5326
    %6522 = vmatprep.subr.bf16.mxu0 %v5335
    %6523 = vmatpush1.bf16.msra.mxu0 %v5334
    %6524 = vmatprep.subr.bf16.mxu0 %v5343
    %6525 = vmatpush1.bf16.msra.mxu0 %v5342
    %6526 = vmatprep.subr.bf16.mxu0 %v5351
    %6527 = vmatpush1.bf16.msra.mxu0 %v5350
    %6528 = vmatprep.subr.bf16.mxu0 %v5359
    %6529 = vmatpush1.bf16.msra.mxu0 %v5358
    %6530 = vmatprep.subr.bf16.mxu0 %v5367
    %6531 = vmatpush1.bf16.msra.mxu0 %v5366
    %6532 = vmatprep.subr.bf16.mxu0 %v5375
    %6533 = vmatpush1.bf16.msra.mxu0 %v5374
    %6534 = vmatprep.subr.bf16.mxu0 %v5383
    %6535 = vmatpush1.bf16.msra.mxu0 %v5382
    %6536 = vmatprep.subr.bf16.mxu0 %v5391
    %6537 = vmatpush1.bf16.msra.mxu0 %v5390
    %6538 = vmatprep.subr.bf16.mxu0 %v5399
    %6539 = vmatpush1.bf16.msra.mxu0 %v5398
    %6540 = vmatprep.subr.bf16.mxu0 %v5407
    %6541 = vmatpush1.bf16.msra.mxu0 %v5406
    %6542 = vmatprep.subr.bf16.mxu0 %v5415
    %6543 = vmatpush1.bf16.msra.mxu0 %v5414
    %6544 = vmatprep.subr.bf16.mxu0 %v5423
    %6545 = vmatpush1.bf16.msra.mxu0 %v5422
    %6546 = vmatprep.subr.bf16.mxu0 %v5431
    %6547 = vmatpush1.bf16.msra.mxu0 %v5430
    %6548 = vmatprep.subr.bf16.mxu0 %v5439
    %6549 = vmatpush1.bf16.msra.mxu0 %v5438
    %6550 = vmatprep.subr.bf16.mxu0 %v5447
    %6551 = vmatpush1.bf16.msra.mxu0 %v5446
    %6552 = vmatprep.mubr.bf16.mxu0 %v3227
    %6553 = vmatmul.mubr.bf16.gmra.mrb[0].mxu0 %v3226
    %v6554 = vpop.f32.mrb[0].mxu0
    %v6555 = vadd.f32 %v3759, %v6554
    %v6556 = vpop.f32.mrb[0].mxu0
    %v6557 = vadd.f32 %v3763, %v6556
    %v6558 = vpop.f32.mrb[0].mxu0
    %v6559 = vadd.f32 %v3759, %v6558
    %v6560 = vpop.f32.mrb[0].mxu0
    %v6561 = vadd.f32 %v3763, %v6560
    %6562 = vdwg.mxu0
    %6563 = vmatprep.subr.bf16.mxu0 %v5455
    %6564 = vmatpush1.bf16.msra.mxu0 %v5454
    %6565 = vmatprep.subr.bf16.mxu0 %v5463
    %6566 = vmatpush1.bf16.msra.mxu0 %v5462
    %6567 = vmatprep.subr.bf16.mxu0 %v5471
    %6568 = vmatpush1.bf16.msra.mxu0 %v5470
    %6569 = vmatprep.subr.bf16.mxu0 %v5479
    %6570 = vmatpush1.bf16.msra.mxu0 %v5478
    %6571 = vmatprep.subr.bf16.mxu0 %v5487
    %6572 = vmatpush1.bf16.msra.mxu0 %v5486
    %6573 = vmatprep.subr.bf16.mxu0 %v5495
    %6574 = vmatpush1.bf16.msra.mxu0 %v5494
    %6575 = vmatprep.subr.bf16.mxu0 %v5503
    %6576 = vmatpush1.bf16.msra.mxu0 %v5502
    %6577 = vmatprep.subr.bf16.mxu0 %v5511
    %6578 = vmatpush1.bf16.msra.mxu0 %v5510
    %6579 = vmatprep.subr.bf16.mxu0 %v5519
    %6580 = vmatpush1.bf16.msra.mxu0 %v5518
    %6581 = vmatprep.subr.bf16.mxu0 %v5527
    %6582 = vmatpush1.bf16.msra.mxu0 %v5526
    %6583 = vmatprep.subr.bf16.mxu0 %v5535
    %6584 = vmatpush1.bf16.msra.mxu0 %v5534
    %6585 = vmatprep.subr.bf16.mxu0 %v5543
    %6586 = vmatpush1.bf16.msra.mxu0 %v5542
    %6587 = vmatprep.subr.bf16.mxu0 %v5551
    %6588 = vmatpush1.bf16.msra.mxu0 %v5550
    %6589 = vmatprep.subr.bf16.mxu0 %v5559
    %6590 = vmatpush1.bf16.msra.mxu0 %v5558
    %6591 = vmatprep.subr.bf16.mxu0 %v5567
    %6592 = vmatpush1.bf16.msra.mxu0 %v5566
    %6593 = vmatprep.subr.bf16.mxu0 %v5575
    %6594 = vmatpush1.bf16.msra.mxu0 %v5574
    %6595 = vmatprep.mubr.bf16.mxu0 %v3229
    %6596 = vmatmul.mubr.bf16.gmra.mrb[0].mxu0 %v3228
    %v6597 = vpop.f32.mrb[0].mxu0
    %v6598 = vadd.f32 %v6555, %v6597
    %v6599 = vpop.f32.mrb[0].mxu0
    %v6600 = vadd.f32 %v6557, %v6599
    %v6601 = vpop.f32.mrb[0].mxu0
    %v6602 = vadd.f32 %v6559, %v6601
    %v6603 = vpop.f32.mrb[0].mxu0
    %v6604 = vadd.f32 %v6561, %v6603
    %6605 = vdwg.mxu0
    %6606 = vmatprep.subr.bf16.mxu0 %v5583
    %6607 = vmatpush1.bf16.msra.mxu0 %v5582
    %6608 = vmatprep.subr.bf16.mxu0 %v5591
    %6609 = vmatpush1.bf16.msra.mxu0 %v5590
    %6610 = vmatprep.subr.bf16.mxu0 %v5599
    %6611 = vmatpush1.bf16.msra.mxu0 %v5598
    %6612 = vmatprep.subr.bf16.mxu0 %v5607
    %6613 = vmatpush1.bf16.msra.mxu0 %v5606
    %6614 = vmatprep.subr.bf16.mxu0 %v5615
    %6615 = vmatpush1.bf16.msra.mxu0 %v5614
    %6616 = vmatprep.subr.bf16.mxu0 %v5623
    %6617 = vmatpush1.bf16.msra.mxu0 %v5622
    %6618 = vmatprep.subr.bf16.mxu0 %v5631
    %6619 = vmatpush1.bf16.msra.mxu0 %v5630
    %6620 = vmatprep.subr.bf16.mxu0 %v5639
    %6621 = vmatpush1.bf16.msra.mxu0 %v5638
    %6622 = vmatprep.subr.bf16.mxu0 %v5647
    %6623 = vmatpush1.bf16.msra.mxu0 %v5646
    %6624 = vmatprep.subr.bf16.mxu0 %v5655
    %6625 = vmatpush1.bf16.msra.mxu0 %v5654
    %6626 = vmatprep.subr.bf16.mxu0 %v5663
    %6627 = vmatpush1.bf16.msra.mxu0 %v5662
    %6628 = vmatprep.subr.bf16.mxu0 %v5671
    %6629 = vmatpush1.bf16.msra.mxu0 %v5670
    %6630 = vmatprep.subr.bf16.mxu0 %v5679
    %6631 = vmatpush1.bf16.msra.mxu0 %v5678
    %6632 = vmatprep.subr.bf16.mxu0 %v5687
    %6633 = vmatpush1.bf16.msra.mxu0 %v5686
    %6634 = vmatprep.subr.bf16.mxu0 %v5695
    %6635 = vmatpush1.bf16.msra.mxu0 %v5694
    %6636 = vmatprep.subr.bf16.mxu0 %v5703
    %6637 = vmatpush1.bf16.msra.mxu0 %v5702
    %6638 = vmatprep.mubr.bf16.mxu0 %v3231
    %6639 = vmatmul.mubr.bf16.gmra.mrb[0].mxu0 %v3230
    %v6640 = vpop.f32.mrb[0].mxu0
    %v6641 = vadd.f32 %v6598, %v6640
    %v6642 = vpop.f32.mrb[0].mxu0
    %v6643 = vadd.f32 %v6600, %v6642
    %v6644 = vpop.f32.mrb[0].mxu0
    %v6645 = vadd.f32 %v6602, %v6644
    %v6646 = vpop.f32.mrb[0].mxu0
    %v6647 = vadd.f32 %v6604, %v6646
    %6648 = vdwg.mxu0
    %6649 = vmatprep.subr.bf16.mxu0 %v5711
    %6650 = vmatpush1.bf16.msra.mxu0 %v5710
    %6651 = vmatprep.subr.bf16.mxu0 %v5719
    %6652 = vmatpush1.bf16.msra.mxu0 %v5718
    %6653 = vmatprep.subr.bf16.mxu0 %v5727
    %6654 = vmatpush1.bf16.msra.mxu0 %v5726
    %6655 = vmatprep.subr.bf16.mxu0 %v5735
    %6656 = vmatpush1.bf16.msra.mxu0 %v5734
    %6657 = vmatprep.subr.bf16.mxu0 %v5743
    %6658 = vmatpush1.bf16.msra.mxu0 %v5742
    %6659 = vmatprep.subr.bf16.mxu0 %v5751
    %6660 = vmatpush1.bf16.msra.mxu0 %v5750
    %6661 = vmatprep.subr.bf16.mxu0 %v5759
    %6662 = vmatpush1.bf16.msra.mxu0 %v5758
    %6663 = vmatprep.subr.bf16.mxu0 %v5767
    %6664 = vmatpush1.bf16.msra.mxu0 %v5766
    %6665 = vmatprep.subr.bf16.mxu0 %v5775
    %6666 = vmatpush1.bf16.msra.mxu0 %v5774
    %6667 = vmatprep.subr.bf16.mxu0 %v5783
    %6668 = vmatpush1.bf16.msra.mxu0 %v5782
    %6669 = vmatprep.subr.bf16.mxu0 %v5791
    %6670 = vmatpush1.bf16.msra.mxu0 %v5790
    %6671 = vmatprep.subr.bf16.mxu0 %v5799
    %6672 = vmatpush1.bf16.msra.mxu0 %v5798
    %6673 = vmatprep.subr.bf16.mxu0 %v5807
    %6674 = vmatpush1.bf16.msra.mxu0 %v5806
    %6675 = vmatprep.subr.bf16.mxu0 %v5815
    %6676 = vmatpush1.bf16.msra.mxu0 %v5814
    %6677 = vmatprep.subr.bf16.mxu0 %v5823
    %6678 = vmatpush1.bf16.msra.mxu0 %v5822
    %6679 = vmatprep.subr.bf16.mxu0 %v5831
    %6680 = vmatpush1.bf16.msra.mxu0 %v5830
    %6681 = vmatprep.mubr.bf16.mxu0 %v3233
    %6682 = vmatmul.mubr.bf16.gmra.mrb[0].mxu0 %v3232
    %v6683 = vpop.f32.mrb[0].mxu0
    %v6684 = vadd.f32 %v6641, %v6683
    %v6685 = vpop.f32.mrb[0].mxu0
    %v6686 = vadd.f32 %v6643, %v6685
    %v6687 = vpop.f32.mrb[0].mxu0
    %v6688 = vadd.f32 %v6645, %v6687
    %v6689 = vpop.f32.mrb[0].mxu0
    %v6690 = vadd.f32 %v6647, %v6689
    %6691 = vdwg.mxu0
    %6692 = vmatprep.subr.bf16.mxu0 %v5329
    %6693 = vmatpush1.bf16.msra.mxu0 %v5328
    %6694 = vmatprep.subr.bf16.mxu0 %v5337
    %6695 = vmatpush1.bf16.msra.mxu0 %v5336
    %6696 = vmatprep.subr.bf16.mxu0 %v5345
    %6697 = vmatpush1.bf16.msra.mxu0 %v5344
    %6698 = vmatprep.subr.bf16.mxu0 %v5353
    %6699 = vmatpush1.bf16.msra.mxu0 %v5352
    %6700 = vmatprep.subr.bf16.mxu0 %v5361
    %6701 = vmatpush1.bf16.msra.mxu0 %v5360
    %6702 = vmatprep.subr.bf16.mxu0 %v5369
    %6703 = vmatpush1.bf16.msra.mxu0 %v5368
    %6704 = vmatprep.subr.bf16.mxu0 %v5377
    %6705 = vmatpush1.bf16.msra.mxu0 %v5376
    %6706 = vmatprep.subr.bf16.mxu0 %v5385
    %6707 = vmatpush1.bf16.msra.mxu0 %v5384
    %6708 = vmatprep.subr.bf16.mxu0 %v5393
    %6709 = vmatpush1.bf16.msra.mxu0 %v5392
    %6710 = vmatprep.subr.bf16.mxu0 %v5401
    %6711 = vmatpush1.bf16.msra.mxu0 %v5400
    %6712 = vmatprep.subr.bf16.mxu0 %v5409
    %6713 = vmatpush1.bf16.msra.mxu0 %v5408
    %6714 = vmatprep.subr.bf16.mxu0 %v5417
    %6715 = vmatpush1.bf16.msra.mxu0 %v5416
    %6716 = vmatprep.subr.bf16.mxu0 %v5425
    %6717 = vmatpush1.bf16.msra.mxu0 %v5424
    %6718 = vmatprep.subr.bf16.mxu0 %v5433
    %6719 = vmatpush1.bf16.msra.mxu0 %v5432
    %6720 = vmatprep.subr.bf16.mxu0 %v5441
    %6721 = vmatpush1.bf16.msra.mxu0 %v5440
    %6722 = vmatprep.subr.bf16.mxu0 %v5449
    %6723 = vmatpush1.bf16.msra.mxu0 %v5448
    %6724 = vmatprep.mubr.bf16.mxu0 %v3227
    %6725 = vmatmul.mubr.bf16.gmra.mrb[0].mxu0 %v3226
    %v6726 = vpop.f32.mrb[0].mxu0
    %v6727 = vadd.f32 %v3767, %v6726
    %v6728 = vpop.f32.mrb[0].mxu0
    %v6729 = vadd.f32 %v3771, %v6728
    %v6730 = vpop.f32.mrb[0].mxu0
    %v6731 = vadd.f32 %v3767, %v6730
    %v6732 = vpop.f32.mrb[0].mxu0
    %v6733 = vadd.f32 %v3771, %v6732
    %6734 = vdwg.mxu0
    %6735 = vmatprep.subr.bf16.mxu0 %v5457
    %6736 = vmatpush1.bf16.msra.mxu0 %v5456
    %6737 = vmatprep.subr.bf16.mxu0 %v5465
    %6738 = vmatpush1.bf16.msra.mxu0 %v5464
    %6739 = vmatprep.subr.bf16.mxu0 %v5473
    %6740 = vmatpush1.bf16.msra.mxu0 %v5472
    %6741 = vmatprep.subr.bf16.mxu0 %v5481
    %6742 = vmatpush1.bf16.msra.mxu0 %v5480
    %6743 = vmatprep.subr.bf16.mxu0 %v5489
    %6744 = vmatpush1.bf16.msra.mxu0 %v5488
    %6745 = vmatprep.subr.bf16.mxu0 %v5497
    %6746 = vmatpush1.bf16.msra.mxu0 %v5496
    %6747 = vmatprep.subr.bf16.mxu0 %v5505
    %6748 = vmatpush1.bf16.msra.mxu0 %v5504
    %6749 = vmatprep.subr.bf16.mxu0 %v5513
    %6750 = vmatpush1.bf16.msra.mxu0 %v5512
    %6751 = vmatprep.subr.bf16.mxu0 %v5521
    %6752 = vmatpush1.bf16.msra.mxu0 %v5520
    %6753 = vmatprep.subr.bf16.mxu0 %v5529
    %6754 = vmatpush1.bf16.msra.mxu0 %v5528
    %6755 = vmatprep.subr.bf16.mxu0 %v5537
    %6756 = vmatpush1.bf16.msra.mxu0 %v5536
    %6757 = vmatprep.subr.bf16.mxu0 %v5545
    %6758 = vmatpush1.bf16.msra.mxu0 %v5544
    %6759 = vmatprep.subr.bf16.mxu0 %v5553
    %6760 = vmatpush1.bf16.msra.mxu0 %v5552
    %6761 = vmatprep.subr.bf16.mxu0 %v5561
    %6762 = vmatpush1.bf16.msra.mxu0 %v5560
    %6763 = vmatprep.subr.bf16.mxu0 %v5569
    %6764 = vmatpush1.bf16.msra.mxu0 %v5568
    %6765 = vmatprep.subr.bf16.mxu0 %v5577
    %6766 = vmatpush1.bf16.msra.mxu0 %v5576
    %6767 = vmatprep.mubr.bf16.mxu0 %v3229
    %6768 = vmatmul.mubr.bf16.gmra.mrb[0].mxu0 %v3228
    %v6769 = vpop.f32.mrb[0].mxu0
    %v6770 = vadd.f32 %v6727, %v6769
    %v6771 = vpop.f32.mrb[0].mxu0
    %v6772 = vadd.f32 %v6729, %v6771
    %v6773 = vpop.f32.mrb[0].mxu0
    %v6774 = vadd.f32 %v6731, %v6773
    %v6775 = vpop.f32.mrb[0].mxu0
    %v6776 = vadd.f32 %v6733, %v6775
    %6777 = vdwg.mxu0
    %6778 = vmatprep.subr.bf16.mxu0 %v5585
    %6779 = vmatpush1.bf16.msra.mxu0 %v5584
    %6780 = vmatprep.subr.bf16.mxu0 %v5593
    %6781 = vmatpush1.bf16.msra.mxu0 %v5592
    %6782 = vmatprep.subr.bf16.mxu0 %v5601
    %6783 = vmatpush1.bf16.msra.mxu0 %v5600
    %6784 = vmatprep.subr.bf16.mxu0 %v5609
    %6785 = vmatpush1.bf16.msra.mxu0 %v5608
    %6786 = vmatprep.subr.bf16.mxu0 %v5617
    %6787 = vmatpush1.bf16.msra.mxu0 %v5616
    %6788 = vmatprep.subr.bf16.mxu0 %v5625
    %6789 = vmatpush1.bf16.msra.mxu0 %v5624
    %6790 = vmatprep.subr.bf16.mxu0 %v5633
    %6791 = vmatpush1.bf16.msra.mxu0 %v5632
    %6792 = vmatprep.subr.bf16.mxu0 %v5641
    %6793 = vmatpush1.bf16.msra.mxu0 %v5640
    %6794 = vmatprep.subr.bf16.mxu0 %v5649
    %6795 = vmatpush1.bf16.msra.mxu0 %v5648
    %6796 = vmatprep.subr.bf16.mxu0 %v5657
    %6797 = vmatpush1.bf16.msra.mxu0 %v5656
    %6798 = vmatprep.subr.bf16.mxu0 %v5665
    %6799 = vmatpush1.bf16.msra.mxu0 %v5664
    %6800 = vmatprep.subr.bf16.mxu0 %v5673
    %6801 = vmatpush1.bf16.msra.mxu0 %v5672
    %6802 = vmatprep.subr.bf16.mxu0 %v5681
    %6803 = vmatpush1.bf16.msra.mxu0 %v5680
    %6804 = vmatprep.subr.bf16.mxu0 %v5689
    %6805 = vmatpush1.bf16.msra.mxu0 %v5688
    %6806 = vmatprep.subr.bf16.mxu0 %v5697
    %6807 = vmatpush1.bf16.msra.mxu0 %v5696
    %6808 = vmatprep.subr.bf16.mxu0 %v5705
    %6809 = vmatpush1.bf16.msra.mxu0 %v5704
    %6810 = vmatprep.mubr.bf16.mxu0 %v3231
    %6811 = vmatmul.mubr.bf16.gmra.mrb[0].mxu0 %v3230
    %v6812 = vpop.f32.mrb[0].mxu0
    %v6813 = vadd.f32 %v6770, %v6812
    %v6814 = vpop.f32.mrb[0].mxu0
    %v6815 = vadd.f32 %v6772, %v6814
    %v6816 = vpop.f32.mrb[0].mxu0
    %v6817 = vadd.f32 %v6774, %v6816
    %v6818 = vpop.f32.mrb[0].mxu0
    %v6819 = vadd.f32 %v6776, %v6818
    %6820 = vdwg.mxu0
    %6821 = vmatprep.subr.bf16.mxu0 %v5713
    %6822 = vmatpush1.bf16.msra.mxu0 %v5712
    %6823 = vmatprep.subr.bf16.mxu0 %v5721
    %6824 = vmatpush1.bf16.msra.mxu0 %v5720
    %6825 = vmatprep.subr.bf16.mxu0 %v5729
    %6826 = vmatpush1.bf16.msra.mxu0 %v5728
    %6827 = vmatprep.subr.bf16.mxu0 %v5737
    %6828 = vmatpush1.bf16.msra.mxu0 %v5736
    %6829 = vmatprep.subr.bf16.mxu0 %v5745
    %6830 = vmatpush1.bf16.msra.mxu0 %v5744
    %6831 = vmatprep.subr.bf16.mxu0 %v5753
    %6832 = vmatpush1.bf16.msra.mxu0 %v5752
    %6833 = vmatprep.subr.bf16.mxu0 %v5761
    %6834 = vmatpush1.bf16.msra.mxu0 %v5760
    %6835 = vmatprep.subr.bf16.mxu0 %v5769
    %6836 = vmatpush1.bf16.msra.mxu0 %v5768
    %6837 = vmatprep.subr.bf16.mxu0 %v5777
    %6838 = vmatpush1.bf16.msra.mxu0 %v5776
    %6839 = vmatprep.subr.bf16.mxu0 %v5785
    %6840 = vmatpush1.bf16.msra.mxu0 %v5784
    %6841 = vmatprep.subr.bf16.mxu0 %v5793
    %6842 = vmatpush1.bf16.msra.mxu0 %v5792
    %6843 = vmatprep.subr.bf16.mxu0 %v5801
    %6844 = vmatpush1.bf16.msra.mxu0 %v5800
    %6845 = vmatprep.subr.bf16.mxu0 %v5809
    %6846 = vmatpush1.bf16.msra.mxu0 %v5808
    %6847 = vmatprep.subr.bf16.mxu0 %v5817
    %6848 = vmatpush1.bf16.msra.mxu0 %v5816
    %6849 = vmatprep.subr.bf16.mxu0 %v5825
    %6850 = vmatpush1.bf16.msra.mxu0 %v5824
    %6851 = vmatprep.subr.bf16.mxu0 %v5833
    %6852 = vmatpush1.bf16.msra.mxu0 %v5832
    %6853 = vmatprep.mubr.bf16.mxu0 %v3233
    %6854 = vmatmul.mubr.bf16.gmra.mrb[0].mxu0 %v3232
    %v6855 = vpop.f32.mrb[0].mxu0
    %v6856 = vadd.f32 %v6813, %v6855
    %v6857 = vpop.f32.mrb[0].mxu0
    %v6858 = vadd.f32 %v6815, %v6857
    %v6859 = vpop.f32.mrb[0].mxu0
    %v6860 = vadd.f32 %v6817, %v6859
    %v6861 = vpop.f32.mrb[0].mxu0
    %v6862 = vadd.f32 %v6819, %v6861
    %6863 = vdwg.mxu0
    %6864 = vmatprep.subr.bf16.mxu0 %v5331
    %6865 = vmatpush1.bf16.msra.mxu0 %v5330
    %6866 = vmatprep.subr.bf16.mxu0 %v5339
    %6867 = vmatpush1.bf16.msra.mxu0 %v5338
    %6868 = vmatprep.subr.bf16.mxu0 %v5347
    %6869 = vmatpush1.bf16.msra.mxu0 %v5346
    %6870 = vmatprep.subr.bf16.mxu0 %v5355
    %6871 = vmatpush1.bf16.msra.mxu0 %v5354
    %6872 = vmatprep.subr.bf16.mxu0 %v5363
    %6873 = vmatpush1.bf16.msra.mxu0 %v5362
    %6874 = vmatprep.subr.bf16.mxu0 %v5371
    %6875 = vmatpush1.bf16.msra.mxu0 %v5370
    %6876 = vmatprep.subr.bf16.mxu0 %v5379
    %6877 = vmatpush1.bf16.msra.mxu0 %v5378
    %6878 = vmatprep.subr.bf16.mxu0 %v5387
    %6879 = vmatpush1.bf16.msra.mxu0 %v5386
    %6880 = vmatprep.subr.bf16.mxu0 %v5395
    %6881 = vmatpush1.bf16.msra.mxu0 %v5394
    %6882 = vmatprep.subr.bf16.mxu0 %v5403
    %6883 = vmatpush1.bf16.msra.mxu0 %v5402
    %6884 = vmatprep.subr.bf16.mxu0 %v5411
    %6885 = vmatpush1.bf16.msra.mxu0 %v5410
    %6886 = vmatprep.subr.bf16.mxu0 %v5419
    %6887 = vmatpush1.bf16.msra.mxu0 %v5418
    %6888 = vmatprep.subr.bf16.mxu0 %v5427
    %6889 = vmatpush1.bf16.msra.mxu0 %v5426
    %6890 = vmatprep.subr.bf16.mxu0 %v5435
    %6891 = vmatpush1.bf16.msra.mxu0 %v5434
    %6892 = vmatprep.subr.bf16.mxu0 %v5443
    %6893 = vmatpush1.bf16.msra.mxu0 %v5442
    %6894 = vmatprep.subr.bf16.mxu0 %v5451
    %6895 = vmatpush1.bf16.msra.mxu0 %v5450
    %6896 = vmatprep.mubr.bf16.mxu0 %v3227
    %6897 = vmatmul.mubr.bf16.gmra.mrb[0].mxu0 %v3226
    %v6898 = vpop.f32.mrb[0].mxu0
    %v6899 = vadd.f32 %v3775, %v6898
    %v6900 = vpop.f32.mrb[0].mxu0
    %v6901 = vadd.f32 %v3779, %v6900
    %v6902 = vpop.f32.mrb[0].mxu0
    %v6903 = vadd.f32 %v3775, %v6902
    %v6904 = vpop.f32.mrb[0].mxu0
    %v6905 = vadd.f32 %v3779, %v6904
    %6906 = vdwg.mxu0
    %6907 = vmatprep.subr.bf16.mxu0 %v5459
    %6908 = vmatpush1.bf16.msra.mxu0 %v5458
    %6909 = vmatprep.subr.bf16.mxu0 %v5467
    %6910 = vmatpush1.bf16.msra.mxu0 %v5466
    %6911 = vmatprep.subr.bf16.mxu0 %v5475
    %6912 = vmatpush1.bf16.msra.mxu0 %v5474
    %6913 = vmatprep.subr.bf16.mxu0 %v5483
    %6914 = vmatpush1.bf16.msra.mxu0 %v5482
    %6915 = vmatprep.subr.bf16.mxu0 %v5491
    %6916 = vmatpush1.bf16.msra.mxu0 %v5490
    %6917 = vmatprep.subr.bf16.mxu0 %v5499
    %6918 = vmatpush1.bf16.msra.mxu0 %v5498
    %6919 = vmatprep.subr.bf16.mxu0 %v5507
    %6920 = vmatpush1.bf16.msra.mxu0 %v5506
    %6921 = vmatprep.subr.bf16.mxu0 %v5515
    %6922 = vmatpush1.bf16.msra.mxu0 %v5514
    %6923 = vmatprep.subr.bf16.mxu0 %v5523
    %6924 = vmatpush1.bf16.msra.mxu0 %v5522
    %6925 = vmatprep.subr.bf16.mxu0 %v5531
    %6926 = vmatpush1.bf16.msra.mxu0 %v5530
    %6927 = vmatprep.subr.bf16.mxu0 %v5539
    %6928 = vmatpush1.bf16.msra.mxu0 %v5538
    %6929 = vmatprep.subr.bf16.mxu0 %v5547
    %6930 = vmatpush1.bf16.msra.mxu0 %v5546
    %6931 = vmatprep.subr.bf16.mxu0 %v5555
    %6932 = vmatpush1.bf16.msra.mxu0 %v5554
    %6933 = vmatprep.subr.bf16.mxu0 %v5563
    %6934 = vmatpush1.bf16.msra.mxu0 %v5562
    %6935 = vmatprep.subr.bf16.mxu0 %v5571
    %6936 = vmatpush1.bf16.msra.mxu0 %v5570
    %6937 = vmatprep.subr.bf16.mxu0 %v5579
    %6938 = vmatpush1.bf16.msra.mxu0 %v5578
    %6939 = vmatprep.mubr.bf16.mxu0 %v3229
    %6940 = vmatmul.mubr.bf16.gmra.mrb[0].mxu0 %v3228
    %v6941 = vpop.f32.mrb[0].mxu0
    %v6942 = vadd.f32 %v6899, %v6941
    %v6943 = vpop.f32.mrb[0].mxu0
    %v6944 = vadd.f32 %v6901, %v6943
    %v6945 = vpop.f32.mrb[0].mxu0
    %v6946 = vadd.f32 %v6903, %v6945
    %v6947 = vpop.f32.mrb[0].mxu0
    %v6948 = vadd.f32 %v6905, %v6947
    %6949 = vdwg.mxu0
    %6950 = vmatprep.subr.bf16.mxu0 %v5587
    %6951 = vmatpush1.bf16.msra.mxu0 %v5586
    %6952 = vmatprep.subr.bf16.mxu0 %v5595
    %6953 = vmatpush1.bf16.msra.mxu0 %v5594
    %6954 = vmatprep.subr.bf16.mxu0 %v5603
    %6955 = vmatpush1.bf16.msra.mxu0 %v5602
    %6956 = vmatprep.subr.bf16.mxu0 %v5611
    %6957 = vmatpush1.bf16.msra.mxu0 %v5610
    %6958 = vmatprep.subr.bf16.mxu0 %v5619
    %6959 = vmatpush1.bf16.msra.mxu0 %v5618
    %6960 = vmatprep.subr.bf16.mxu0 %v5627
    %6961 = vmatpush1.bf16.msra.mxu0 %v5626
    %6962 = vmatprep.subr.bf16.mxu0 %v5635
    %6963 = vmatpush1.bf16.msra.mxu0 %v5634
    %6964 = vmatprep.subr.bf16.mxu0 %v5643
    %6965 = vmatpush1.bf16.msra.mxu0 %v5642
    %6966 = vmatprep.subr.bf16.mxu0 %v5651
    %6967 = vmatpush1.bf16.msra.mxu0 %v5650
    %6968 = vmatprep.subr.bf16.mxu0 %v5659
    %6969 = vmatpush1.bf16.msra.mxu0 %v5658
    %6970 = vmatprep.subr.bf16.mxu0 %v5667
    %6971 = vmatpush1.bf16.msra.mxu0 %v5666
    %6972 = vmatprep.subr.bf16.mxu0 %v5675
    %6973 = vmatpush1.bf16.msra.mxu0 %v5674
    %6974 = vmatprep.subr.bf16.mxu0 %v5683
    %6975 = vmatpush1.bf16.msra.mxu0 %v5682
    %6976 = vmatprep.subr.bf16.mxu0 %v5691
    %6977 = vmatpush1.bf16.msra.mxu0 %v5690
    %6978 = vmatprep.subr.bf16.mxu0 %v5699
    %6979 = vmatpush1.bf16.msra.mxu0 %v5698
    %6980 = vmatprep.subr.bf16.mxu0 %v5707
    %6981 = vmatpush1.bf16.msra.mxu0 %v5706
    %6982 = vmatprep.mubr.bf16.mxu0 %v3231
    %6983 = vmatmul.mubr.bf16.gmra.mrb[0].mxu0 %v3230
    %v6984 = vpop.f32.mrb[0].mxu0
    %v6985 = vadd.f32 %v6942, %v6984
    %v6986 = vpop.f32.mrb[0].mxu0
    %v6987 = vadd.f32 %v6944, %v6986
    %v6988 = vpop.f32.mrb[0].mxu0
    %v6989 = vadd.f32 %v6946, %v6988
    %v6990 = vpop.f32.mrb[0].mxu0
    %v6991 = vadd.f32 %v6948, %v6990
    %6992 = vdwg.mxu0
    %6993 = vmatprep.subr.bf16.mxu0 %v5715
    %6994 = vmatpush1.bf16.msra.mxu0 %v5714
    %6995 = vmatprep.subr.bf16.mxu0 %v5723
    %6996 = vmatpush1.bf16.msra.mxu0 %v5722
    %6997 = vmatprep.subr.bf16.mxu0 %v5731
    %6998 = vmatpush1.bf16.msra.mxu0 %v5730
    %6999 = vmatprep.subr.bf16.mxu0 %v5739
    %7000 = vmatpush1.bf16.msra.mxu0 %v5738
    %7001 = vmatprep.subr.bf16.mxu0 %v5747
    %7002 = vmatpush1.bf16.msra.mxu0 %v5746
    %7003 = vmatprep.subr.bf16.mxu0 %v5755
    %7004 = vmatpush1.bf16.msra.mxu0 %v5754
    %7005 = vmatprep.subr.bf16.mxu0 %v5763
    %7006 = vmatpush1.bf16.msra.mxu0 %v5762
    %7007 = vmatprep.subr.bf16.mxu0 %v5771
    %7008 = vmatpush1.bf16.msra.mxu0 %v5770
    %7009 = vmatprep.subr.bf16.mxu0 %v5779
    %7010 = vmatpush1.bf16.msra.mxu0 %v5778
    %7011 = vmatprep.subr.bf16.mxu0 %v5787
    %7012 = vmatpush1.bf16.msra.mxu0 %v5786
    %7013 = vmatprep.subr.bf16.mxu0 %v5795
    %7014 = vmatpush1.bf16.msra.mxu0 %v5794
    %7015 = vmatprep.subr.bf16.mxu0 %v5803
    %7016 = vmatpush1.bf16.msra.mxu0 %v5802
    %7017 = vmatprep.subr.bf16.mxu0 %v5811
    %7018 = vmatpush1.bf16.msra.mxu0 %v5810
    %7019 = vmatprep.subr.bf16.mxu0 %v5819
    %7020 = vmatpush1.bf16.msra.mxu0 %v5818
    %7021 = vmatprep.subr.bf16.mxu0 %v5827
    %7022 = vmatpush1.bf16.msra.mxu0 %v5826
    %7023 = vmatprep.subr.bf16.mxu0 %v5835
    %7024 = vmatpush1.bf16.msra.mxu0 %v5834
    %7025 = vmatprep.mubr.bf16.mxu0 %v3233
    %7026 = vmatmul.mubr.bf16.gmra.mrb[0].mxu0 %v3232
    %v7027 = vpop.f32.mrb[0].mxu0
    %v7028 = vadd.f32 %v6985, %v7027
    %v7029 = vpop.f32.mrb[0].mxu0
    %v7030 = vadd.f32 %v6987, %v7029
    %v7031 = vpop.f32.mrb[0].mxu0
    %v7032 = vadd.f32 %v6989, %v7031
    %v7033 = vpop.f32.mrb[0].mxu0
    %v7034 = vadd.f32 %v6991, %v7033
    %7035 = vdwg.mxu0
    %v7036 = vmax.f32 %v6512, 0.0
    %v7037 = vmax.f32 %v6514, 0.0
    %v7038 = vmax.f32 %v6684, 0.0
    %v7039 = vmax.f32 %v6686, 0.0
    %v7040 = vmax.f32 %v6856, 0.0
    %v7041 = vmax.f32 %v6858, 0.0
    %v7042 = vmax.f32 %v7028, 0.0
    %v7043 = vmax.f32 %v7030, 0.0
    %v7044 = vmax.f32 %v6516, 0.0
    %v7045 = vmax.f32 %v6518, 0.0
    %v7046 = vmax.f32 %v6688, 0.0
    %v7047 = vmax.f32 %v6690, 0.0
    %v7048 = vmax.f32 %v6860, 0.0
    %v7049 = vmax.f32 %v6862, 0.0
    %v7050 = vmax.f32 %v7032, 0.0
    %v7051 = vmax.f32 %v7034, 0.0
    %v7052 = vpack.c.bf16 %v7044, %v7036
    %v7053 = vpack.c.bf16 %v7045, %v7037
    %v7054 = vpack.c.bf16 %v7046, %v7038
    %v7055 = vpack.c.bf16 %v7047, %v7039
    %v7056 = vpack.c.bf16 %v7048, %v7040
    %v7057 = vpack.c.bf16 %v7049, %v7041
    %v7058 = vpack.c.bf16 %v7050, %v7042
    %v7059 = vpack.c.bf16 %v7051, %v7043
    %v7060 = vld [vmem:[#allocation9] sm:$0xf]
    %v7061 = vld [vmem:[#allocation9 + $0x4] sm:$0xf]
    %v7062 = vld [vmem:[#allocation9 + $0x8] sm:$0xf]
    %v7063 = vld [vmem:[#allocation9 + $0xc] sm:$0xf]
    %v7064 = vld [vmem:[#allocation9 + $0x10] sm:$0xf]
    %v7065 = vld [vmem:[#allocation9 + $0x14] sm:$0xf]
    %v7066 = vld [vmem:[#allocation9 + $0x18] sm:$0xf]
    %v7067 = vld [vmem:[#allocation9 + $0x1c] sm:$0xf]
    %v7068 = vld [vmem:[#allocation9 + $0x20] sm:$0xf]
    %v7069 = vld [vmem:[#allocation9 + $0x24] sm:$0xf]
    %v7070 = vld [vmem:[#allocation9 + $0x28] sm:$0xf]
    %v7071 = vld [vmem:[#allocation9 + $0x2c] sm:$0xf]
    %v7072 = vld [vmem:[#allocation9 + $0x30] sm:$0xf]
    %v7073 = vld [vmem:[#allocation9 + $0x34] sm:$0xf]
    %v7074 = vld [vmem:[#allocation9 + $0x38] sm:$0xf]
    %v7075 = vld [vmem:[#allocation9 + $0x3c] sm:$0xf]
    %v7076 = vld [vmem:[#allocation9 + $0x40] sm:$0xf]
    %v7077 = vld [vmem:[#allocation9 + $0x44] sm:$0xf]
    %v7078 = vld [vmem:[#allocation9 + $0x48] sm:$0xf]
    %v7079 = vld [vmem:[#allocation9 + $0x4c] sm:$0xf]
    %v7080 = vld [vmem:[#allocation9 + $0x50] sm:$0xf]
    %v7081 = vld [vmem:[#allocation9 + $0x54] sm:$0xf]
    %v7082 = vld [vmem:[#allocation9 + $0x58] sm:$0xf]
    %v7083 = vld [vmem:[#allocation9 + $0x5c] sm:$0xf]
    %v7084 = vld [vmem:[#allocation9 + $0x60] sm:$0xf]
    %v7085 = vld [vmem:[#allocation9 + $0x64] sm:$0xf]
    %v7086 = vld [vmem:[#allocation9 + $0x68] sm:$0xf]
    %v7087 = vld [vmem:[#allocation9 + $0x6c] sm:$0xf]
    %v7088 = vld [vmem:[#allocation9 + $0x70] sm:$0xf]
    %v7089 = vld [vmem:[#allocation9 + $0x74] sm:$0xf]
    %v7090 = vld [vmem:[#allocation9 + $0x78] sm:$0xf]
    %v7091 = vld [vmem:[#allocation9 + $0x7c] sm:$0xf]
    %v7092 = vld [vmem:[#allocation9 + $0x80] sm:$0xf]
    %v7093 = vld [vmem:[#allocation9 + $0x84] sm:$0xf]
    %v7094 = vld [vmem:[#allocation9 + $0x88] sm:$0xf]
    %v7095 = vld [vmem:[#allocation9 + $0x8c] sm:$0xf]
    %v7096 = vld [vmem:[#allocation9 + $0x90] sm:$0xf]
    %v7097 = vld [vmem:[#allocation9 + $0x94] sm:$0xf]
    %v7098 = vld [vmem:[#allocation9 + $0x98] sm:$0xf]
    %v7099 = vld [vmem:[#allocation9 + $0x9c] sm:$0xf]
    %v7100 = vld [vmem:[#allocation9 + $0xa0] sm:$0xf]
    %v7101 = vld [vmem:[#allocation9 + $0xa4] sm:$0xf]
    %v7102 = vld [vmem:[#allocation9 + $0xa8] sm:$0xf]
    %v7103 = vld [vmem:[#allocation9 + $0xac] sm:$0xf]
    %v7104 = vld [vmem:[#allocation9 + $0xb0] sm:$0xf]
    %v7105 = vld [vmem:[#allocation9 + $0xb4] sm:$0xf]
    %v7106 = vld [vmem:[#allocation9 + $0xb8] sm:$0xf]
    %v7107 = vld [vmem:[#allocation9 + $0xbc] sm:$0xf]
    %v7108 = vld [vmem:[#allocation9 + $0xc0] sm:$0xf]
    %v7109 = vld [vmem:[#allocation9 + $0xc4] sm:$0xf]
    %v7110 = vld [vmem:[#allocation9 + $0xc8] sm:$0xf]
    %v7111 = vld [vmem:[#allocation9 + $0xcc] sm:$0xf]
    %v7112 = vld [vmem:[#allocation9 + $0xd0] sm:$0xf]
    %v7113 = vld [vmem:[#allocation9 + $0xd4] sm:$0xf]
    %v7114 = vld [vmem:[#allocation9 + $0xd8] sm:$0xf]
    %v7115 = vld [vmem:[#allocation9 + $0xdc] sm:$0xf]
    %v7116 = vld [vmem:[#allocation9 + $0xe0] sm:$0xf]
    %v7117 = vld [vmem:[#allocation9 + $0xe4] sm:$0xf]
    %v7118 = vld [vmem:[#allocation9 + $0xe8] sm:$0xf]
    %v7119 = vld [vmem:[#allocation9 + $0xec] sm:$0xf]
    %v7120 = vld [vmem:[#allocation9 + $0xf0] sm:$0xf]
    %v7121 = vld [vmem:[#allocation9 + $0xf4] sm:$0xf]
    %v7122 = vld [vmem:[#allocation9 + $0xf8] sm:$0xf]
    %v7123 = vld [vmem:[#allocation9 + $0xfc] sm:$0xf]
    %v7124 = vld [vmem:[#allocation9 + $0x100] sm:$0xf]
    %v7125 = vld [vmem:[#allocation9 + $0x104] sm:$0xf]
    %v7126 = vld [vmem:[#allocation9 + $0x108] sm:$0xf]
    %v7127 = vld [vmem:[#allocation9 + $0x10c] sm:$0xf]
    %v7128 = vld [vmem:[#allocation9 + $0x110] sm:$0xf]
    %v7129 = vld [vmem:[#allocation9 + $0x114] sm:$0xf]
    %v7130 = vld [vmem:[#allocation9 + $0x118] sm:$0xf]
    %v7131 = vld [vmem:[#allocation9 + $0x11c] sm:$0xf]
    %v7132 = vld [vmem:[#allocation9 + $0x120] sm:$0xf]
    %v7133 = vld [vmem:[#allocation9 + $0x124] sm:$0xf]
    %v7134 = vld [vmem:[#allocation9 + $0x128] sm:$0xf]
    %v7135 = vld [vmem:[#allocation9 + $0x12c] sm:$0xf]
    %v7136 = vld [vmem:[#allocation9 + $0x130] sm:$0xf]
    %v7137 = vld [vmem:[#allocation9 + $0x134] sm:$0xf]
    %v7138 = vld [vmem:[#allocation9 + $0x138] sm:$0xf]
    %v7139 = vld [vmem:[#allocation9 + $0x13c] sm:$0xf]
    %v7140 = vld [vmem:[#allocation9 + $0x140] sm:$0xf]
    %v7141 = vld [vmem:[#allocation9 + $0x144] sm:$0xf]
    %v7142 = vld [vmem:[#allocation9 + $0x148] sm:$0xf]
    %v7143 = vld [vmem:[#allocation9 + $0x14c] sm:$0xf]
    %v7144 = vld [vmem:[#allocation9 + $0x150] sm:$0xf]
    %v7145 = vld [vmem:[#allocation9 + $0x154] sm:$0xf]
    %v7146 = vld [vmem:[#allocation9 + $0x158] sm:$0xf]
    %v7147 = vld [vmem:[#allocation9 + $0x15c] sm:$0xf]
    %v7148 = vld [vmem:[#allocation9 + $0x160] sm:$0xf]
    %v7149 = vld [vmem:[#allocation9 + $0x164] sm:$0xf]
    %v7150 = vld [vmem:[#allocation9 + $0x168] sm:$0xf]
    %v7151 = vld [vmem:[#allocation9 + $0x16c] sm:$0xf]
    %v7152 = vld [vmem:[#allocation9 + $0x170] sm:$0xf]
    %v7153 = vld [vmem:[#allocation9 + $0x174] sm:$0xf]
    %v7154 = vld [vmem:[#allocation9 + $0x178] sm:$0xf]
    %v7155 = vld [vmem:[#allocation9 + $0x17c] sm:$0xf]
    %v7156 = vld [vmem:[#allocation9 + $0x180] sm:$0xf]
    %v7157 = vld [vmem:[#allocation9 + $0x184] sm:$0xf]
    %v7158 = vld [vmem:[#allocation9 + $0x188] sm:$0xf]
    %v7159 = vld [vmem:[#allocation9 + $0x18c] sm:$0xf]
    %v7160 = vld [vmem:[#allocation9 + $0x190] sm:$0xf]
    %v7161 = vld [vmem:[#allocation9 + $0x194] sm:$0xf]
    %v7162 = vld [vmem:[#allocation9 + $0x198] sm:$0xf]
    %v7163 = vld [vmem:[#allocation9 + $0x19c] sm:$0xf]
    %v7164 = vld [vmem:[#allocation9 + $0x1a0] sm:$0xf]
    %v7165 = vld [vmem:[#allocation9 + $0x1a4] sm:$0xf]
    %v7166 = vld [vmem:[#allocation9 + $0x1a8] sm:$0xf]
    %v7167 = vld [vmem:[#allocation9 + $0x1ac] sm:$0xf]
    %v7168 = vld [vmem:[#allocation9 + $0x1b0] sm:$0xf]
    %v7169 = vld [vmem:[#allocation9 + $0x1b4] sm:$0xf]
    %v7170 = vld [vmem:[#allocation9 + $0x1b8] sm:$0xf]
    %v7171 = vld [vmem:[#allocation9 + $0x1bc] sm:$0xf]
    %v7172 = vld [vmem:[#allocation9 + $0x1c0] sm:$0xf]
    %v7173 = vld [vmem:[#allocation9 + $0x1c4] sm:$0xf]
    %v7174 = vld [vmem:[#allocation9 + $0x1c8] sm:$0xf]
    %v7175 = vld [vmem:[#allocation9 + $0x1cc] sm:$0xf]
    %v7176 = vld [vmem:[#allocation9 + $0x1d0] sm:$0xf]
    %v7177 = vld [vmem:[#allocation9 + $0x1d4] sm:$0xf]
    %v7178 = vld [vmem:[#allocation9 + $0x1d8] sm:$0xf]
    %v7179 = vld [vmem:[#allocation9 + $0x1dc] sm:$0xf]
    %v7180 = vld [vmem:[#allocation9 + $0x1e0] sm:$0xf]
    %v7181 = vld [vmem:[#allocation9 + $0x1e4] sm:$0xf]
    %v7182 = vld [vmem:[#allocation9 + $0x1e8] sm:$0xf]
    %v7183 = vld [vmem:[#allocation9 + $0x1ec] sm:$0xf]
    %v7184 = vld [vmem:[#allocation9 + $0x1f0] sm:$0xf]
    %v7185 = vld [vmem:[#allocation9 + $0x1f4] sm:$0xf]
    %v7186 = vld [vmem:[#allocation9 + $0x1f8] sm:$0xf]
    %v7187 = vld [vmem:[#allocation9 + $0x1fc] sm:$0xf]
    %v7188 = vld [vmem:[#allocation10] sm:$0x1]
    %v7190 = vlaneseq
    %v7191 = vshrl.u32 %v7190, 7
    %v7192 = vsub.s32 0, %v7191
    %v7193 = vrot.slane %v7188, %v7192
    %v7323 = vunpack.c.l.b16 %v7060
    %v7324 = vunpack.c.l.b16 %v7061
    %v7325 = vunpack.c.l.b16 %v7062
    %v7326 = vunpack.c.l.b16 %v7063
    %v7327 = vunpack.c.l.b16 %v7064
    %v7328 = vunpack.c.l.b16 %v7065
    %v7329 = vunpack.c.l.b16 %v7066
    %v7330 = vunpack.c.l.b16 %v7067
    %v7331 = vunpack.c.l.b16 %v7068
    %v7332 = vunpack.c.l.b16 %v7069
    %v7333 = vunpack.c.l.b16 %v7070
    %v7334 = vunpack.c.l.b16 %v7071
    %v7335 = vunpack.c.l.b16 %v7072
    %v7336 = vunpack.c.l.b16 %v7073
    %v7337 = vunpack.c.l.b16 %v7074
    %v7338 = vunpack.c.l.b16 %v7075
    %v7339 = vunpack.c.l.b16 %v7076
    %v7340 = vunpack.c.l.b16 %v7077
    %v7341 = vunpack.c.l.b16 %v7078
    %v7342 = vunpack.c.l.b16 %v7079
    %v7343 = vunpack.c.l.b16 %v7080
    %v7344 = vunpack.c.l.b16 %v7081
    %v7345 = vunpack.c.l.b16 %v7082
    %v7346 = vunpack.c.l.b16 %v7083
    %v7347 = vunpack.c.l.b16 %v7084
    %v7348 = vunpack.c.l.b16 %v7085
    %v7349 = vunpack.c.l.b16 %v7086
    %v7350 = vunpack.c.l.b16 %v7087
    %v7351 = vunpack.c.l.b16 %v7088
    %v7352 = vunpack.c.l.b16 %v7089
    %v7353 = vunpack.c.l.b16 %v7090
    %v7354 = vunpack.c.l.b16 %v7091
    %v7355 = vunpack.c.l.b16 %v7092
    %v7356 = vunpack.c.l.b16 %v7093
    %v7357 = vunpack.c.l.b16 %v7094
    %v7358 = vunpack.c.l.b16 %v7095
    %v7359 = vunpack.c.l.b16 %v7096
    %v7360 = vunpack.c.l.b16 %v7097
    %v7361 = vunpack.c.l.b16 %v7098
    %v7362 = vunpack.c.l.b16 %v7099
    %v7363 = vunpack.c.l.b16 %v7100
    %v7364 = vunpack.c.l.b16 %v7101
    %v7365 = vunpack.c.l.b16 %v7102
    %v7366 = vunpack.c.l.b16 %v7103
    %v7367 = vunpack.c.l.b16 %v7104
    %v7368 = vunpack.c.l.b16 %v7105
    %v7369 = vunpack.c.l.b16 %v7106
    %v7370 = vunpack.c.l.b16 %v7107
    %v7371 = vunpack.c.l.b16 %v7108
    %v7372 = vunpack.c.l.b16 %v7109
    %v7373 = vunpack.c.l.b16 %v7110
    %v7374 = vunpack.c.l.b16 %v7111
    %v7375 = vunpack.c.l.b16 %v7112
    %v7376 = vunpack.c.l.b16 %v7113
    %v7377 = vunpack.c.l.b16 %v7114
    %v7378 = vunpack.c.l.b16 %v7115
    %v7379 = vunpack.c.l.b16 %v7116
    %v7380 = vunpack.c.l.b16 %v7117
    %v7381 = vunpack.c.l.b16 %v7118
    %v7382 = vunpack.c.l.b16 %v7119
    %v7383 = vunpack.c.l.b16 %v7120
    %v7384 = vunpack.c.l.b16 %v7121
    %v7385 = vunpack.c.l.b16 %v7122
    %v7386 = vunpack.c.l.b16 %v7123
    %v7387 = vunpack.c.l.b16 %v7124
    %v7388 = vunpack.c.l.b16 %v7125
    %v7389 = vunpack.c.l.b16 %v7126
    %v7390 = vunpack.c.l.b16 %v7127
    %v7391 = vunpack.c.l.b16 %v7128
    %v7392 = vunpack.c.l.b16 %v7129
    %v7393 = vunpack.c.l.b16 %v7130
    %v7394 = vunpack.c.l.b16 %v7131
    %v7395 = vunpack.c.l.b16 %v7132
    %v7396 = vunpack.c.l.b16 %v7133
    %v7397 = vunpack.c.l.b16 %v7134
    %v7398 = vunpack.c.l.b16 %v7135
    %v7399 = vunpack.c.l.b16 %v7136
    %v7400 = vunpack.c.l.b16 %v7137
    %v7401 = vunpack.c.l.b16 %v7138
    %v7402 = vunpack.c.l.b16 %v7139
    %v7403 = vunpack.c.l.b16 %v7140
    %v7404 = vunpack.c.l.b16 %v7141
    %v7405 = vunpack.c.l.b16 %v7142
    %v7406 = vunpack.c.l.b16 %v7143
    %v7407 = vunpack.c.l.b16 %v7144
    %v7408 = vunpack.c.l.b16 %v7145
    %v7409 = vunpack.c.l.b16 %v7146
    %v7410 = vunpack.c.l.b16 %v7147
    %v7411 = vunpack.c.l.b16 %v7148
    %v7412 = vunpack.c.l.b16 %v7149
    %v7413 = vunpack.c.l.b16 %v7150
    %v7414 = vunpack.c.l.b16 %v7151
    %v7415 = vunpack.c.l.b16 %v7152
    %v7416 = vunpack.c.l.b16 %v7153
    %v7417 = vunpack.c.l.b16 %v7154
    %v7418 = vunpack.c.l.b16 %v7155
    %v7419 = vunpack.c.l.b16 %v7156
    %v7420 = vunpack.c.l.b16 %v7157
    %v7421 = vunpack.c.l.b16 %v7158
    %v7422 = vunpack.c.l.b16 %v7159
    %v7423 = vunpack.c.l.b16 %v7160
    %v7424 = vunpack.c.l.b16 %v7161
    %v7425 = vunpack.c.l.b16 %v7162
    %v7426 = vunpack.c.l.b16 %v7163
    %v7427 = vunpack.c.l.b16 %v7164
    %v7428 = vunpack.c.l.b16 %v7165
    %v7429 = vunpack.c.l.b16 %v7166
    %v7430 = vunpack.c.l.b16 %v7167
    %v7431 = vunpack.c.l.b16 %v7168
    %v7432 = vunpack.c.l.b16 %v7169
    %v7433 = vunpack.c.l.b16 %v7170
    %v7434 = vunpack.c.l.b16 %v7171
    %v7435 = vunpack.c.l.b16 %v7172
    %v7436 = vunpack.c.l.b16 %v7173
    %v7437 = vunpack.c.l.b16 %v7174
    %v7438 = vunpack.c.l.b16 %v7175
    %v7439 = vunpack.c.l.b16 %v7176
    %v7440 = vunpack.c.l.b16 %v7177
    %v7441 = vunpack.c.l.b16 %v7178
    %v7442 = vunpack.c.l.b16 %v7179
    %v7443 = vunpack.c.l.b16 %v7180
    %v7444 = vunpack.c.l.b16 %v7181
    %v7445 = vunpack.c.l.b16 %v7182
    %v7446 = vunpack.c.l.b16 %v7183
    %v7447 = vunpack.c.l.b16 %v7184
    %v7448 = vunpack.c.l.b16 %v7185
    %v7449 = vunpack.c.l.b16 %v7186
    %v7450 = vunpack.c.l.b16 %v7187
    %v7451 = vpack.c.b16 %v7324, %v7323
    %v7452 = vpack.c.b16 %v7326, %v7325
    %v7453 = vpack.c.b16 %v7328, %v7327
    %v7454 = vpack.c.b16 %v7330, %v7329
    %v7455 = vpack.c.b16 %v7332, %v7331
    %v7456 = vpack.c.b16 %v7334, %v7333
    %v7457 = vpack.c.b16 %v7336, %v7335
    %v7458 = vpack.c.b16 %v7338, %v7337
    %v7459 = vpack.c.b16 %v7340, %v7339
    %v7460 = vpack.c.b16 %v7342, %v7341
    %v7461 = vpack.c.b16 %v7344, %v7343
    %v7462 = vpack.c.b16 %v7346, %v7345
    %v7463 = vpack.c.b16 %v7348, %v7347
    %v7464 = vpack.c.b16 %v7350, %v7349
    %v7465 = vpack.c.b16 %v7352, %v7351
    %v7466 = vpack.c.b16 %v7354, %v7353
    %v7467 = vpack.c.b16 %v7356, %v7355
    %v7468 = vpack.c.b16 %v7358, %v7357
    %v7469 = vpack.c.b16 %v7360, %v7359
    %v7470 = vpack.c.b16 %v7362, %v7361
    %v7471 = vpack.c.b16 %v7364, %v7363
    %v7472 = vpack.c.b16 %v7366, %v7365
    %v7473 = vpack.c.b16 %v7368, %v7367
    %v7474 = vpack.c.b16 %v7370, %v7369
    %v7475 = vpack.c.b16 %v7372, %v7371
    %v7476 = vpack.c.b16 %v7374, %v7373
    %v7477 = vpack.c.b16 %v7376, %v7375
    %v7478 = vpack.c.b16 %v7378, %v7377
    %v7479 = vpack.c.b16 %v7380, %v7379
    %v7480 = vpack.c.b16 %v7382, %v7381
    %v7481 = vpack.c.b16 %v7384, %v7383
    %v7482 = vpack.c.b16 %v7386, %v7385
    %v7483 = vpack.c.b16 %v7388, %v7387
    %v7484 = vpack.c.b16 %v7390, %v7389
    %v7485 = vpack.c.b16 %v7392, %v7391
    %v7486 = vpack.c.b16 %v7394, %v7393
    %v7487 = vpack.c.b16 %v7396, %v7395
    %v7488 = vpack.c.b16 %v7398, %v7397
    %v7489 = vpack.c.b16 %v7400, %v7399
    %v7490 = vpack.c.b16 %v7402, %v7401
    %v7491 = vpack.c.b16 %v7404, %v7403
    %v7492 = vpack.c.b16 %v7406, %v7405
    %v7493 = vpack.c.b16 %v7408, %v7407
    %v7494 = vpack.c.b16 %v7410, %v7409
    %v7495 = vpack.c.b16 %v7412, %v7411
    %v7496 = vpack.c.b16 %v7414, %v7413
    %v7497 = vpack.c.b16 %v7416, %v7415
    %v7498 = vpack.c.b16 %v7418, %v7417
    %v7499 = vpack.c.b16 %v7420, %v7419
    %v7500 = vpack.c.b16 %v7422, %v7421
    %v7501 = vpack.c.b16 %v7424, %v7423
    %v7502 = vpack.c.b16 %v7426, %v7425
    %v7503 = vpack.c.b16 %v7428, %v7427
    %v7504 = vpack.c.b16 %v7430, %v7429
    %v7505 = vpack.c.b16 %v7432, %v7431
    %v7506 = vpack.c.b16 %v7434, %v7433
    %v7507 = vpack.c.b16 %v7436, %v7435
    %v7508 = vpack.c.b16 %v7438, %v7437
    %v7509 = vpack.c.b16 %v7440, %v7439
    %v7510 = vpack.c.b16 %v7442, %v7441
    %v7511 = vpack.c.b16 %v7444, %v7443
    %v7512 = vpack.c.b16 %v7446, %v7445
    %v7513 = vpack.c.b16 %v7448, %v7447
    %v7514 = vpack.c.b16 %v7450, %v7449
    %7579 = vmatprep.subr.bf16.mxu0 0
    %7580 = vmatpush1.bf16.msra.mxu0 %v7451
    %7581 = vmatprep.subr.bf16.mxu0 0
    %7582 = vmatpush1.bf16.msra.mxu0 %v7452
    %7583 = vmatprep.subr.bf16.mxu0 0
    %7584 = vmatpush1.bf16.msra.mxu0 %v7453
    %7585 = vmatprep.subr.bf16.mxu0 0
    %7586 = vmatpush1.bf16.msra.mxu0 %v7454
    %7587 = vmatprep.subr.bf16.mxu0 0
    %7588 = vmatpush1.bf16.msra.mxu0 %v7455
    %7589 = vmatprep.subr.bf16.mxu0 0
    %7590 = vmatpush1.bf16.msra.mxu0 %v7456
    %7591 = vmatprep.subr.bf16.mxu0 0
    %7592 = vmatpush1.bf16.msra.mxu0 %v7457
    %7593 = vmatprep.subr.bf16.mxu0 0
    %7594 = vmatpush1.bf16.msra.mxu0 %v7458
    %7595 = vmatprep.subr.bf16.mxu0 0
    %7596 = vmatpush1.bf16.msra.mxu0 %v7459
    %7597 = vmatprep.subr.bf16.mxu0 0
    %7598 = vmatpush1.bf16.msra.mxu0 %v7460
    %7599 = vmatprep.subr.bf16.mxu0 0
    %7600 = vmatpush1.bf16.msra.mxu0 %v7461
    %7601 = vmatprep.subr.bf16.mxu0 0
    %7602 = vmatpush1.bf16.msra.mxu0 %v7462
    %7603 = vmatprep.subr.bf16.mxu0 0
    %7604 = vmatpush1.bf16.msra.mxu0 %v7463
    %7605 = vmatprep.subr.bf16.mxu0 0
    %7606 = vmatpush1.bf16.msra.mxu0 %v7464
    %7607 = vmatprep.subr.bf16.mxu0 0
    %7608 = vmatpush1.bf16.msra.mxu0 %v7465
    %7609 = vmatprep.subr.bf16.mxu0 0
    %7610 = vmatpush1.bf16.msra.mxu0 %v7466
    %7611 = vmatprep.mubr.bf16.mxu0 %v7053
    %7612 = vmatmul.mubr.bf16.gmra.mrb[0].mxu0 %v7052
    %v7613 = vpop.f32.mrb[0].mxu0
    %v7614 = vadd.f32 %v7193, %v7613
    %v7615 = vpop.f32.mrb[0].mxu0
    %v7616 = vpop.f32.mrb[0].mxu0
    %v7617 = vadd.f32 %v7193, %v7616
    %v7618 = vpop.f32.mrb[0].mxu0
    %7619 = vdwg.mxu0
    %7620 = vmatprep.subr.bf16.mxu0 0
    %7621 = vmatpush1.bf16.msra.mxu0 %v7467
    %7622 = vmatprep.subr.bf16.mxu0 0
    %7623 = vmatpush1.bf16.msra.mxu0 %v7468
    %7624 = vmatprep.subr.bf16.mxu0 0
    %7625 = vmatpush1.bf16.msra.mxu0 %v7469
    %7626 = vmatprep.subr.bf16.mxu0 0
    %7627 = vmatpush1.bf16.msra.mxu0 %v7470
    %7628 = vmatprep.subr.bf16.mxu0 0
    %7629 = vmatpush1.bf16.msra.mxu0 %v7471
    %7630 = vmatprep.subr.bf16.mxu0 0
    %7631 = vmatpush1.bf16.msra.mxu0 %v7472
    %7632 = vmatprep.subr.bf16.mxu0 0
    %7633 = vmatpush1.bf16.msra.mxu0 %v7473
    %7634 = vmatprep.subr.bf16.mxu0 0
    %7635 = vmatpush1.bf16.msra.mxu0 %v7474
    %7636 = vmatprep.subr.bf16.mxu0 0
    %7637 = vmatpush1.bf16.msra.mxu0 %v7475
    %7638 = vmatprep.subr.bf16.mxu0 0
    %7639 = vmatpush1.bf16.msra.mxu0 %v7476
    %7640 = vmatprep.subr.bf16.mxu0 0
    %7641 = vmatpush1.bf16.msra.mxu0 %v7477
    %7642 = vmatprep.subr.bf16.mxu0 0
    %7643 = vmatpush1.bf16.msra.mxu0 %v7478
    %7644 = vmatprep.subr.bf16.mxu0 0
    %7645 = vmatpush1.bf16.msra.mxu0 %v7479
    %7646 = vmatprep.subr.bf16.mxu0 0
    %7647 = vmatpush1.bf16.msra.mxu0 %v7480
    %7648 = vmatprep.subr.bf16.mxu0 0
    %7649 = vmatpush1.bf16.msra.mxu0 %v7481
    %7650 = vmatprep.subr.bf16.mxu0 0
    %7651 = vmatpush1.bf16.msra.mxu0 %v7482
    %7652 = vmatprep.mubr.bf16.mxu0 %v7055
    %7653 = vmatmul.mubr.bf16.gmra.mrb[0].mxu0 %v7054
    %v7654 = vpop.f32.mrb[0].mxu0
    %v7655 = vadd.f32 %v7614, %v7654
    %v7656 = vpop.f32.mrb[0].mxu0
    %v7657 = vpop.f32.mrb[0].mxu0
    %v7658 = vadd.f32 %v7617, %v7657
    %v7659 = vpop.f32.mrb[0].mxu0
    %7660 = vdwg.mxu0
    %7661 = vmatprep.subr.bf16.mxu0 0
    %7662 = vmatpush1.bf16.msra.mxu0 %v7483
    %7663 = vmatprep.subr.bf16.mxu0 0
    %7664 = vmatpush1.bf16.msra.mxu0 %v7484
    %7665 = vmatprep.subr.bf16.mxu0 0
    %7666 = vmatpush1.bf16.msra.mxu0 %v7485
    %7667 = vmatprep.subr.bf16.mxu0 0
    %7668 = vmatpush1.bf16.msra.mxu0 %v7486
    %7669 = vmatprep.subr.bf16.mxu0 0
    %7670 = vmatpush1.bf16.msra.mxu0 %v7487
    %7671 = vmatprep.subr.bf16.mxu0 0
    %7672 = vmatpush1.bf16.msra.mxu0 %v7488
    %7673 = vmatprep.subr.bf16.mxu0 0
    %7674 = vmatpush1.bf16.msra.mxu0 %v7489
    %7675 = vmatprep.subr.bf16.mxu0 0
    %7676 = vmatpush1.bf16.msra.mxu0 %v7490
    %7677 = vmatprep.subr.bf16.mxu0 0
    %7678 = vmatpush1.bf16.msra.mxu0 %v7491
    %7679 = vmatprep.subr.bf16.mxu0 0
    %7680 = vmatpush1.bf16.msra.mxu0 %v7492
    %7681 = vmatprep.subr.bf16.mxu0 0
    %7682 = vmatpush1.bf16.msra.mxu0 %v7493
    %7683 = vmatprep.subr.bf16.mxu0 0
    %7684 = vmatpush1.bf16.msra.mxu0 %v7494
    %7685 = vmatprep.subr.bf16.mxu0 0
    %7686 = vmatpush1.bf16.msra.mxu0 %v7495
    %7687 = vmatprep.subr.bf16.mxu0 0
    %7688 = vmatpush1.bf16.msra.mxu0 %v7496
    %7689 = vmatprep.subr.bf16.mxu0 0
    %7690 = vmatpush1.bf16.msra.mxu0 %v7497
    %7691 = vmatprep.subr.bf16.mxu0 0
    %7692 = vmatpush1.bf16.msra.mxu0 %v7498
    %7693 = vmatprep.mubr.bf16.mxu0 %v7057
    %7694 = vmatmul.mubr.bf16.gmra.mrb[0].mxu0 %v7056
    %v7695 = vpop.f32.mrb[0].mxu0
    %v7696 = vadd.f32 %v7655, %v7695
    %v7697 = vpop.f32.mrb[0].mxu0
    %v7698 = vpop.f32.mrb[0].mxu0
    %v7699 = vadd.f32 %v7658, %v7698
    %v7700 = vpop.f32.mrb[0].mxu0
    %7701 = vdwg.mxu0
    %7702 = vmatprep.subr.bf16.mxu0 0
    %7703 = vmatpush1.bf16.msra.mxu0 %v7499
    %7704 = vmatprep.subr.bf16.mxu0 0
    %7705 = vmatpush1.bf16.msra.mxu0 %v7500
    %7706 = vmatprep.subr.bf16.mxu0 0
    %7707 = vmatpush1.bf16.msra.mxu0 %v7501
    %7708 = vmatprep.subr.bf16.mxu0 0
    %7709 = vmatpush1.bf16.msra.mxu0 %v7502
    %7710 = vmatprep.subr.bf16.mxu0 0
    %7711 = vmatpush1.bf16.msra.mxu0 %v7503
    %7712 = vmatprep.subr.bf16.mxu0 0
    %7713 = vmatpush1.bf16.msra.mxu0 %v7504
    %7714 = vmatprep.subr.bf16.mxu0 0
    %7715 = vmatpush1.bf16.msra.mxu0 %v7505
    %7716 = vmatprep.subr.bf16.mxu0 0
    %7717 = vmatpush1.bf16.msra.mxu0 %v7506
    %7718 = vmatprep.subr.bf16.mxu0 0
    %7719 = vmatpush1.bf16.msra.mxu0 %v7507
    %7720 = vmatprep.subr.bf16.mxu0 0
    %7721 = vmatpush1.bf16.msra.mxu0 %v7508
    %7722 = vmatprep.subr.bf16.mxu0 0
    %7723 = vmatpush1.bf16.msra.mxu0 %v7509
    %7724 = vmatprep.subr.bf16.mxu0 0
    %7725 = vmatpush1.bf16.msra.mxu0 %v7510
    %7726 = vmatprep.subr.bf16.mxu0 0
    %7727 = vmatpush1.bf16.msra.mxu0 %v7511
    %7728 = vmatprep.subr.bf16.mxu0 0
    %7729 = vmatpush1.bf16.msra.mxu0 %v7512
    %7730 = vmatprep.subr.bf16.mxu0 0
    %7731 = vmatpush1.bf16.msra.mxu0 %v7513
    %7732 = vmatprep.subr.bf16.mxu0 0
    %7733 = vmatpush1.bf16.msra.mxu0 %v7514
    %7734 = vmatprep.mubr.bf16.mxu0 %v7059
    %7735 = vmatmul.mubr.bf16.gmra.mrb[0].mxu0 %v7058
    %v7736 = vpop.f32.mrb[0].mxu0
    %v7737 = vadd.f32 %v7696, %v7736
    %v7738 = vpop.f32.mrb[0].mxu0
    %v7739 = vpop.f32.mrb[0].mxu0
    %v7740 = vadd.f32 %v7699, %v7739
    %v7741 = vpop.f32.mrb[0].mxu0
    %7742 = vdwg.mxu0
    %7743 = vmax.xlane.f32.xlu0 %v7737
    %v7744 = vpop.xlane.xlu0 %7743
    %7745 = vmax.xlane.f32.xlu0 %v7740
    %v7746 = vpop.xlane.xlu0 %7745
    %v7747 = vsub.f32 %v7737, %v7744
    %v7748 = vsub.f32 %v7740, %v7746
    %v7749 = vmul.f32 %v7747, 1.442695
    %v7750 = vpow.pop %v7749
    %v7751 = vmul.f32 %v7748, 1.442695
    %v7752 = vpow.pop %v7751
    %7753 = vadd.xlane.f32.xlu0 %v7750
    %v7754 = vpop.xlane.xlu0 %7753
    %7755 = vadd.xlane.f32.xlu0 %v7752
    %v7756 = vpop.xlane.xlu0 %7755
    %v7757 = vrcp.pop %v7754
    %v7758 = vrcp.pop %v7756
    %v7759 = vmul.f32 %v7750, %v7757
    %v7760 = vmul.f32 %v7752, %v7758
    %7761 = vst [vmem:[%s7] sm:$0xff] %v7759
    %7762 = vst [vmem:[%s7 + $0x8] sm:$0xff] %v7760
    // Predicated region
    $region54: #{linear_model_forward.1} parent=1 // pred_check
      _
    $region55: #{linear_model_forward.1} parent=1 // pred_check_branch
      %7764 = sbr.rel (0) target = $region57
    $region56: #{linear_model_forward.1} parent=1 // pred_region
      _
    $region57: #{linear_model_forward.1} parent=1 // pred_fallthru
      _
    // Predicated region
    $region58: #{linear_model_forward.1} parent=1 // pred_check
      _
    $region59: #{linear_model_forward.1} parent=1 // pred_check_branch
      %7766 = sbr.rel (0) target = $region61
    $region60: #{linear_model_forward.1} parent=1 // pred_region
      _
    $region61: #{linear_model_forward.1} parent=1 // pred_fallthru
      _
    %7767 = vsyncpa [#allocation3], 1
    %7768 = vsyncpa [#allocation5], 1
    %7769 = vsyncpa [#allocation8], 1
    %7770 = vsyncpa [#allocation11], 1

</llo_original>
